<compile_context>
chip_gen: v7x
topology: tpu7x:2x2x1
jax: 0.10.0
libtpu: 0.0.40
codegen_flags: <defaults>
</compile_context>

<pallas_src>
import functools

import numpy as np
import jax
import jax.numpy as jnp
from jax import lax
from jax.experimental import pallas as pl
from jax.experimental.pallas import tpu as pltpu


_LANE = 128


# ----------------------------------------------------------------------------
# Hardware-aware tiling helpers
# ----------------------------------------------------------------------------
def _vmem_limit_bytes():
    # ~75% of physical VMEM (v5e/v6e 128 MiB -> 96 MiB, v7x 64 MiB -> 48 MiB),
    # capped to leave compiler headroom; safe fallback when the query fails.
    try:
        cap = int(pltpu.get_tpu_info().vmem_capacity_bytes)
    except Exception:
        cap = 64 * 1024 * 1024
    return max(32 * 1024 * 1024, min(cap - cap // 4, 100 * 1024 * 1024))


def _pick_tile_rows(B, h, w, L, cin_stem, ci, wi, cout, budget):
    """Largest row tile (multiple of 8, or full h) whose working set fits the
    VMEM budget; keeps >= 2 grid steps when B == 1 so both v7x cores get work."""
    f32, bf = 4, 2
    cands = sorted({d for d in range(1, h + 1)
                    if h % d == 0 and (d % 8 == 0 or d == h)}, reverse=True)

    def est(th):
        tot = 2 * (h + 2 * L) * (w + 2 * L) * cin_stem * bf      # resident padded input (x2 bufs)
        tot += 2 * th * w * cout * f32                           # output block (x2 bufs)
        r0, c0 = th + 2 * L, w + 2 * L
        tot += r0 * c0 * 64 * (f32 + bf)                         # stem activation (f32 + bf16)
        for k in range(L):
            ext = L - 1 - k
            rows, cols = th + 2 * ext, w + 2 * ext
            cin = 64 if k == 0 else (ci + wi)
            tot += (rows + 2) * cols * 3 * cin * bf              # dx-fused (wide-K) slab
            tot += rows * cols * (ci + wi) * (f32 + bf)          # acc + bf16 activation
        tot += th * w * cout * f32                               # packed 1x1 result
        tot += 8 * 1024 * 1024                                   # weights, masks, compiler slack
        return tot

    feasible = [th for th in cands if est(th) <= budget]
    if not feasible:
        return cands[-1]
    if B == 1:
        multi = [th for th in feasible if h // th >= 2]
        if multi:
            return multi[0]
    return feasible[0]


def _cost_estimate(B, h, w, L, cin_stem, ci, wi, cout):
    hw = h * w
    flops = 2 * hw * cin_stem * 64                               # stem 1x1
    flops += 2 * hw * 9 * 64 * (ci + wi)                         # fused layer 1
    flops += (L - 1) * 2 * hw * 9 * (ci * ci + wi * wi)          # remaining 3x3 layers
    flops += 2 * hw * (ci + wi) * cout                           # final 1x1s
    flops *= B
    bytes_accessed = (B * (h + 2 * L) * (w + 2 * L) * cin_stem * 2
                      + B * hw * cout * 4
                      + (cin_stem * 64 + 9 * 64 * (ci + wi)
                         + (L - 1) * 9 * (ci * ci + wi * wi)
                         + (ci + wi) * cout) * 2)
    return pl.CostEstimate(flops=int(flops), transcendentals=0,
                           bytes_accessed=int(bytes_accessed))


# ----------------------------------------------------------------------------
# Fused Pallas kernel: stem 1x1 + (cls_head || wh_head) + packed final 1x1
# ----------------------------------------------------------------------------
def _centernet_head_kernel(x_ref, *refs, TH, H, W, L):
    """refs layout (all constant-index full-array blocks except o_ref):
      [0]              w_stem_eff (Cin, 64) bf16   (stem bias folded via indicator channel)
      next             layer-1 fused: w1 (3, 3*64, ci+wi) bf16, b1 (1, ci+wi) f32,
                       [col-mask ((TH+2e)*(W+2e), 1) f32 if e = L-1 > 0]
      per k in 1..L-1: wc (3, 3*ci, ci) bf16, bc (1, ci) f32,
                       ww (3, 3*wi, wi) bf16, bw (1, wi) f32, [col-mask if ext > 0]
      [-5:-1]          woc (ci, COUT) bf16, boc (1, COUT) f32,
                       wow (wi, COUT) bf16, bow (1, COUT) f32
      [-1]             o_ref (1, TH, W, COUT) f32
    """
    o_ref = refs[-1]
    woc_ref, boc_ref, wow_ref, bow_ref = refs[-5:-1]
    w_stem_ref = refs[0]
    ci = woc_ref.shape[0]          # cls inner channels (128)
    wi = wow_ref.shape[0]          # wh inner channels (64)

    row0 = pl.multiple_of(pl.program_id(1) * TH, TH)   # global output row of tile top

    def halo_mask(colmask_ref, rows, cols, ext):
        # Zero positions whose GLOBAL row/col falls outside the image (they act
        # as the next conv's zero padding).  Column pattern is a tiny static
        # operand (DMA'd once); the row pattern depends on the tile index and
        # is built from a sublane iota (pure VPU work, no per-step DMA).
        m = rows * cols
        flat = lax.broadcasted_iota(jnp.int32, (m, 1), 0)
        top = jnp.maximum(ext - row0, 0) * cols
        bot = jnp.maximum(row0 + TH + ext - H, 0) * cols
        row_ok = (flat >= top) & (flat < m - bot)
        return jnp.where(row_ok, colmask_ref[...], 0.0)          # (m, 1) f32

    def conv3x3(cur, w_ref, b_ref, rows, cols):
        # cur: (rows+2, cols+2, cin) bf16.  dx taps fused along K (K = 3*cin):
        # 3 accumulated MXU matmuls (one per dy), f32 acc, bias + ReLU.
        cin = cur.shape[-1]
        wide = jnp.concatenate(
            [cur[:, 0:cols, :], cur[:, 1:cols + 1, :], cur[:, 2:cols + 2, :]],
            axis=-1)                                             # (rows+2, cols, 3*cin)
        acc = jnp.dot(wide[0:rows].reshape(rows * cols, 3 * cin), w_ref[0],
                      preferred_element_type=jnp.float32) + b_ref[...]
        acc = acc + jnp.dot(wide[1:rows + 1].reshape(rows * cols, 3 * cin), w_ref[1],
                            preferred_element_type=jnp.float32)
        acc = acc + jnp.dot(wide[2:rows + 2].reshape(rows * cols, 3 * cin), w_ref[2],
                            preferred_element_type=jnp.float32)
        return jnp.maximum(acc, 0.0)                             # (rows*cols, cout) f32

    # ---- stem: 1x1 conv + ReLU over the (TH + 2L)-row extended window --------
    # The bias lives in the indicator channel's weight row, so zero-padded
    # positions produce exactly 0 -> no stem halo mask needed.
    rows0, cols0 = TH + 2 * L, W + 2 * L
    cin0 = x_ref.shape[-1]
    x = x_ref[0, pl.ds(row0, rows0), :, :]                       # (rows0, cols0, cin0) bf16
    feat = jnp.maximum(
        jnp.dot(x.reshape(rows0 * cols0, cin0), w_stem_ref[...],
                preferred_element_type=jnp.float32), 0.0)
    cur = feat.astype(jnp.bfloat16).reshape(rows0, cols0, w_stem_ref.shape[-1])

    # ---- layer 1: cls and wh first 3x3 convs fused (cout = ci + wi) ----------
    pos = 1
    ext = L - 1
    rows, cols = TH + 2 * ext, W + 2 * ext
    y1 = conv3x3(cur, refs[pos], refs[pos + 1], rows, cols)      # (M, ci+wi) f32
    pos += 2
    if ext > 0:
        y1 = y1 * halo_mask(refs[pos], rows, cols, ext)
        pos += 1
    y1 = y1.astype(jnp.bfloat16)
    yc, yw = y1[:, :ci], y1[:, ci:]
    if L > 1:
        yc = yc.reshape(rows, cols, ci)
        yw = yw.reshape(rows, cols, wi)

    # ---- layers 2..L: separate per-head 3x3 convs ----------------------------
    for k in range(1, L):
        ext = L - 1 - k
        rows, cols = TH + 2 * ext, W + 2 * ext
        yc_f = conv3x3(yc, refs[pos], refs[pos + 1], rows, cols)
        yw_f = conv3x3(yw, refs[pos + 2], refs[pos + 3], rows, cols)
        pos += 4
        if ext > 0:
            m = halo_mask(refs[pos], rows, cols, ext)
            pos += 1
            yc_f, yw_f = yc_f * m, yw_f * m
        yc = yc_f.astype(jnp.bfloat16)
        yw = yw_f.astype(jnp.bfloat16)
        if ext > 0:
            yc = yc.reshape(rows, cols, ci)
            yw = yw.reshape(rows, cols, wi)

    # ---- final 1x1 convs, packed into one lane-dense 128-wide f32 output -----
    # lanes [0:num_cls] = cls logits, [num_cls:num_cls+4] = relu(wh)*base, rest 0
    out = jnp.dot(yc, woc_ref[...], preferred_element_type=jnp.float32) + boc_ref[...]
    out = out + jnp.maximum(
        jnp.dot(yw, wow_ref[...], preferred_element_type=jnp.float32) + bow_ref[...],
        0.0)
    o_ref[...] = out.reshape(1, TH, W, out.shape[-1]).astype(o_ref.dtype)


def _fused_forward(xpad, ops, *, B, h, w, L, TH, vmem_limit, cost):
    n_t = h // TH
    cout = ops[-1].shape[-1]
    in_specs = [pl.BlockSpec((1, xpad.shape[1], xpad.shape[2], xpad.shape[3]),
                             lambda b, t: (b, 0, 0, 0))]          # VMEM-resident per image
    for op in ops:
        in_specs.append(pl.BlockSpec(op.shape, lambda b, t, nd=op.ndim: (0,) * nd))
    return pl.pallas_call(
        functools.partial(_centernet_head_kernel, TH=TH, H=h, W=w, L=L),
        out_shape=jax.ShapeDtypeStruct((B, h, w, cout), jnp.float32),
        grid=(B, n_t),
        in_specs=in_specs,
        out_specs=pl.BlockSpec((1, TH, w, cout), lambda b, t: (b, t, 0, 0)),
        compiler_params=pltpu.CompilerParams(
            dimension_semantics=("parallel", "parallel"),
            vmem_limit_bytes=vmem_limit),
        cost_estimate=cost,
    )(xpad, *ops)


# ----------------------------------------------------------------------------
# Parameters (PyTorch init semantics: conv weights ~ N(0, 0.01), biases = 0,
# cls final bias filled with BIAS_VALUE)
# ----------------------------------------------------------------------------
def _make_single_head_params(key, in_ch, inner_ch, out_ch, num_convs,
                             bias_fill=False, bias_value=0.0):
    convs = []
    for i in range(num_convs):
        inc = in_ch if i == 0 else inner_ch
        key, k = jax.random.split(key)
        convs.append((0.01 * jax.random.normal(k, (3, 3, inc, inner_ch), jnp.float32),
                      jnp.zeros((inner_ch,), jnp.float32)))
    key, k = jax.random.split(key)
    out_w = 0.01 * jax.random.normal(k, (inner_ch, out_ch), jnp.float32)
    out_b = jnp.full((out_ch,), bias_value if bias_fill else 0.0, jnp.float32)
    return {"convs": convs, "out_w": out_w, "out_b": out_b}, key


def make_centernet_params(key, num_cls, cls_num_convs, wh_num_convs, bias_value,
                          stem_in_ch):
    params = {}
    key, k = jax.random.split(key)
    params["stem_w"] = 0.01 * jax.random.normal(k, (stem_in_ch, 64), jnp.float32)
    params["stem_b"] = jnp.zeros((64,), jnp.float32)
    params["cls_head"], key = _make_single_head_params(
        key, 64, 128, num_cls, cls_num_convs, bias_fill=True, bias_value=bias_value)
    params["wh_head"], key = _make_single_head_params(key, 64, 64, 4, wh_num_convs)
    return params


def _pack_params(params, *, in_ch_real, wh_offset_base, TH, W):
    """Pack/cast all parameters into the kernel operand list."""
    cls_convs = params["cls_head"]["convs"]
    wh_convs = params["wh_head"]["convs"]
    L = len(cls_convs)
    assert len(wh_convs) == L and L >= 1, "fused kernel assumes cls/wh head depth match"
    ci = cls_convs[0][0].shape[-1]
    wi = wh_convs[0][0].shape[-1]

    def pack_w(wconv):              # (3,3,cin,cout) -> (3, 3*cin, cout) bf16 (dx fused into K)
        _, _, cin, co = wconv.shape
        return wconv.reshape(3, 3 * cin, co).astype(jnp.bfloat16)

    def col_mask(ext):              # static per-layer column halo mask, flat (M, 1) f32
        rows, cols = TH + 2 * ext, W + 2 * ext
        j = np.tile(np.arange(cols), rows)
        ok = ((j >= ext) & (j < ext + W)).astype(np.float32)
        return jnp.asarray(ok.reshape(rows * cols, 1))

    ops = []
    # stem: fold bias into the (otherwise unused) indicator channel's weight row
    w_stem = params["stem_w"]
    assert in_ch_real < w_stem.shape[0], "need a spare input channel for the stem bias fold"
    w_eff = w_stem.at[in_ch_real, :].set(params["stem_b"])
    ops.append(w_eff.astype(jnp.bfloat16))

    # layer 1: both heads' first 3x3 convs fused along the output-channel axis
    w1 = jnp.concatenate([cls_convs[0][0], wh_convs[0][0]], axis=-1)   # (3,3,64,ci+wi)
    b1 = jnp.concatenate([cls_convs[0][1], wh_convs[0][1]], axis=-1)
    ops += [pack_w(w1), b1.reshape(1, -1).astype(jnp.float32)]
    if L - 1 > 0:
        ops.append(col_mask(L - 1))

    for k in range(1, L):
        ops += [pack_w(cls_convs[k][0]), cls_convs[k][1].reshape(1, -1).astype(jnp.float32),
                pack_w(wh_convs[k][0]), wh_convs[k][1].reshape(1, -1).astype(jnp.float32)]
        ext = L - 1 - k
        if ext > 0:
            ops.append(col_mask(ext))

    # final 1x1 convs packed into one 128-lane output; wh_offset_base folded
    # into the wh weights/bias (relu(s*x) == s*relu(x) for s > 0)
    woc, boc = params["cls_head"]["out_w"], params["cls_head"]["out_b"]
    wow = params["wh_head"]["out_w"] * wh_offset_base
    bow = params["wh_head"]["out_b"] * wh_offset_base
    num_cls = woc.shape[-1]
    cout = max(_LANE, ((num_cls + 4 + _LANE - 1) // _LANE) * _LANE)
    woc_p = jnp.zeros((ci, cout), jnp.float32).at[:, :num_cls].set(woc)
    boc_p = jnp.zeros((cout,), jnp.float32).at[:num_cls].set(boc)
    wow_p = jnp.zeros((wi, cout), jnp.float32).at[:, num_cls:num_cls + 4].set(wow)
    bow_p = jnp.zeros((cout,), jnp.float32).at[num_cls:num_cls + 4].set(bow)
    ops += [woc_p.astype(jnp.bfloat16), boc_p.reshape(1, cout).astype(jnp.float32),
            wow_p.astype(jnp.bfloat16), bow_p.reshape(1, cout).astype(jnp.float32)]
    return ops, L, num_cls, cout


# ----------------------------------------------------------------------------
# Forward pass (training-mode semantics of CenterNet.forward)
# ----------------------------------------------------------------------------
def centernet_forward(x_nchw, params, *, down_ratio=4, wh_offset_base=16.0):
    B, C, H, W = x_nchw.shape
    r = down_ratio
    assert H % r == 0 and W % r == 0
    h, w = H // r, W // r
    num_cls = params["cls_head"]["out_w"].shape[-1]
    L = len(params["cls_head"]["convs"])
    ci = params["cls_head"]["out_w"].shape[0]
    wi = params["wh_head"]["out_w"].shape[0]
    stem_in = params["stem_w"].shape[0]
    in_ch_real = r * r * C

    # --- stem stand-in input: space-to-depth(/r); append an indicator channel
    #     (1 inside the image) so the folded stem bias vanishes at zero padding.
    x = jnp.transpose(x_nchw, (0, 2, 3, 1))
    x = x.reshape(B, h, r, w, r, C).transpose(0, 1, 3, 2, 4, 5).reshape(B, h, w, in_ch_real)
    pad_ch = stem_in - in_ch_real
    assert pad_ch >= 1
    x = jnp.concatenate([x, jnp.ones((B, h, w, 1), x.dtype)], axis=-1)
    if pad_ch > 1:
        x = jnp.pad(x, ((0, 0), (0, 0), (0, 0), (0, pad_ch - 1)))
    xpad = jnp.pad(x.astype(jnp.bfloat16), ((0, 0), (L, L), (L, L), (0, 0)))

    vmem_limit = _vmem_limit_bytes()
    cout = max(_LANE, ((num_cls + 4 + _LANE - 1) // _LANE) * _LANE)
    TH = _pick_tile_rows(B, h, w, L, stem_in, ci, wi, cout, vmem_limit)
    ops, L, num_cls, cout = _pack_params(params, in_ch_real=in_ch_real,
                                         wh_offset_base=wh_offset_base, TH=TH, W=w)
    cost = _cost_estimate(B, h, w, L, stem_in, ci, wi, cout)

    out = _fused_forward(xpad, ops, B=B, h=h, w=w, L=L, TH=TH,
                         vmem_limit=vmem_limit, cost=cost)        # (B, h, w, cout) f32

    cls = jnp.transpose(out[..., :num_cls], (0, 3, 1, 2))          # (B, num_cls, h, w)
    wh = jnp.transpose(out[..., num_cls:num_cls + 4], (0, 3, 1, 2))  # (B, 4, h, w)
    return cls, wh


# ----------------------------------------------------------------------------
# Pure-JAX (XLA) reference with the same dtype rounding points, for checking.
# ----------------------------------------------------------------------------
def _reference_forward(x_nchw, params, *, down_ratio=4, wh_offset_base=16.0):
    B, C, H, W = x_nchw.shape
    r = down_ratio
    h, w = H // r, W // r
    hi = jax.lax.Precision.HIGHEST
    x = jnp.transpose(x_nchw, (0, 2, 3, 1))
    x = x.reshape(B, h, r, w, r, C).transpose(0, 1, 3, 2, 4, 5).reshape(B, h, w, r * r * C)
    k_in = params["stem_w"].shape[0]
    if k_in > r * r * C:
        x = jnp.pad(x, ((0, 0), (0, 0), (0, 0), (0, k_in - r * r * C)))
    xb = x.astype(jnp.bfloat16).astype(jnp.float32)
    sw = params["stem_w"].astype(jnp.bfloat16).astype(jnp.float32)
    feat = jnp.maximum(jnp.einsum("bhwc,cd->bhwd", xb, sw, precision=hi)
                       + params["stem_b"], 0.0).astype(jnp.bfloat16)

    def head(hp, final_relu, scale):
        y = feat
        for wk, bk in hp["convs"]:
            wkb = wk.astype(jnp.bfloat16).astype(jnp.float32)
            y = jax.lax.conv_general_dilated(
                y.astype(jnp.float32), wkb, (1, 1), "SAME",
                dimension_numbers=("NHWC", "HWIO", "NHWC"), precision=hi)
            y = jnp.maximum(y + bk, 0.0).astype(jnp.bfloat16)
        wo = (hp["out_w"] * scale).astype(jnp.bfloat16).astype(jnp.float32)
        out = jnp.einsum("bhwc,cd->bhwd", y.astype(jnp.float32), wo, precision=hi)
        out = out + hp["out_b"] * scale
        if final_relu:
            out = jnp.maximum(out, 0.0)
        return jnp.transpose(out, (0, 3, 1, 2))

    return (head(params["cls_head"], False, 1.0),
            head(params["wh_head"], True, wh_offset_base))


# ----------------------------------------------------------------------------
if __name__ == "__main__":
    NUM_CLS = 80
    CLS_NUM_CONVS = 2
    WH_NUM_CONVS = 2
    BIAS_VALUE = -2.19
    DOWN_RATIO = 4
    WH_OFFSET_BASE = 16.0

    B, C, H, W = 2, 3, 16, 16            # small image; head runs at H/4 x W/4
    key = jax.random.PRNGKey(0)
    key, kx = jax.random.split(key)
    x = jax.random.normal(kx, (B, C, H, W), jnp.float32)

    # 48 real space-to-depth channels + 1 indicator channel, padded up to 64
    stem_in = ((DOWN_RATIO * DOWN_RATIO * C + 1 + 63) // 64) * 64
    params = make_centernet_params(key, NUM_CLS, CLS_NUM_CONVS, WH_NUM_CONVS,
                                   BIAS_VALUE, stem_in_ch=stem_in)

    fwd = jax.jit(functools.partial(centernet_forward, down_ratio=DOWN_RATIO,
                                    wh_offset_base=WH_OFFSET_BASE))
    cls, wh = fwd(x, params)
    jax.block_until_ready((cls, wh))

    assert cls.shape == (B, NUM_CLS, H // DOWN_RATIO, W // DOWN_RATIO)
    assert wh.shape == (B, 4, H // DOWN_RATIO, W // DOWN_RATIO)
    assert bool(jnp.all(wh >= 0.0))      # wh = relu(...) * 16 is non-negative

    # cross-check the Pallas path against a pure-JAX reference of the same net
    cls_ref, wh_ref = _reference_forward(x, params, down_ratio=DOWN_RATIO,
                                         wh_offset_base=WH_OFFSET_BASE)
    assert bool(jnp.allclose(cls, cls_ref, atol=3e-2, rtol=3e-2)), \
        float(jnp.max(jnp.abs(cls - cls_ref)))
    assert bool(jnp.allclose(wh, wh_ref, atol=3e-2, rtol=3e-2)), \
        float(jnp.max(jnp.abs(wh - wh_ref)))

    print("KERNEL_OK")
</pallas_src>

<mosaic_0001>
module attributes {stable_mosaic.version = 11 : i64} {
  func.func @_centernet_head_kernel(%arg0: i32, %arg1: i32, %arg2: memref<1x8x8x64xbf16, #tpu.memory_space<vmem>>, %arg3: memref<64x64xbf16, #tpu.memory_space<vmem>>, %arg4: memref<3x192x192xbf16, #tpu.memory_space<vmem>>, %arg5: memref<1x192xf32, #tpu.memory_space<vmem>>, %arg6: memref<36x1xf32, #tpu.memory_space<vmem>>, %arg7: memref<3x384x128xbf16, #tpu.memory_space<vmem>>, %arg8: memref<1x128xf32, #tpu.memory_space<vmem>>, %arg9: memref<3x192x64xbf16, #tpu.memory_space<vmem>>, %arg10: memref<1x64xf32, #tpu.memory_space<vmem>>, %arg11: memref<128x128xbf16, #tpu.memory_space<vmem>>, %arg12: memref<1x128xf32, #tpu.memory_space<vmem>>, %arg13: memref<64x128xbf16, #tpu.memory_space<vmem>>, %arg14: memref<1x128xf32, #tpu.memory_space<vmem>>, %arg15: memref<1x4x4x128xf32, #tpu.memory_space<vmem>>) attributes {dimension_semantics = [#tpu.dimension_semantics<parallel>, #tpu.dimension_semantics<parallel>], iteration_bounds = array<i64: 2, 1>, scalar_prefetch = 0 : i64, scratch_operands = 0 : i64, tpu.core_type = #tpu.core_type<tc>, window_params = [{transform_indices = @transform_0, window_bounds = array<i64: 1, 8, 8, 64>}, {pipeline_mode = #tpu.pipeline_mode<synchronous>, transform_indices = @transform_1, window_bounds = array<i64: 64, 64>}, {pipeline_mode = #tpu.pipeline_mode<synchronous>, transform_indices = @transform_2, window_bounds = array<i64: 3, 192, 192>}, {pipeline_mode = #tpu.pipeline_mode<synchronous>, transform_indices = @transform_3, window_bounds = array<i64: 1, 192>}, {pipeline_mode = #tpu.pipeline_mode<synchronous>, transform_indices = @transform_4, window_bounds = array<i64: 36, 1>}, {pipeline_mode = #tpu.pipeline_mode<synchronous>, transform_indices = @transform_5, window_bounds = array<i64: 3, 384, 128>}, {pipeline_mode = #tpu.pipeline_mode<synchronous>, transform_indices = @transform_6, window_bounds = array<i64: 1, 128>}, {pipeline_mode = #tpu.pipeline_mode<synchronous>, transform_indices = @transform_7, window_bounds = array<i64: 3, 192, 64>}, {pipeline_mode = #tpu.pipeline_mode<synchronous>, transform_indices = @transform_8, window_bounds = array<i64: 1, 64>}, {pipeline_mode = #tpu.pipeline_mode<synchronous>, transform_indices = @transform_9, window_bounds = array<i64: 128, 128>}, {pipeline_mode = #tpu.pipeline_mode<synchronous>, transform_indices = @transform_10, window_bounds = array<i64: 1, 128>}, {pipeline_mode = #tpu.pipeline_mode<synchronous>, transform_indices = @transform_11, window_bounds = array<i64: 64, 128>}, {pipeline_mode = #tpu.pipeline_mode<synchronous>, transform_indices = @transform_12, window_bounds = array<i64: 1, 128>}, {transform_indices = @transform_13, window_bounds = array<i64: 1, 4, 4, 128>}]} {
    %c4_i32 = arith.constant 4 : i32
    %0 = arith.muli %arg1, %c4_i32 : i32
    %1 = tpu.assume_multiple %0, 4 : i32
    %c0 = arith.constant 0 : index
    %2 = arith.index_cast %1 : i32 to index
    %c0_0 = arith.constant 0 : index
    %c0_1 = arith.constant 0 : index
    %3 = vector.load %arg2[%c0, %2, %c0_0, %c0_1] : memref<1x8x8x64xbf16, #tpu.memory_space<vmem>>, vector<1x8x8x64xbf16>
    %4 = vector.shape_cast %3 : vector<1x8x8x64xbf16> to vector<8x8x64xbf16>
    %5 = vector.shape_cast %4 : vector<8x8x64xbf16> to vector<64x64xbf16>
    %c0_2 = arith.constant 0 : index
    %c0_3 = arith.constant 0 : index
    %6 = vector.load %arg3[%c0_2, %c0_3] : memref<64x64xbf16, #tpu.memory_space<vmem>>, vector<64x64xbf16>
    %cst = arith.constant dense<0.000000e+00> : vector<64x64xf32>
    %7 = tpu.matmul %5, %6, %cst {dimension_numbers = #tpu.dot_dimension_numbers<[1], [0], [0], [1], [0, 0, 1, 1], [], []>} : vector<64x64xbf16>, vector<64x64xbf16>, vector<64x64xf32> -> vector<64x64xf32>
    %cst_4 = arith.constant 0.000000e+00 : f32
    %8 = vector.broadcast %cst_4 : f32 to vector<64x64xf32>
    %9 = arith.maximumf %7, %8 : vector<64x64xf32>
    %10 = arith.truncf %9 : vector<64x64xf32> to vector<64x64xbf16>
    %11 = vector.shape_cast %10 : vector<64x64xbf16> to vector<8x8x64xbf16>
    %12 = vector.extract_strided_slice %11 {offsets = [0, 0, 0], sizes = [8, 6, 64], strides = [1, 1, 1]} : vector<8x8x64xbf16> to vector<8x6x64xbf16>
    %13 = vector.extract_strided_slice %11 {offsets = [0, 1, 0], sizes = [8, 6, 64], strides = [1, 1, 1]} : vector<8x8x64xbf16> to vector<8x6x64xbf16>
    %14 = vector.extract_strided_slice %11 {offsets = [0, 2, 0], sizes = [8, 6, 64], strides = [1, 1, 1]} : vector<8x8x64xbf16> to vector<8x6x64xbf16>
    %15 = tpu.concatenate %12, %13, %14 in 2 : vector<8x6x64xbf16>, vector<8x6x64xbf16>, vector<8x6x64xbf16> -> vector<8x6x192xbf16>
    %16 = vector.extract_strided_slice %15 {offsets = [0, 0, 0], sizes = [6, 6, 192], strides = [1, 1, 1]} : vector<8x6x192xbf16> to vector<6x6x192xbf16>
    %17 = vector.shape_cast %16 : vector<6x6x192xbf16> to vector<36x192xbf16>
    %c0_5 = arith.constant 0 : index
    %c0_6 = arith.constant 0 : index
    %c0_7 = arith.constant 0 : index
    %18 = vector.load %arg4[%c0_5, %c0_6, %c0_7] : memref<3x192x192xbf16, #tpu.memory_space<vmem>>, vector<1x192x192xbf16>
    %19 = vector.shape_cast %18 : vector<1x192x192xbf16> to vector<192x192xbf16>
    %cst_8 = arith.constant dense<0.000000e+00> : vector<36x192xf32>
    %20 = tpu.matmul %17, %19, %cst_8 {dimension_numbers = #tpu.dot_dimension_numbers<[1], [0], [0], [1], [0, 0, 1, 1], [], []>} : vector<36x192xbf16>, vector<192x192xbf16>, vector<36x192xf32> -> vector<36x192xf32>
    %c0_9 = arith.constant 0 : index
    %c0_10 = arith.constant 0 : index
    %21 = vector.load %arg5[%c0_9, %c0_10] : memref<1x192xf32, #tpu.memory_space<vmem>>, vector<1x192xf32>
    %22 = vector.broadcast %21 : vector<1x192xf32> to vector<36x192xf32>
    %23 = arith.addf %20, %22 : vector<36x192xf32>
    %24 = vector.extract_strided_slice %15 {offsets = [1, 0, 0], sizes = [6, 6, 192], strides = [1, 1, 1]} : vector<8x6x192xbf16> to vector<6x6x192xbf16>
    %25 = vector.shape_cast %24 : vector<6x6x192xbf16> to vector<36x192xbf16>
    %c1 = arith.constant 1 : index
    %c0_11 = arith.constant 0 : index
    %c0_12 = arith.constant 0 : index
    %26 = vector.load %arg4[%c1, %c0_11, %c0_12] : memref<3x192x192xbf16, #tpu.memory_space<vmem>>, vector<1x192x192xbf16>
    %27 = vector.shape_cast %26 : vector<1x192x192xbf16> to vector<192x192xbf16>
    %cst_13 = arith.constant dense<0.000000e+00> : vector<36x192xf32>
    %28 = tpu.matmul %25, %27, %cst_13 {dimension_numbers = #tpu.dot_dimension_numbers<[1], [0], [0], [1], [0, 0, 1, 1], [], []>} : vector<36x192xbf16>, vector<192x192xbf16>, vector<36x192xf32> -> vector<36x192xf32>
    %29 = arith.addf %23, %28 : vector<36x192xf32>
    %30 = vector.extract_strided_slice %15 {offsets = [2, 0, 0], sizes = [6, 6, 192], strides = [1, 1, 1]} : vector<8x6x192xbf16> to vector<6x6x192xbf16>
    %31 = vector.shape_cast %30 : vector<6x6x192xbf16> to vector<36x192xbf16>
    %c2 = arith.constant 2 : index
    %c0_14 = arith.constant 0 : index
    %c0_15 = arith.constant 0 : index
    %32 = vector.load %arg4[%c2, %c0_14, %c0_15] : memref<3x192x192xbf16, #tpu.memory_space<vmem>>, vector<1x192x192xbf16>
    %33 = vector.shape_cast %32 : vector<1x192x192xbf16> to vector<192x192xbf16>
    %cst_16 = arith.constant dense<0.000000e+00> : vector<36x192xf32>
    %34 = tpu.matmul %31, %33, %cst_16 {dimension_numbers = #tpu.dot_dimension_numbers<[1], [0], [0], [1], [0, 0, 1, 1], [], []>} : vector<36x192xbf16>, vector<192x192xbf16>, vector<36x192xf32> -> vector<36x192xf32>
    %35 = arith.addf %29, %34 : vector<36x192xf32>
    %cst_17 = arith.constant 0.000000e+00 : f32
    %36 = vector.broadcast %cst_17 : f32 to vector<36x192xf32>
    %37 = arith.maximumf %35, %36 : vector<36x192xf32>
    %38 = tpu.iota {dimensions = array<i32: 0>} : vector<36x1xi32>
    %c1_i32 = arith.constant 1 : i32
    %39 = arith.subi %c1_i32, %1 : i32
    %c0_i32 = arith.constant 0 : i32
    %40 = arith.maxsi %39, %c0_i32 : i32
    %c6_i32 = arith.constant 6 : i32
    %41 = arith.muli %40, %c6_i32 : i32
    %c4_i32_18 = arith.constant 4 : i32
    %42 = arith.addi %1, %c4_i32_18 : i32
    %c1_i32_19 = arith.constant 1 : i32
    %43 = arith.addi %42, %c1_i32_19 : i32
    %c4_i32_20 = arith.constant 4 : i32
    %44 = arith.subi %43, %c4_i32_20 : i32
    %c0_i32_21 = arith.constant 0 : i32
    %45 = arith.maxsi %44, %c0_i32_21 : i32
    %c6_i32_22 = arith.constant 6 : i32
    %46 = arith.muli %45, %c6_i32_22 : i32
    %47 = vector.broadcast %41 : i32 to vector<36x1xi32>
    %48 = arith.cmpi sge, %38, %47 : vector<36x1xi32>
    %c36_i32 = arith.constant 36 : i32
    %49 = arith.subi %c36_i32, %46 : i32
    %50 = vector.broadcast %49 : i32 to vector<36x1xi32>
    %51 = arith.cmpi slt, %38, %50 : vector<36x1xi32>
    %52 = arith.andi %48, %51 : vector<36x1xi1>
    %c0_23 = arith.constant 0 : index
    %c0_24 = arith.constant 0 : index
    %53 = vector.load %arg6[%c0_23, %c0_24] : memref<36x1xf32, #tpu.memory_space<vmem>>, vector<36x1xf32>
    %cst_25 = arith.constant 0.000000e+00 : f32
    %54 = vector.broadcast %cst_25 : f32 to vector<36x1xf32>
    %55 = arith.select %52, %53, %54 : vector<36x1xi1>, vector<36x1xf32>
    %56 = vector.broadcast %55 : vector<36x1xf32> to vector<36x192xf32>
    %57 = arith.mulf %37, %56 : vector<36x192xf32>
    %58 = arith.truncf %57 : vector<36x192xf32> to vector<36x192xbf16>
    %59 = vector.extract_strided_slice %58 {offsets = [0, 0], sizes = [36, 128], strides = [1, 1]} : vector<36x192xbf16> to vector<36x128xbf16>
    %60 = vector.extract_strided_slice %58 {offsets = [0, 128], sizes = [36, 64], strides = [1, 1]} : vector<36x192xbf16> to vector<36x64xbf16>
    %61 = vector.shape_cast %59 : vector<36x128xbf16> to vector<6x6x128xbf16>
    %62 = vector.shape_cast %60 : vector<36x64xbf16> to vector<6x6x64xbf16>
    %63 = vector.extract_strided_slice %61 {offsets = [0, 0, 0], sizes = [6, 4, 128], strides = [1, 1, 1]} : vector<6x6x128xbf16> to vector<6x4x128xbf16>
    %64 = vector.extract_strided_slice %61 {offsets = [0, 1, 0], sizes = [6, 4, 128], strides = [1, 1, 1]} : vector<6x6x128xbf16> to vector<6x4x128xbf16>
    %65 = vector.extract_strided_slice %61 {offsets = [0, 2, 0], sizes = [6, 4, 128], strides = [1, 1, 1]} : vector<6x6x128xbf16> to vector<6x4x128xbf16>
    %66 = tpu.concatenate %63, %64, %65 in 2 : vector<6x4x128xbf16>, vector<6x4x128xbf16>, vector<6x4x128xbf16> -> vector<6x4x384xbf16>
    %67 = vector.extract_strided_slice %66 {offsets = [0, 0, 0], sizes = [4, 4, 384], strides = [1, 1, 1]} : vector<6x4x384xbf16> to vector<4x4x384xbf16>
    %68 = vector.shape_cast %67 : vector<4x4x384xbf16> to vector<16x384xbf16>
    %c0_26 = arith.constant 0 : index
    %c0_27 = arith.constant 0 : index
    %c0_28 = arith.constant 0 : index
    %69 = vector.load %arg7[%c0_26, %c0_27, %c0_28] : memref<3x384x128xbf16, #tpu.memory_space<vmem>>, vector<1x384x128xbf16>
    %70 = vector.shape_cast %69 : vector<1x384x128xbf16> to vector<384x128xbf16>
    %cst_29 = arith.constant dense<0.000000e+00> : vector<16x128xf32>
    %71 = tpu.matmul %68, %70, %cst_29 {dimension_numbers = #tpu.dot_dimension_numbers<[1], [0], [0], [1], [0, 0, 1, 1], [], []>} : vector<16x384xbf16>, vector<384x128xbf16>, vector<16x128xf32> -> vector<16x128xf32>
    %c0_30 = arith.constant 0 : index
    %c0_31 = arith.constant 0 : index
    %72 = vector.load %arg8[%c0_30, %c0_31] : memref<1x128xf32, #tpu.memory_space<vmem>>, vector<1x128xf32>
    %73 = vector.broadcast %72 : vector<1x128xf32> to vector<16x128xf32>
    %74 = arith.addf %71, %73 : vector<16x128xf32>
    %75 = vector.extract_strided_slice %66 {offsets = [1, 0, 0], sizes = [4, 4, 384], strides = [1, 1, 1]} : vector<6x4x384xbf16> to vector<4x4x384xbf16>
    %76 = vector.shape_cast %75 : vector<4x4x384xbf16> to vector<16x384xbf16>
    %c1_32 = arith.constant 1 : index
    %c0_33 = arith.constant 0 : index
    %c0_34 = arith.constant 0 : index
    %77 = vector.load %arg7[%c1_32, %c0_33, %c0_34] : memref<3x384x128xbf16, #tpu.memory_space<vmem>>, vector<1x384x128xbf16>
    %78 = vector.shape_cast %77 : vector<1x384x128xbf16> to vector<384x128xbf16>
    %cst_35 = arith.constant dense<0.000000e+00> : vector<16x128xf32>
    %79 = tpu.matmul %76, %78, %cst_35 {dimension_numbers = #tpu.dot_dimension_numbers<[1], [0], [0], [1], [0, 0, 1, 1], [], []>} : vector<16x384xbf16>, vector<384x128xbf16>, vector<16x128xf32> -> vector<16x128xf32>
    %80 = arith.addf %74, %79 : vector<16x128xf32>
    %81 = vector.extract_strided_slice %66 {offsets = [2, 0, 0], sizes = [4, 4, 384], strides = [1, 1, 1]} : vector<6x4x384xbf16> to vector<4x4x384xbf16>
    %82 = vector.shape_cast %81 : vector<4x4x384xbf16> to vector<16x384xbf16>
    %c2_36 = arith.constant 2 : index
    %c0_37 = arith.constant 0 : index
    %c0_38 = arith.constant 0 : index
    %83 = vector.load %arg7[%c2_36, %c0_37, %c0_38] : memref<3x384x128xbf16, #tpu.memory_space<vmem>>, vector<1x384x128xbf16>
    %84 = vector.shape_cast %83 : vector<1x384x128xbf16> to vector<384x128xbf16>
    %cst_39 = arith.constant dense<0.000000e+00> : vector<16x128xf32>
    %85 = tpu.matmul %82, %84, %cst_39 {dimension_numbers = #tpu.dot_dimension_numbers<[1], [0], [0], [1], [0, 0, 1, 1], [], []>} : vector<16x384xbf16>, vector<384x128xbf16>, vector<16x128xf32> -> vector<16x128xf32>
    %86 = arith.addf %80, %85 : vector<16x128xf32>
    %cst_40 = arith.constant 0.000000e+00 : f32
    %87 = vector.broadcast %cst_40 : f32 to vector<16x128xf32>
    %88 = arith.maximumf %86, %87 : vector<16x128xf32>
    %89 = vector.extract_strided_slice %62 {offsets = [0, 0, 0], sizes = [6, 4, 64], strides = [1, 1, 1]} : vector<6x6x64xbf16> to vector<6x4x64xbf16>
    %90 = vector.extract_strided_slice %62 {offsets = [0, 1, 0], sizes = [6, 4, 64], strides = [1, 1, 1]} : vector<6x6x64xbf16> to vector<6x4x64xbf16>
    %91 = vector.extract_strided_slice %62 {offsets = [0, 2, 0], sizes = [6, 4, 64], strides = [1, 1, 1]} : vector<6x6x64xbf16> to vector<6x4x64xbf16>
    %92 = tpu.concatenate %89, %90, %91 in 2 : vector<6x4x64xbf16>, vector<6x4x64xbf16>, vector<6x4x64xbf16> -> vector<6x4x192xbf16>
    %93 = vector.extract_strided_slice %92 {offsets = [0, 0, 0], sizes = [4, 4, 192], strides = [1, 1, 1]} : vector<6x4x192xbf16> to vector<4x4x192xbf16>
    %94 = vector.shape_cast %93 : vector<4x4x192xbf16> to vector<16x192xbf16>
    %c0_41 = arith.constant 0 : index
    %c0_42 = arith.constant 0 : index
    %c0_43 = arith.constant 0 : index
    %95 = vector.load %arg9[%c0_41, %c0_42, %c0_43] : memref<3x192x64xbf16, #tpu.memory_space<vmem>>, vector<1x192x64xbf16>
    %96 = vector.shape_cast %95 : vector<1x192x64xbf16> to vector<192x64xbf16>
    %cst_44 = arith.constant dense<0.000000e+00> : vector<16x64xf32>
    %97 = tpu.matmul %94, %96, %cst_44 {dimension_numbers = #tpu.dot_dimension_numbers<[1], [0], [0], [1], [0, 0, 1, 1], [], []>} : vector<16x192xbf16>, vector<192x64xbf16>, vector<16x64xf32> -> vector<16x64xf32>
    %c0_45 = arith.constant 0 : index
    %c0_46 = arith.constant 0 : index
    %98 = vector.load %arg10[%c0_45, %c0_46] : memref<1x64xf32, #tpu.memory_space<vmem>>, vector<1x64xf32>
    %99 = vector.broadcast %98 : vector<1x64xf32> to vector<16x64xf32>
    %100 = arith.addf %97, %99 : vector<16x64xf32>
    %101 = vector.extract_strided_slice %92 {offsets = [1, 0, 0], sizes = [4, 4, 192], strides = [1, 1, 1]} : vector<6x4x192xbf16> to vector<4x4x192xbf16>
    %102 = vector.shape_cast %101 : vector<4x4x192xbf16> to vector<16x192xbf16>
    %c1_47 = arith.constant 1 : index
    %c0_48 = arith.constant 0 : index
    %c0_49 = arith.constant 0 : index
    %103 = vector.load %arg9[%c1_47, %c0_48, %c0_49] : memref<3x192x64xbf16, #tpu.memory_space<vmem>>, vector<1x192x64xbf16>
    %104 = vector.shape_cast %103 : vector<1x192x64xbf16> to vector<192x64xbf16>
    %cst_50 = arith.constant dense<0.000000e+00> : vector<16x64xf32>
    %105 = tpu.matmul %102, %104, %cst_50 {dimension_numbers = #tpu.dot_dimension_numbers<[1], [0], [0], [1], [0, 0, 1, 1], [], []>} : vector<16x192xbf16>, vector<192x64xbf16>, vector<16x64xf32> -> vector<16x64xf32>
    %106 = arith.addf %100, %105 : vector<16x64xf32>
    %107 = vector.extract_strided_slice %92 {offsets = [2, 0, 0], sizes = [4, 4, 192], strides = [1, 1, 1]} : vector<6x4x192xbf16> to vector<4x4x192xbf16>
    %108 = vector.shape_cast %107 : vector<4x4x192xbf16> to vector<16x192xbf16>
    %c2_51 = arith.constant 2 : index
    %c0_52 = arith.constant 0 : index
    %c0_53 = arith.constant 0 : index
    %109 = vector.load %arg9[%c2_51, %c0_52, %c0_53] : memref<3x192x64xbf16, #tpu.memory_space<vmem>>, vector<1x192x64xbf16>
    %110 = vector.shape_cast %109 : vector<1x192x64xbf16> to vector<192x64xbf16>
    %cst_54 = arith.constant dense<0.000000e+00> : vector<16x64xf32>
    %111 = tpu.matmul %108, %110, %cst_54 {dimension_numbers = #tpu.dot_dimension_numbers<[1], [0], [0], [1], [0, 0, 1, 1], [], []>} : vector<16x192xbf16>, vector<192x64xbf16>, vector<16x64xf32> -> vector<16x64xf32>
    %112 = arith.addf %106, %111 : vector<16x64xf32>
    %cst_55 = arith.constant 0.000000e+00 : f32
    %113 = vector.broadcast %cst_55 : f32 to vector<16x64xf32>
    %114 = arith.maximumf %112, %113 : vector<16x64xf32>
    %115 = arith.truncf %88 : vector<16x128xf32> to vector<16x128xbf16>
    %116 = arith.truncf %114 : vector<16x64xf32> to vector<16x64xbf16>
    %c0_56 = arith.constant 0 : index
    %c0_57 = arith.constant 0 : index
    %117 = vector.load %arg11[%c0_56, %c0_57] : memref<128x128xbf16, #tpu.memory_space<vmem>>, vector<128x128xbf16>
    %cst_58 = arith.constant dense<0.000000e+00> : vector<16x128xf32>
    %118 = tpu.matmul %115, %117, %cst_58 {dimension_numbers = #tpu.dot_dimension_numbers<[1], [0], [0], [1], [0, 0, 1, 1], [], []>} : vector<16x128xbf16>, vector<128x128xbf16>, vector<16x128xf32> -> vector<16x128xf32>
    %c0_59 = arith.constant 0 : index
    %c0_60 = arith.constant 0 : index
    %119 = vector.load %arg12[%c0_59, %c0_60] : memref<1x128xf32, #tpu.memory_space<vmem>>, vector<1x128xf32>
    %120 = vector.broadcast %119 : vector<1x128xf32> to vector<16x128xf32>
    %121 = arith.addf %118, %120 : vector<16x128xf32>
    %c0_61 = arith.constant 0 : index
    %c0_62 = arith.constant 0 : index
    %122 = vector.load %arg13[%c0_61, %c0_62] : memref<64x128xbf16, #tpu.memory_space<vmem>>, vector<64x128xbf16>
    %cst_63 = arith.constant dense<0.000000e+00> : vector<16x128xf32>
    %123 = tpu.matmul %116, %122, %cst_63 {dimension_numbers = #tpu.dot_dimension_numbers<[1], [0], [0], [1], [0, 0, 1, 1], [], []>} : vector<16x64xbf16>, vector<64x128xbf16>, vector<16x128xf32> -> vector<16x128xf32>
    %c0_64 = arith.constant 0 : index
    %c0_65 = arith.constant 0 : index
    %124 = vector.load %arg14[%c0_64, %c0_65] : memref<1x128xf32, #tpu.memory_space<vmem>>, vector<1x128xf32>
    %125 = vector.broadcast %124 : vector<1x128xf32> to vector<16x128xf32>
    %126 = arith.addf %123, %125 : vector<16x128xf32>
    %cst_66 = arith.constant 0.000000e+00 : f32
    %127 = vector.broadcast %cst_66 : f32 to vector<16x128xf32>
    %128 = arith.maximumf %126, %127 : vector<16x128xf32>
    %129 = arith.addf %121, %128 : vector<16x128xf32>
    %130 = vector.shape_cast %129 : vector<16x128xf32> to vector<1x4x4x128xf32>
    %c0_67 = arith.constant 0 : index
    %c0_68 = arith.constant 0 : index
    %c0_69 = arith.constant 0 : index
    %c0_70 = arith.constant 0 : index
    %131 = vector.load %arg15[%c0_67, %c0_68, %c0_69, %c0_70] : memref<1x4x4x128xf32, #tpu.memory_space<vmem>>, vector<1x4x4x128xf32>
    tpu.vector_store %arg15[%c0_67, %c0_68, %c0_69, %c0_70], %130 {strides = array<i32>} : memref<1x4x4x128xf32, #tpu.memory_space<vmem>>, vector<1x4x4x128xf32>,
    return
  }
  func.func @transform_0(%arg0: i32, %arg1: i32) -> (i32, i32, i32, i32) {
    %c0_i32 = arith.constant 0 : i32
    %c0_i32_0 = arith.constant 0 : i32
    %c0_i32_1 = arith.constant 0 : i32
    %c0_i32_2 = arith.constant 0 : i32
    return %arg0, %c0_i32, %c0_i32_0, %c0_i32_1 : i32, i32, i32, i32
  }
  func.func @transform_1(%arg0: i32, %arg1: i32) -> (i32, i32) {
    %c0_i32 = arith.constant 0 : i32
    %c0_i32_0 = arith.constant 0 : i32
    %c0_i32_1 = arith.constant 0 : i32
    return %c0_i32, %c0_i32_0 : i32, i32
  }
  func.func @transform_2(%arg0: i32, %arg1: i32) -> (i32, i32, i32) {
    %c0_i32 = arith.constant 0 : i32
    %c0_i32_0 = arith.constant 0 : i32
    %c0_i32_1 = arith.constant 0 : i32
    %c0_i32_2 = arith.constant 0 : i32
    return %c0_i32, %c0_i32_0, %c0_i32_1 : i32, i32, i32
  }
  func.func @transform_3(%arg0: i32, %arg1: i32) -> (i32, i32) {
    %c0_i32 = arith.constant 0 : i32
    %c0_i32_0 = arith.constant 0 : i32
    %c0_i32_1 = arith.constant 0 : i32
    return %c0_i32, %c0_i32_0 : i32, i32
  }
  func.func @transform_4(%arg0: i32, %arg1: i32) -> (i32, i32) {
    %c0_i32 = arith.constant 0 : i32
    %c0_i32_0 = arith.constant 0 : i32
    %c0_i32_1 = arith.constant 0 : i32
    return %c0_i32, %c0_i32_0 : i32, i32
  }
  func.func @transform_5(%arg0: i32, %arg1: i32) -> (i32, i32, i32) {
    %c0_i32 = arith.constant 0 : i32
    %c0_i32_0 = arith.constant 0 : i32
    %c0_i32_1 = arith.constant 0 : i32
    %c0_i32_2 = arith.constant 0 : i32
    return %c0_i32, %c0_i32_0, %c0_i32_1 : i32, i32, i32
  }
  func.func @transform_6(%arg0: i32, %arg1: i32) -> (i32, i32) {
    %c0_i32 = arith.constant 0 : i32
    %c0_i32_0 = arith.constant 0 : i32
    %c0_i32_1 = arith.constant 0 : i32
    return %c0_i32, %c0_i32_0 : i32, i32
  }
  func.func @transform_7(%arg0: i32, %arg1: i32) -> (i32, i32, i32) {
    %c0_i32 = arith.constant 0 : i32
    %c0_i32_0 = arith.constant 0 : i32
    %c0_i32_1 = arith.constant 0 : i32
    %c0_i32_2 = arith.constant 0 : i32
    return %c0_i32, %c0_i32_0, %c0_i32_1 : i32, i32, i32
  }
  func.func @transform_8(%arg0: i32, %arg1: i32) -> (i32, i32) {
    %c0_i32 = arith.constant 0 : i32
    %c0_i32_0 = arith.constant 0 : i32
    %c0_i32_1 = arith.constant 0 : i32
    return %c0_i32, %c0_i32_0 : i32, i32
  }
  func.func @transform_9(%arg0: i32, %arg1: i32) -> (i32, i32) {
    %c0_i32 = arith.constant 0 : i32
    %c0_i32_0 = arith.constant 0 : i32
    %c0_i32_1 = arith.constant 0 : i32
    return %c0_i32, %c0_i32_0 : i32, i32
  }
  func.func @transform_10(%arg0: i32, %arg1: i32) -> (i32, i32) {
    %c0_i32 = arith.constant 0 : i32
    %c0_i32_0 = arith.constant 0 : i32
    %c0_i32_1 = arith.constant 0 : i32
    return %c0_i32, %c0_i32_0 : i32, i32
  }
  func.func @transform_11(%arg0: i32, %arg1: i32) -> (i32, i32) {
    %c0_i32 = arith.constant 0 : i32
    %c0_i32_0 = arith.constant 0 : i32
    %c0_i32_1 = arith.constant 0 : i32
    return %c0_i32, %c0_i32_0 : i32, i32
  }
  func.func @transform_12(%arg0: i32, %arg1: i32) -> (i32, i32) {
    %c0_i32 = arith.constant 0 : i32
    %c0_i32_0 = arith.constant 0 : i32
    %c0_i32_1 = arith.constant 0 : i32
    return %c0_i32, %c0_i32_0 : i32, i32
  }
  func.func @transform_13(%arg0: i32, %arg1: i32) -> (i32, i32, i32, i32) {
    %c0_i32 = arith.constant 0 : i32
    %c0_i32_0 = arith.constant 0 : i32
    %c0_i32_1 = arith.constant 0 : i32
    return %arg0, %arg1, %c0_i32, %c0_i32_0 : i32, i32, i32, i32
  }
}

</mosaic_0001>

<llo_original>
// kernel: centernet_forward.1
$region0: #{centernet_forward.1}
  #allocation0 [shape = 'u32[]', space=smem, size = 0x4, offset = 0x4, fixed_abs, tag = 'smem constant byte address 0x4 - core index']
  #allocation1 [shape = 'u32[144,128]{1,0:T(1,128)}', space=vmem, size = 0x12000, scoped, tag = 'internal scratch']
  %s0 = inlined_call_operand.vmem [shape: bf16[2,8,8,64], index: 0, kind: input, shape index: {}]
  %s1 = inlined_call_operand.vmem [shape: bf16[64,64], index: 1, kind: input, shape index: {}]
  %s2 = inlined_call_operand.vmem [shape: bf16[3,192,192], index: 2, kind: input, shape index: {}]
  %s3 = inlined_call_operand.vmem [shape: f32[1,192], index: 3, kind: input, shape index: {}]
  %s4 = inlined_call_operand.vmem [shape: f32[36,1], index: 4, kind: input, shape index: {}]
  %s5 = inlined_call_operand.vmem [shape: bf16[3,384,128], index: 5, kind: input, shape index: {}]
  %s6 = inlined_call_operand.vmem [shape: f32[1,128], index: 6, kind: input, shape index: {}]
  %s7 = inlined_call_operand.vmem [shape: bf16[3,192,64], index: 7, kind: input, shape index: {}]
  %s8 = inlined_call_operand.vmem [shape: f32[1,64], index: 8, kind: input, shape index: {}]
  %s9 = inlined_call_operand.vmem [shape: bf16[128,128], index: 9, kind: input, shape index: {}]
  %s10 = inlined_call_operand.vmem [shape: f32[1,128], index: 10, kind: input, shape index: {}]
  %s11 = inlined_call_operand.vmem [shape: bf16[64,128], index: 11, kind: input, shape index: {}]
  %s12 = inlined_call_operand.vmem [shape: f32[1,128], index: 12, kind: input, shape index: {}]
  %s13 = inlined_call_operand.vmem [shape: f32[2,4,4,128], index: 13, kind: output, shape index: {}]
  %s14 = sld [smem:[#allocation0]]
  $region85: #{centernet_forward.1} parent=0
    _
  %s16 = ssub.s32 1, %s14
  %s17 = scalar_select 0, %s16, %s14
  loop: start=0, step=1, limit=4
  $region2: #{centernet_forward.1} parent=0 // loop_pre_header
    _
  $region3: #{centernet_forward.1} parent=0 // loop_header
    %s19 = sphi 0, %s23
    %p20 = scmp.ge.s32.totalorder %s19, 4
    %s26 = sphi 0, %s38
    %s27 = sphi 0, %s34
    %s28 = sphi 0, %s26
    %s29 = sphi 0, %s27
    %s30 = sphi 0, %s28
    %s31 = sphi 0, %s29
    %s41 = sphi 0, %s43
    %s44 = sphi 0, %s41
    %s45 = sphi 0, %s44
    %s61 = sphi 0, %s45
    %s65 = sphi 0, %s65
    %s67 = sphi 0, %s65
    %s68 = sphi 0, %s67
    %s82 = sphi 0, %s68
    %s86 = sphi 0, %s86
    %s88 = sphi 0, %s86
    %s89 = sphi 0, %s88
    %s103 = sphi 0, %s89
    %s107 = sphi 0, %s107
    %s109 = sphi 0, %s107
    %s110 = sphi 0, %s109
    %s124 = sphi 0, %s110
    %s128 = sphi 0, %s128
    %s130 = sphi 0, %s128
    %s131 = sphi 0, %s130
    %s145 = sphi 0, %s131
    %s149 = sphi 0, %s149
    %s151 = sphi 0, %s149
    %s152 = sphi 0, %s151
    %s166 = sphi 0, %s152
    %s170 = sphi 0, %s170
    %s172 = sphi 0, %s170
    %s173 = sphi 0, %s172
    %s187 = sphi 0, %s173
    %s191 = sphi 0, %s191
    %s193 = sphi 0, %s191
    %s194 = sphi 0, %s193
    %s208 = sphi 0, %s194
    %s212 = sphi 0, %s212
    %s214 = sphi 0, %s212
    %s215 = sphi 0, %s214
    %s229 = sphi 0, %s215
    %s233 = sphi 0, %s233
    %s235 = sphi 0, %s233
    %s236 = sphi 0, %s235
    %s250 = sphi 0, %s236
    %s254 = sphi 0, %s254
    %s256 = sphi 0, %s254
    %s257 = sphi 0, %s256
    %s271 = sphi 0, %s257
    %s275 = sphi 0, %s275
    %s277 = sphi 0, %s275
    %s278 = sphi 0, %s277
    %s292 = sphi 0, %s278
    %s296 = sphi 0, %s296
    %s298 = sphi 0, %s296
    %s299 = sphi 0, %s298
    %s313 = sphi 0, %s299
    %s321 = sphi 0, %s323
    %s324 = sphi 0, %s321
    %s325 = sphi 0, %s324
    %s341 = sphi 0, %s325
  $region4: #{centernet_forward.1} parent=0 // loop_header_branch
    %22 = sbr.rel (%p20) target = $region8
  $region5: #{centernet_forward.1} parent=0 // loop_body
    %s24 = ssub.s32 %s19, 1
    %s25 = ssub.s32 %s19, 2
    %s32 = sadd.s32 1, %s27
    %p33 = scmp.ge.s32.totalorder %s32, 1
    %s34 = scalar_select %p33, 0, %s32
    %s35 = sadd.s32 1, %s26
    %s36 = scalar_select %p33, %s35, %s26
    %p37 = scmp.ge.s32.totalorder %s36, 2
    %s38 = scalar_select %p37, 0, %s36
    %s39 = ssub.s32 %s26, %s38
    %p40 = scmp.eq.s32.totalorder %s39, 0
    %s42 = sadd.s32 %s41, 1
    %s43 = scalar_select %p40, %s41, %s42
    %p46 = pneg %p40
    %p47 = scmp.eq.s32.totalorder %s19, 1
    %p48 = por %p46, %p47
    %p49 = scmp.ne.s32.totalorder %s41, %s44
    %p50 = scmp.eq.s32.totalorder %s19, 0
    %p51 = por %p49, %p50
    %p52 = scmp.ne.s32.totalorder %s41, %s44
    %p53 = scmp.eq.s32.totalorder %s24, 1
    %p54 = por %p52, %p53
    %p55 = scmp.ne.s32.totalorder %s44, %s45
    %p56 = scmp.eq.s32.totalorder %s24, 0
    %p57 = por %p55, %p56
    %p58 = scmp.ne.s32.totalorder %s44, %s45
    %p59 = scmp.eq.s32.totalorder %s25, 1
    %p60 = por %p58, %p59
    %p62 = scmp.ne.s32.totalorder %s45, %s61
    %p63 = scmp.eq.s32.totalorder %s25, 0
    %p64 = por %p62, %p63
    %s66 = sadd.s32 %s65, 1
    %p69 = scmp.eq.s32.totalorder %s19, 1
    %p70 = scmp.ne.s32.totalorder %s65, %s67
    %p71 = scmp.eq.s32.totalorder %s19, 0
    %p72 = por %p70, %p71
    %p73 = scmp.ne.s32.totalorder %s65, %s67
    %p74 = scmp.eq.s32.totalorder %s24, 1
    %p75 = por %p73, %p74
    %p76 = scmp.ne.s32.totalorder %s67, %s68
    %p77 = scmp.eq.s32.totalorder %s24, 0
    %p78 = por %p76, %p77
    %p79 = scmp.ne.s32.totalorder %s67, %s68
    %p80 = scmp.eq.s32.totalorder %s25, 1
    %p81 = por %p79, %p80
    %p83 = scmp.ne.s32.totalorder %s68, %s82
    %p84 = scmp.eq.s32.totalorder %s25, 0
    %p85 = por %p83, %p84
    %s87 = sadd.s32 %s86, 1
    %p90 = scmp.eq.s32.totalorder %s19, 1
    %p91 = scmp.ne.s32.totalorder %s86, %s88
    %p92 = scmp.eq.s32.totalorder %s19, 0
    %p93 = por %p91, %p92
    %p94 = scmp.ne.s32.totalorder %s86, %s88
    %p95 = scmp.eq.s32.totalorder %s24, 1
    %p96 = por %p94, %p95
    %p97 = scmp.ne.s32.totalorder %s88, %s89
    %p98 = scmp.eq.s32.totalorder %s24, 0
    %p99 = por %p97, %p98
    %p100 = scmp.ne.s32.totalorder %s88, %s89
    %p101 = scmp.eq.s32.totalorder %s25, 1
    %p102 = por %p100, %p101
    %p104 = scmp.ne.s32.totalorder %s89, %s103
    %p105 = scmp.eq.s32.totalorder %s25, 0
    %p106 = por %p104, %p105
    %s108 = sadd.s32 %s107, 1
    %p111 = scmp.eq.s32.totalorder %s19, 1
    %p112 = scmp.ne.s32.totalorder %s107, %s109
    %p113 = scmp.eq.s32.totalorder %s19, 0
    %p114 = por %p112, %p113
    %p115 = scmp.ne.s32.totalorder %s107, %s109
    %p116 = scmp.eq.s32.totalorder %s24, 1
    %p117 = por %p115, %p116
    %p118 = scmp.ne.s32.totalorder %s109, %s110
    %p119 = scmp.eq.s32.totalorder %s24, 0
    %p120 = por %p118, %p119
    %p121 = scmp.ne.s32.totalorder %s109, %s110
    %p122 = scmp.eq.s32.totalorder %s25, 1
    %p123 = por %p121, %p122
    %p125 = scmp.ne.s32.totalorder %s110, %s124
    %p126 = scmp.eq.s32.totalorder %s25, 0
    %p127 = por %p125, %p126
    %s129 = sadd.s32 %s128, 1
    %p132 = scmp.eq.s32.totalorder %s19, 1
    %p133 = scmp.ne.s32.totalorder %s128, %s130
    %p134 = scmp.eq.s32.totalorder %s19, 0
    %p135 = por %p133, %p134
    %p136 = scmp.ne.s32.totalorder %s128, %s130
    %p137 = scmp.eq.s32.totalorder %s24, 1
    %p138 = por %p136, %p137
    %p139 = scmp.ne.s32.totalorder %s130, %s131
    %p140 = scmp.eq.s32.totalorder %s24, 0
    %p141 = por %p139, %p140
    %p142 = scmp.ne.s32.totalorder %s130, %s131
    %p143 = scmp.eq.s32.totalorder %s25, 1
    %p144 = por %p142, %p143
    %p146 = scmp.ne.s32.totalorder %s131, %s145
    %p147 = scmp.eq.s32.totalorder %s25, 0
    %p148 = por %p146, %p147
    %s150 = sadd.s32 %s149, 1
    %p153 = scmp.eq.s32.totalorder %s19, 1
    %p154 = scmp.ne.s32.totalorder %s149, %s151
    %p155 = scmp.eq.s32.totalorder %s19, 0
    %p156 = por %p154, %p155
    %p157 = scmp.ne.s32.totalorder %s149, %s151
    %p158 = scmp.eq.s32.totalorder %s24, 1
    %p159 = por %p157, %p158
    %p160 = scmp.ne.s32.totalorder %s151, %s152
    %p161 = scmp.eq.s32.totalorder %s24, 0
    %p162 = por %p160, %p161
    %p163 = scmp.ne.s32.totalorder %s151, %s152
    %p164 = scmp.eq.s32.totalorder %s25, 1
    %p165 = por %p163, %p164
    %p167 = scmp.ne.s32.totalorder %s152, %s166
    %p168 = scmp.eq.s32.totalorder %s25, 0
    %p169 = por %p167, %p168
    %s171 = sadd.s32 %s170, 1
    %p174 = scmp.eq.s32.totalorder %s19, 1
    %p175 = scmp.ne.s32.totalorder %s170, %s172
    %p176 = scmp.eq.s32.totalorder %s19, 0
    %p177 = por %p175, %p176
    %p178 = scmp.ne.s32.totalorder %s170, %s172
    %p179 = scmp.eq.s32.totalorder %s24, 1
    %p180 = por %p178, %p179
    %p181 = scmp.ne.s32.totalorder %s172, %s173
    %p182 = scmp.eq.s32.totalorder %s24, 0
    %p183 = por %p181, %p182
    %p184 = scmp.ne.s32.totalorder %s172, %s173
    %p185 = scmp.eq.s32.totalorder %s25, 1
    %p186 = por %p184, %p185
    %p188 = scmp.ne.s32.totalorder %s173, %s187
    %p189 = scmp.eq.s32.totalorder %s25, 0
    %p190 = por %p188, %p189
    %s192 = sadd.s32 %s191, 1
    %p195 = scmp.eq.s32.totalorder %s19, 1
    %p196 = scmp.ne.s32.totalorder %s191, %s193
    %p197 = scmp.eq.s32.totalorder %s19, 0
    %p198 = por %p196, %p197
    %p199 = scmp.ne.s32.totalorder %s191, %s193
    %p200 = scmp.eq.s32.totalorder %s24, 1
    %p201 = por %p199, %p200
    %p202 = scmp.ne.s32.totalorder %s193, %s194
    %p203 = scmp.eq.s32.totalorder %s24, 0
    %p204 = por %p202, %p203
    %p205 = scmp.ne.s32.totalorder %s193, %s194
    %p206 = scmp.eq.s32.totalorder %s25, 1
    %p207 = por %p205, %p206
    %p209 = scmp.ne.s32.totalorder %s194, %s208
    %p210 = scmp.eq.s32.totalorder %s25, 0
    %p211 = por %p209, %p210
    %s213 = sadd.s32 %s212, 1
    %p216 = scmp.eq.s32.totalorder %s19, 1
    %p217 = scmp.ne.s32.totalorder %s212, %s214
    %p218 = scmp.eq.s32.totalorder %s19, 0
    %p219 = por %p217, %p218
    %p220 = scmp.ne.s32.totalorder %s212, %s214
    %p221 = scmp.eq.s32.totalorder %s24, 1
    %p222 = por %p220, %p221
    %p223 = scmp.ne.s32.totalorder %s214, %s215
    %p224 = scmp.eq.s32.totalorder %s24, 0
    %p225 = por %p223, %p224
    %p226 = scmp.ne.s32.totalorder %s214, %s215
    %p227 = scmp.eq.s32.totalorder %s25, 1
    %p228 = por %p226, %p227
    %p230 = scmp.ne.s32.totalorder %s215, %s229
    %p231 = scmp.eq.s32.totalorder %s25, 0
    %p232 = por %p230, %p231
    %s234 = sadd.s32 %s233, 1
    %p237 = scmp.eq.s32.totalorder %s19, 1
    %p238 = scmp.ne.s32.totalorder %s233, %s235
    %p239 = scmp.eq.s32.totalorder %s19, 0
    %p240 = por %p238, %p239
    %p241 = scmp.ne.s32.totalorder %s233, %s235
    %p242 = scmp.eq.s32.totalorder %s24, 1
    %p243 = por %p241, %p242
    %p244 = scmp.ne.s32.totalorder %s235, %s236
    %p245 = scmp.eq.s32.totalorder %s24, 0
    %p246 = por %p244, %p245
    %p247 = scmp.ne.s32.totalorder %s235, %s236
    %p248 = scmp.eq.s32.totalorder %s25, 1
    %p249 = por %p247, %p248
    %p251 = scmp.ne.s32.totalorder %s236, %s250
    %p252 = scmp.eq.s32.totalorder %s25, 0
    %p253 = por %p251, %p252
    %s255 = sadd.s32 %s254, 1
    %p258 = scmp.eq.s32.totalorder %s19, 1
    %p259 = scmp.ne.s32.totalorder %s254, %s256
    %p260 = scmp.eq.s32.totalorder %s19, 0
    %p261 = por %p259, %p260
    %p262 = scmp.ne.s32.totalorder %s254, %s256
    %p263 = scmp.eq.s32.totalorder %s24, 1
    %p264 = por %p262, %p263
    %p265 = scmp.ne.s32.totalorder %s256, %s257
    %p266 = scmp.eq.s32.totalorder %s24, 0
    %p267 = por %p265, %p266
    %p268 = scmp.ne.s32.totalorder %s256, %s257
    %p269 = scmp.eq.s32.totalorder %s25, 1
    %p270 = por %p268, %p269
    %p272 = scmp.ne.s32.totalorder %s257, %s271
    %p273 = scmp.eq.s32.totalorder %s25, 0
    %p274 = por %p272, %p273
    %s276 = sadd.s32 %s275, 1
    %p279 = scmp.eq.s32.totalorder %s19, 1
    %p280 = scmp.ne.s32.totalorder %s275, %s277
    %p281 = scmp.eq.s32.totalorder %s19, 0
    %p282 = por %p280, %p281
    %p283 = scmp.ne.s32.totalorder %s275, %s277
    %p284 = scmp.eq.s32.totalorder %s24, 1
    %p285 = por %p283, %p284
    %p286 = scmp.ne.s32.totalorder %s277, %s278
    %p287 = scmp.eq.s32.totalorder %s24, 0
    %p288 = por %p286, %p287
    %p289 = scmp.ne.s32.totalorder %s277, %s278
    %p290 = scmp.eq.s32.totalorder %s25, 1
    %p291 = por %p289, %p290
    %p293 = scmp.ne.s32.totalorder %s278, %s292
    %p294 = scmp.eq.s32.totalorder %s25, 0
    %p295 = por %p293, %p294
    %s297 = sadd.s32 %s296, 1
    %p300 = scmp.eq.s32.totalorder %s19, 1
    %p301 = scmp.ne.s32.totalorder %s296, %s298
    %p302 = scmp.eq.s32.totalorder %s19, 0
    %p303 = por %p301, %p302
    %p304 = scmp.ne.s32.totalorder %s296, %s298
    %p305 = scmp.eq.s32.totalorder %s24, 1
    %p306 = por %p304, %p305
    %p307 = scmp.ne.s32.totalorder %s298, %s299
    %p308 = scmp.eq.s32.totalorder %s24, 0
    %p309 = por %p307, %p308
    %p310 = scmp.ne.s32.totalorder %s298, %s299
    %p311 = scmp.eq.s32.totalorder %s25, 1
    %p312 = por %p310, %p311
    %p314 = scmp.ne.s32.totalorder %s299, %s313
    %p315 = scmp.eq.s32.totalorder %s25, 0
    %p316 = por %p314, %p315
    %s317 = ssub.s32 %s26, %s38
    %s318 = ssub.s32 %s27, %s34
    %s319 = sor.u32 %s317, %s318
    %p320 = scmp.eq.s32.totalorder %s319, 0
    %s322 = sadd.s32 %s321, 1
    %s323 = scalar_select %p320, %s321, %s322
    %p326 = pneg %p320
    %p327 = scmp.eq.s32.totalorder %s19, 1
    %p328 = por %p326, %p327
    %p329 = scmp.ne.s32.totalorder %s321, %s324
    %p330 = scmp.eq.s32.totalorder %s19, 0
    %p331 = por %p329, %p330
    %p332 = scmp.ne.s32.totalorder %s321, %s324
    %p333 = scmp.eq.s32.totalorder %s24, 1
    %p334 = por %p332, %p333
    %p335 = scmp.ne.s32.totalorder %s324, %s325
    %p336 = scmp.eq.s32.totalorder %s24, 0
    %p337 = por %p335, %p336
    %p338 = scmp.ne.s32.totalorder %s324, %s325
    %p339 = scmp.eq.s32.totalorder %s25, 1
    %p340 = por %p338, %p339
    %p342 = scmp.ne.s32.totalorder %s325, %s341
    %p343 = scmp.eq.s32.totalorder %s25, 0
    %p344 = por %p342, %p343
    %p345 = scmp.le.s32.totalorder 1, %s19
    %p346 = scmp.lt.s32.totalorder %s19, 3
    %p347 = pnand %p345, %p346
    %p348 = pneg %p347
    // Predicated region
    $region9: #{centernet_forward.1} parent=5 // pred_check
      _
    $region10: #{centernet_forward.1} parent=5 // pred_check_branch
      %350 = sbr.rel (%p347) target = $region12
    $region11: #{centernet_forward.1} parent=5 // pred_region
      %s351 = ssub.s32 %s19, 1
      // Predicated region
      $region13: #{centernet_forward.1} parent=11 // pred_check
        %p352 = pneg %p78
      $region14: #{centernet_forward.1} parent=11 // pred_check_branch
        %354 = sbr.rel (%p352) target = $region16
      $region15: #{centernet_forward.1} parent=11 // pred_region
        _
      $region16: #{centernet_forward.1} parent=11 // pred_fallthru
        _
      // Predicated region
      $region17: #{centernet_forward.1} parent=11 // pred_check
        %p355 = pneg %p99
      $region18: #{centernet_forward.1} parent=11 // pred_check_branch
        %357 = sbr.rel (%p355) target = $region20
      $region19: #{centernet_forward.1} parent=11 // pred_region
        _
      $region20: #{centernet_forward.1} parent=11 // pred_fallthru
        _
      // Predicated region
      $region21: #{centernet_forward.1} parent=11 // pred_check
        %p358 = pneg %p120
      $region22: #{centernet_forward.1} parent=11 // pred_check_branch
        %360 = sbr.rel (%p358) target = $region24
      $region23: #{centernet_forward.1} parent=11 // pred_region
        _
      $region24: #{centernet_forward.1} parent=11 // pred_fallthru
        _
      // Predicated region
      $region25: #{centernet_forward.1} parent=11 // pred_check
        %p361 = pneg %p141
      $region26: #{centernet_forward.1} parent=11 // pred_check_branch
        %363 = sbr.rel (%p361) target = $region28
      $region27: #{centernet_forward.1} parent=11 // pred_region
        _
      $region28: #{centernet_forward.1} parent=11 // pred_fallthru
        _
      // Predicated region
      $region29: #{centernet_forward.1} parent=11 // pred_check
        %p364 = pneg %p162
      $region30: #{centernet_forward.1} parent=11 // pred_check_branch
        %366 = sbr.rel (%p364) target = $region32
      $region31: #{centernet_forward.1} parent=11 // pred_region
        _
      $region32: #{centernet_forward.1} parent=11 // pred_fallthru
        _
      // Predicated region
      $region33: #{centernet_forward.1} parent=11 // pred_check
        %p367 = pneg %p183
      $region34: #{centernet_forward.1} parent=11 // pred_check_branch
        %369 = sbr.rel (%p367) target = $region36
      $region35: #{centernet_forward.1} parent=11 // pred_region
        _
      $region36: #{centernet_forward.1} parent=11 // pred_fallthru
        _
      // Predicated region
      $region37: #{centernet_forward.1} parent=11 // pred_check
        %p370 = pneg %p204
      $region38: #{centernet_forward.1} parent=11 // pred_check_branch
        %372 = sbr.rel (%p370) target = $region40
      $region39: #{centernet_forward.1} parent=11 // pred_region
        _
      $region40: #{centernet_forward.1} parent=11 // pred_fallthru
        _
      // Predicated region
      $region41: #{centernet_forward.1} parent=11 // pred_check
        %p373 = pneg %p225
      $region42: #{centernet_forward.1} parent=11 // pred_check_branch
        %375 = sbr.rel (%p373) target = $region44
      $region43: #{centernet_forward.1} parent=11 // pred_region
        _
      $region44: #{centernet_forward.1} parent=11 // pred_fallthru
        _
      // Predicated region
      $region45: #{centernet_forward.1} parent=11 // pred_check
        %p376 = pneg %p246
      $region46: #{centernet_forward.1} parent=11 // pred_check_branch
        %378 = sbr.rel (%p376) target = $region48
      $region47: #{centernet_forward.1} parent=11 // pred_region
        _
      $region48: #{centernet_forward.1} parent=11 // pred_fallthru
        _
      // Predicated region
      $region49: #{centernet_forward.1} parent=11 // pred_check
        %p379 = pneg %p267
      $region50: #{centernet_forward.1} parent=11 // pred_check_branch
        %381 = sbr.rel (%p379) target = $region52
      $region51: #{centernet_forward.1} parent=11 // pred_region
        _
      $region52: #{centernet_forward.1} parent=11 // pred_fallthru
        _
      // Predicated region
      $region53: #{centernet_forward.1} parent=11 // pred_check
        %p382 = pneg %p288
      $region54: #{centernet_forward.1} parent=11 // pred_check_branch
        %384 = sbr.rel (%p382) target = $region56
      $region55: #{centernet_forward.1} parent=11 // pred_region
        _
      $region56: #{centernet_forward.1} parent=11 // pred_fallthru
        _
      // Predicated region
      $region57: #{centernet_forward.1} parent=11 // pred_check
        %p385 = pneg %p309
      $region58: #{centernet_forward.1} parent=11 // pred_check_branch
        %387 = sbr.rel (%p385) target = $region60
      $region59: #{centernet_forward.1} parent=11 // pred_region
        _
      $region60: #{centernet_forward.1} parent=11 // pred_fallthru
        _
    $region12: #{centernet_forward.1} parent=5 // pred_fallthru
      _
    %p388 = scmp.lt.s32.totalorder %s19, 2
    // Predicated region
    $region61: #{centernet_forward.1} parent=5 // pred_check
      %p389 = pneg %p388
    $region62: #{centernet_forward.1} parent=5 // pred_check_branch
      %391 = sbr.rel (%p389) target = $region64
    $region63: #{centernet_forward.1} parent=5 // pred_region
      // Predicated region
      $region65: #{centernet_forward.1} parent=63 // pred_check
        %p392 = pneg %p51
      $region66: #{centernet_forward.1} parent=63 // pred_check_branch
        %394 = sbr.rel (%p392) target = $region68
      $region67: #{centernet_forward.1} parent=63 // pred_region
        %p395 = scmp.lt.s32.totalorder %s26, 1
        %s396 = scalar_select %p395, %s26, 1
        %s397 = smul.addr %s396, 8
        %s398 = smul.addr %s397, 4
        %s399 = scalar_lea.vmem %s0, %s398
      $region68: #{centernet_forward.1} parent=63 // pred_fallthru
        _
    $region64: #{centernet_forward.1} parent=5 // pred_fallthru
      _
    %p400 = scmp.le.s32.totalorder 1, %s19
    %p401 = scmp.lt.s32.totalorder %s19, 3
    %p402 = pnand %p400, %p401
    %p403 = pneg %p402
    // Predicated region
    $region69: #{centernet_forward.1} parent=5 // pred_check
      _
    $region70: #{centernet_forward.1} parent=5 // pred_check_branch
      %405 = sbr.rel (%p402) target = $region72
    $region71: #{centernet_forward.1} parent=5 // pred_region
      %s406 = ssub.s32 %s19, 1
      %p407 = scmp.lt.s32.totalorder %s28, 1
      %s408 = scalar_select %p407, %s28, 1
      %s409 = smul.addr %s408, 8
      %s410 = smul.addr %s409, 4
      %s411 = scalar_lea.vmem %s0, %s410
      %p412 = pneg %p57
      %p413 = pneg %p54
      %p414 = pneg %p78
      %p415 = pneg %p75
      %p416 = pneg %p99
      %p417 = pneg %p96
      %p418 = pneg %p120
      %p419 = pneg %p117
      %p420 = pneg %p141
      %p421 = pneg %p138
      %p422 = pneg %p162
      %p423 = pneg %p159
      %p424 = pneg %p183
      %p425 = pneg %p180
      %p426 = pneg %p204
      %p427 = pneg %p201
      %p428 = pneg %p225
      %p429 = pneg %p222
      %p430 = pneg %p246
      %p431 = pneg %p243
      %p432 = pneg %p267
      %p433 = pneg %p264
      %p434 = pneg %p288
      %p435 = pneg %p285
      %p436 = pneg %p309
      %p437 = pneg %p306
      %p438 = pneg %p337
      %p439 = pneg %p334
      %s440 = smul.u32 4, %s29
      %p441 = scmp.lt.s32.totalorder %s28, 1
      %s442 = scalar_select %p441, %s28, 1
      %p443 = scmp.lt.s32.totalorder %s440, 3
      %s444 = scalar_select %p443, %s440, 3
      %s445 = smul.addr %s442, 4
      %s446 = sadd.s32 %s444, %s445
      %s447 = smul.addr %s446, 4
      %s448 = scalar_lea.vmem %s13, %s447
      %p449 = scmp.lt.s32.totalorder %s28, 1
      %s450 = scalar_select %p449, %s28, 1
      %s451 = smul.addr %s450, 8
      %s452 = smul.addr %s451, 4
      %s453 = scalar_lea.vmem %s0, %s452
      %s454 = smul.u32 4, %s29
      %p455 = scmp.lt.s32.totalorder %s28, 1
      %s456 = scalar_select %p455, %s28, 1
      %p457 = scmp.lt.s32.totalorder %s454, 3
      %s458 = scalar_select %p457, %s454, 3
      %s459 = smul.addr %s456, 4
      %s460 = sadd.s32 %s458, %s459
      %s461 = smul.addr %s460, 4
      %s462 = scalar_lea.vmem %s13, %s461
      %s463 = smul.u32 4, %s29
      %s465 = smul.u32 %s29, 4
      %s466 = smul.addr %s465, 4
      %s467 = scalar_lea.vmem %s453, %s466
      %v468 = vld [vmem:[%s467] sm:$0xf]
      %v469 = vld [vmem:[%s467 + $0x4] sm:$0xf]
      %v470 = vld [vmem:[%s467 + $0x8] sm:$0xf]
      %v471 = vld [vmem:[%s467 + $0xc] sm:$0xf]
      %v472 = vld [vmem:[%s467 + $0x10] sm:$0xf]
      %v473 = vld [vmem:[%s467 + $0x14] sm:$0xf]
      %v474 = vld [vmem:[%s467 + $0x18] sm:$0xf]
      %v475 = vld [vmem:[%s467 + $0x1c] sm:$0xf]
      %v476 = vld [vmem:[%s1] sm:$0xf]
      %v477 = vld [vmem:[%s1 + $0x4] sm:$0xf]
      %v478 = vld [vmem:[%s1 + $0x8] sm:$0xf]
      %v479 = vld [vmem:[%s1 + $0xc] sm:$0xf]
      %v480 = vld [vmem:[%s1 + $0x10] sm:$0xf]
      %v481 = vld [vmem:[%s1 + $0x14] sm:$0xf]
      %v482 = vld [vmem:[%s1 + $0x18] sm:$0xf]
      %v483 = vld [vmem:[%s1 + $0x1c] sm:$0xf]
      %v492 = vunpack.c.l.b16 %v468
      %v493 = vunpack.c.l.b16 %v469
      %v494 = vunpack.c.l.b16 %v470
      %v495 = vunpack.c.l.b16 %v471
      %v496 = vunpack.c.l.b16 %v472
      %v497 = vunpack.c.l.b16 %v473
      %v498 = vunpack.c.l.b16 %v474
      %v499 = vunpack.c.l.b16 %v475
      %v500 = vpack.c.b16 %v493, %v492
      %v501 = vpack.c.b16 %v495, %v494
      %v502 = vpack.c.b16 %v497, %v496
      %v503 = vpack.c.b16 %v499, %v498
      %v512 = vunpack.c.l.b16 %v476
      %v513 = vunpack.c.l.b16 %v477
      %v514 = vunpack.c.l.b16 %v478
      %v515 = vunpack.c.l.b16 %v479
      %v516 = vunpack.c.l.b16 %v480
      %v517 = vunpack.c.l.b16 %v481
      %v518 = vunpack.c.l.b16 %v482
      %v519 = vunpack.c.l.b16 %v483
      %v520 = vpack.c.b16 %v513, %v512
      %v521 = vpack.c.b16 %v515, %v514
      %v522 = vpack.c.b16 %v517, %v516
      %v523 = vpack.c.b16 %v519, %v518
      %vm528 = vcmask 523264
      %v530 = vsel %vm528, %v500, 0
      %v533 = vsel %vm528, %v501, 0
      %v536 = vsel %vm528, %v502, 0
      %v539 = vsel %vm528, %v503, 0
      %541 = vmatprep.subr.bf16.mxu0 0
      %542 = vmatpush1.bf16.msra.mxu0 %v520
      %543 = vmatprep.subr.bf16.mxu0 0
      %544 = vmatpush1.bf16.msra.mxu0 %v521
      %545 = vmatprep.subr.bf16.mxu0 0
      %546 = vmatpush1.bf16.msra.mxu0 %v522
      %547 = vmatprep.subr.bf16.mxu0 0
      %548 = vmatpush1.bf16.msra.mxu0 %v523
      %549 = vmatprep.subr.bf16.mxu0 0
      %550 = vmatpush1.bf16.msra.mxu0 0
      %551 = vmatprep.subr.bf16.mxu0 0
      %552 = vmatpush1.bf16.msra.mxu0 0
      %553 = vmatprep.subr.bf16.mxu0 0
      %554 = vmatpush1.bf16.msra.mxu0 0
      %555 = vmatprep.subr.bf16.mxu0 0
      %556 = vmatpush1.bf16.msra.mxu0 0
      %557 = vmatprep.subr.bf16.mxu0 0
      %558 = vmatpush1.bf16.msra.mxu0 0
      %559 = vmatprep.subr.bf16.mxu0 0
      %560 = vmatpush1.bf16.msra.mxu0 0
      %561 = vmatprep.subr.bf16.mxu0 0
      %562 = vmatpush1.bf16.msra.mxu0 0
      %563 = vmatprep.subr.bf16.mxu0 0
      %564 = vmatpush1.bf16.msra.mxu0 0
      %565 = vmatprep.subr.bf16.mxu0 0
      %566 = vmatpush1.bf16.msra.mxu0 0
      %567 = vmatprep.subr.bf16.mxu0 0
      %568 = vmatpush1.bf16.msra.mxu0 0
      %569 = vmatprep.subr.bf16.mxu0 0
      %570 = vmatpush1.bf16.msra.mxu0 0
      %571 = vmatprep.subr.bf16.mxu0 0
      %572 = vmatpush1.bf16.msra.mxu0 0
      %573 = vmatprep.mubr.bf16.mxu0 0
      %574 = vmatmul.mubr.bf16.gmra.mrb[0].mxu0 %v530
      %v575 = vpop.f32.mrb[0].mxu0
      %v576 = vadd.f32 0.0, %v575
      %v577 = vpop.f32.mrb[0].mxu0
      %v578 = vpop.f32.mrb[0].mxu0
      %v579 = vadd.f32 0.0, %v578
      %v580 = vpop.f32.mrb[0].mxu0
      %581 = vmatprep.mubr.bf16.mxu0 0
      %582 = vmatmul.mubr.bf16.gmra.mrb[0].mxu0 %v533
      %v583 = vpop.f32.mrb[0].mxu0
      %v584 = vadd.f32 0.0, %v583
      %v585 = vpop.f32.mrb[0].mxu0
      %v586 = vpop.f32.mrb[0].mxu0
      %v587 = vadd.f32 0.0, %v586
      %v588 = vpop.f32.mrb[0].mxu0
      %589 = vmatprep.mubr.bf16.mxu0 0
      %590 = vmatmul.mubr.bf16.gmra.mrb[0].mxu0 %v536
      %v591 = vpop.f32.mrb[0].mxu0
      %v592 = vadd.f32 0.0, %v591
      %v593 = vpop.f32.mrb[0].mxu0
      %v594 = vpop.f32.mrb[0].mxu0
      %v595 = vadd.f32 0.0, %v594
      %v596 = vpop.f32.mrb[0].mxu0
      %597 = vmatprep.mubr.bf16.mxu0 0
      %598 = vmatmul.mubr.bf16.gmra.mrb[0].mxu0 %v539
      %v599 = vpop.f32.mrb[0].mxu0
      %v600 = vadd.f32 0.0, %v599
      %v601 = vpop.f32.mrb[0].mxu0
      %v602 = vpop.f32.mrb[0].mxu0
      %v603 = vadd.f32 0.0, %v602
      %v604 = vpop.f32.mrb[0].mxu0
      %605 = vdwg.mxu0
      %v606 = vmax.f32 %v576, 0.0
      %v607 = vmax.f32 %v579, 0.0
      %v608 = vmax.f32 %v584, 0.0
      %v609 = vmax.f32 %v587, 0.0
      %v610 = vmax.f32 %v592, 0.0
      %v611 = vmax.f32 %v595, 0.0
      %v612 = vmax.f32 %v600, 0.0
      %v613 = vmax.f32 %v603, 0.0
      %v614 = vpack.c.bf16 %v607, %v606
      %v615 = vpack.c.bf16 %v609, %v608
      %v616 = vpack.c.bf16 %v611, %v610
      %v617 = vpack.c.bf16 %v613, %v612
      %v622 = vunpack.c.l.b16 %v614
      %v623 = vunpack.c.h.b16 %v614
      %v624 = vunpack.c.l.b16 %v615
      %v625 = vunpack.c.h.b16 %v615
      %v626 = vunpack.c.l.b16 %v616
      %v627 = vunpack.c.h.b16 %v616
      %v628 = vunpack.c.l.b16 %v617
      %v629 = vunpack.c.h.b16 %v617
      %v630 = vpack.c.b16 %v622, %v622
      %v631 = vpack.c.b16 %v623, %v623
      %v632 = vpack.c.b16 %v624, %v624
      %v633 = vpack.c.b16 %v625, %v625
      %v634 = vpack.c.b16 %v626, %v626
      %v635 = vpack.c.b16 %v627, %v627
      %v636 = vpack.c.b16 %v628, %v628
      %v637 = vpack.c.b16 %v629, %v629
      %v639 = vshrl.u32 %v630, 16
      %v641 = vshll.u32 %v630, 16
      %v643 = vrot.slane %v641, 1
      %v644 = vor.u32 %v639, %v643
      %v646 = vshrl.u32 %v631, 16
      %v648 = vshll.u32 %v631, 16
      %v650 = vrot.slane %v648, 1
      %v651 = vor.u32 %v646, %v650
      %v653 = vshrl.u32 %v632, 16
      %v655 = vshll.u32 %v632, 16
      %v657 = vrot.slane %v655, 1
      %v658 = vor.u32 %v653, %v657
      %v660 = vshrl.u32 %v633, 16
      %v662 = vshll.u32 %v633, 16
      %v664 = vrot.slane %v662, 1
      %v665 = vor.u32 %v660, %v664
      %v667 = vshrl.u32 %v634, 16
      %v669 = vshll.u32 %v634, 16
      %v671 = vrot.slane %v669, 1
      %v672 = vor.u32 %v667, %v671
      %v674 = vshrl.u32 %v635, 16
      %v676 = vshll.u32 %v635, 16
      %v678 = vrot.slane %v676, 1
      %v679 = vor.u32 %v674, %v678
      %v681 = vshrl.u32 %v636, 16
      %v683 = vshll.u32 %v636, 16
      %v685 = vrot.slane %v683, 1
      %v686 = vor.u32 %v681, %v685
      %v688 = vshrl.u32 %v637, 16
      %v690 = vshll.u32 %v637, 16
      %v692 = vrot.slane %v690, 1
      %v693 = vor.u32 %v688, %v692
      %694 = vrot.lane.b32.xlu0 %v644, 64
      %v695 = vpop.permute.xlu0 %694
      %696 = vrot.lane.b32.xlu0 %v651, 64
      %v697 = vpop.permute.xlu0 %696
      %698 = vrot.lane.b32.xlu0 %v658, 64
      %v699 = vpop.permute.xlu0 %698
      %700 = vrot.lane.b32.xlu0 %v665, 64
      %v701 = vpop.permute.xlu0 %700
      %702 = vrot.lane.b32.xlu0 %v672, 64
      %v703 = vpop.permute.xlu0 %702
      %704 = vrot.lane.b32.xlu0 %v679, 64
      %v705 = vpop.permute.xlu0 %704
      %706 = vrot.lane.b32.xlu0 %v686, 64
      %v707 = vpop.permute.xlu0 %706
      %708 = vrot.lane.b32.xlu0 %v693, 64
      %v709 = vpop.permute.xlu0 %708
      %v710 = vrot.slane %v630, 1
      %v711 = vrot.slane %v631, 1
      %v712 = vrot.slane %v632, 1
      %v713 = vrot.slane %v633, 1
      %v714 = vrot.slane %v634, 1
      %v715 = vrot.slane %v635, 1
      %v716 = vrot.slane %v636, 1
      %v717 = vrot.slane %v637, 1
      %v719 = vsel %vm528, %v630, %v695
      %v721 = vsel %vm528, %v631, %v697
      %v723 = vsel %vm528, %v632, %v699
      %v725 = vsel %vm528, %v633, %v701
      %v727 = vsel %vm528, %v634, %v703
      %v729 = vsel %vm528, %v635, %v705
      %v731 = vsel %vm528, %v636, %v707
      %v733 = vsel %vm528, %v637, %v709
      %v740 = vcombine.low %v719, %v710
      %v742 = vunpack.c.l.s4 1966171168
      %v743 = vunpack.c.0.s8 %v742
      %v744 = vlaneseq
      %v745 = vshrl.u32 %v744, 7
      %v746 = vsub.s32 %v743, %v745
      %v747 = vrot.slane %v740, %v746
      %v748 = vcombine.high %v747, %v747
      %v750 = vunpack.c.l.s4 1966171168
      %v751 = vunpack.c.0.s8 %v750
      %v752 = vlaneseq
      %v753 = vshrl.u32 %v752, 7
      %v754 = vsub.s32 %v751, %v753
      %v755 = vrot.slane %v747, %v754
      %v757 = vunpack.c.l.s4 1966171168
      %v758 = vunpack.c.0.s8 %v757
      %v759 = vlaneseq
      %v760 = vshrl.u32 %v759, 7
      %v761 = vsub.s32 %v758, %v760
      %v762 = vrot.slane %v748, %v761
      %v763 = vcombine.high %v755, %v755
      %v764 = vcombine.low %v721, %v711
      %v766 = vunpack.c.l.s4 1966171168
      %v767 = vunpack.c.0.s8 %v766
      %v768 = vlaneseq
      %v769 = vshrl.u32 %v768, 7
      %v770 = vsub.s32 %v767, %v769
      %v771 = vrot.slane %v764, %v770
      %v772 = vcombine.high %v771, %v771
      %v774 = vunpack.c.l.s4 1966171168
      %v775 = vunpack.c.0.s8 %v774
      %v776 = vlaneseq
      %v777 = vshrl.u32 %v776, 7
      %v778 = vsub.s32 %v775, %v777
      %v779 = vrot.slane %v771, %v778
      %v781 = vunpack.c.l.s4 1966171168
      %v782 = vunpack.c.0.s8 %v781
      %v783 = vlaneseq
      %v784 = vshrl.u32 %v783, 7
      %v785 = vsub.s32 %v782, %v784
      %v786 = vrot.slane %v772, %v785
      %v787 = vcombine.high %v779, %v779
      %v788 = vcombine.low %v723, %v712
      %v790 = vunpack.c.l.s4 1966171168
      %v791 = vunpack.c.0.s8 %v790
      %v792 = vlaneseq
      %v793 = vshrl.u32 %v792, 7
      %v794 = vsub.s32 %v791, %v793
      %v795 = vrot.slane %v788, %v794
      %v796 = vcombine.high %v795, %v795
      %v798 = vunpack.c.l.s4 1966171168
      %v799 = vunpack.c.0.s8 %v798
      %v800 = vlaneseq
      %v801 = vshrl.u32 %v800, 7
      %v802 = vsub.s32 %v799, %v801
      %v803 = vrot.slane %v795, %v802
      %v805 = vunpack.c.l.s4 1966171168
      %v806 = vunpack.c.0.s8 %v805
      %v807 = vlaneseq
      %v808 = vshrl.u32 %v807, 7
      %v809 = vsub.s32 %v806, %v808
      %v810 = vrot.slane %v796, %v809
      %v811 = vcombine.high %v803, %v803
      %v812 = vcombine.low %v725, %v713
      %v814 = vunpack.c.l.s4 1966171168
      %v815 = vunpack.c.0.s8 %v814
      %v816 = vlaneseq
      %v817 = vshrl.u32 %v816, 7
      %v818 = vsub.s32 %v815, %v817
      %v819 = vrot.slane %v812, %v818
      %v820 = vcombine.high %v819, %v819
      %v822 = vunpack.c.l.s4 1966171168
      %v823 = vunpack.c.0.s8 %v822
      %v824 = vlaneseq
      %v825 = vshrl.u32 %v824, 7
      %v826 = vsub.s32 %v823, %v825
      %v827 = vrot.slane %v819, %v826
      %v829 = vunpack.c.l.s4 1966171168
      %v830 = vunpack.c.0.s8 %v829
      %v831 = vlaneseq
      %v832 = vshrl.u32 %v831, 7
      %v833 = vsub.s32 %v830, %v832
      %v834 = vrot.slane %v820, %v833
      %v835 = vcombine.high %v827, %v827
      %v836 = vcombine.low %v727, %v714
      %v838 = vunpack.c.l.s4 1966171168
      %v839 = vunpack.c.0.s8 %v838
      %v840 = vlaneseq
      %v841 = vshrl.u32 %v840, 7
      %v842 = vsub.s32 %v839, %v841
      %v843 = vrot.slane %v836, %v842
      %v844 = vcombine.high %v843, %v843
      %v846 = vunpack.c.l.s4 1966171168
      %v847 = vunpack.c.0.s8 %v846
      %v848 = vlaneseq
      %v849 = vshrl.u32 %v848, 7
      %v850 = vsub.s32 %v847, %v849
      %v851 = vrot.slane %v843, %v850
      %v853 = vunpack.c.l.s4 1966171168
      %v854 = vunpack.c.0.s8 %v853
      %v855 = vlaneseq
      %v856 = vshrl.u32 %v855, 7
      %v857 = vsub.s32 %v854, %v856
      %v858 = vrot.slane %v844, %v857
      %v859 = vcombine.high %v851, %v851
      %v860 = vcombine.low %v729, %v715
      %v862 = vunpack.c.l.s4 1966171168
      %v863 = vunpack.c.0.s8 %v862
      %v864 = vlaneseq
      %v865 = vshrl.u32 %v864, 7
      %v866 = vsub.s32 %v863, %v865
      %v867 = vrot.slane %v860, %v866
      %v868 = vcombine.high %v867, %v867
      %v870 = vunpack.c.l.s4 1966171168
      %v871 = vunpack.c.0.s8 %v870
      %v872 = vlaneseq
      %v873 = vshrl.u32 %v872, 7
      %v874 = vsub.s32 %v871, %v873
      %v875 = vrot.slane %v867, %v874
      %v877 = vunpack.c.l.s4 1966171168
      %v878 = vunpack.c.0.s8 %v877
      %v879 = vlaneseq
      %v880 = vshrl.u32 %v879, 7
      %v881 = vsub.s32 %v878, %v880
      %v882 = vrot.slane %v868, %v881
      %v883 = vcombine.high %v875, %v875
      %v884 = vld [vmem:[%s2] sm:$0xff]
      %v885 = vld [vmem:[%s2 + $0x8] sm:$0xff]
      %v886 = vld [vmem:[%s2 + $0x10] sm:$0xff]
      %v887 = vld [vmem:[%s2 + $0x18] sm:$0xff]
      %v888 = vld [vmem:[%s2 + $0x20] sm:$0xff]
      %v889 = vld [vmem:[%s2 + $0x28] sm:$0xff]
      %v890 = vld [vmem:[%s2 + $0x30] sm:$0xff]
      %v891 = vld [vmem:[%s2 + $0x38] sm:$0xff]
      %v892 = vld [vmem:[%s2 + $0x40] sm:$0xff]
      %v893 = vld [vmem:[%s2 + $0x48] sm:$0xff]
      %v894 = vld [vmem:[%s2 + $0x50] sm:$0xff]
      %v895 = vld [vmem:[%s2 + $0x58] sm:$0xff]
      %v896 = vld [vmem:[%s2 + $0x60] sm:$0xff]
      %v897 = vld [vmem:[%s2 + $0x68] sm:$0xff]
      %v898 = vld [vmem:[%s2 + $0x70] sm:$0xff]
      %v899 = vld [vmem:[%s2 + $0x78] sm:$0xff]
      %v900 = vld [vmem:[%s2 + $0x80] sm:$0xff]
      %v901 = vld [vmem:[%s2 + $0x88] sm:$0xff]
      %v902 = vld [vmem:[%s2 + $0x90] sm:$0xff]
      %v903 = vld [vmem:[%s2 + $0x98] sm:$0xff]
      %v904 = vld [vmem:[%s2 + $0xa0] sm:$0xff]
      %v905 = vld [vmem:[%s2 + $0xa8] sm:$0xff]
      %v906 = vld [vmem:[%s2 + $0xb0] sm:$0xff]
      %v907 = vld [vmem:[%s2 + $0xb8] sm:$0xff]
      %v908 = vld [vmem:[%s3] sm:$0x3]
      %v910 = vlaneseq
      %v911 = vshrl.u32 %v910, 7
      %v912 = vsub.s32 0, %v911
      %v913 = vrot.slane %v908, %v912
      %v914 = vlaneseq
      %v915 = vshrl.u32 %v914, 7
      %v916 = vsub.s32 1, %v915
      %v917 = vrot.slane %v908, %v916
      %v920 = vcombine.low %v755, %v762
      %v921 = vcombine.low %v763, %v779
      %v922 = vcombine.low %v786, %v787
      %v923 = vcombine.low %v803, %v810
      %v925 = vunpack.c.l.s4 1966171168
      %v926 = vunpack.c.0.s8 %v925
      %v927 = vlaneseq
      %v928 = vshrl.u32 %v927, 7
      %v929 = vsub.s32 %v926, %v928
      %v930 = vrot.slane %v920, %v929
      %v932 = vunpack.c.l.s4 1966171168
      %v933 = vunpack.c.0.s8 %v932
      %v934 = vlaneseq
      %v935 = vshrl.u32 %v934, 7
      %v936 = vsub.s32 %v933, %v935
      %v937 = vrot.slane %v921, %v936
      %v939 = vunpack.c.l.s4 1966171168
      %v940 = vunpack.c.0.s8 %v939
      %v941 = vlaneseq
      %v942 = vshrl.u32 %v941, 7
      %v943 = vsub.s32 %v940, %v942
      %v944 = vrot.slane %v922, %v943
      %v946 = vunpack.c.l.s4 1966171168
      %v947 = vunpack.c.0.s8 %v946
      %v948 = vlaneseq
      %v949 = vshrl.u32 %v948, 7
      %v950 = vsub.s32 %v947, %v949
      %v951 = vrot.slane %v923, %v950
      %v952 = vcombine.low %v930, %v937
      %v953 = vcombine.high %v930, %v937
      %v954 = vcombine.low %v944, %v951
      %v955 = vcombine.high %v944, %v951
      %v957 = vunpack.c.l.s4 1966171168
      %v958 = vunpack.c.0.s8 %v957
      %v959 = vlaneseq
      %v960 = vshrl.u32 %v959, 7
      %v961 = vsub.s32 %v958, %v960
      %v962 = vrot.slane %v952, %v961
      %v964 = vunpack.c.l.s4 1966171168
      %v965 = vunpack.c.0.s8 %v964
      %v966 = vlaneseq
      %v967 = vshrl.u32 %v966, 7
      %v968 = vsub.s32 %v965, %v967
      %v969 = vrot.slane %v953, %v968
      %v971 = vunpack.c.l.s4 1966171168
      %v972 = vunpack.c.0.s8 %v971
      %v973 = vlaneseq
      %v974 = vshrl.u32 %v973, 7
      %v975 = vsub.s32 %v972, %v974
      %v976 = vrot.slane %v954, %v975
      %v978 = vunpack.c.l.s4 1966171168
      %v979 = vunpack.c.0.s8 %v978
      %v980 = vlaneseq
      %v981 = vshrl.u32 %v980, 7
      %v982 = vsub.s32 %v979, %v981
      %v983 = vrot.slane %v955, %v982
      %v984 = vcombine.low %v962, %v976
      %v985 = vcombine.low %v969, %v983
      %v986 = vcombine.low %v811, %v827
      %v987 = vcombine.low %v834, %v835
      %v988 = vcombine.low %v851, %v858
      %v989 = vcombine.low %v859, %v875
      %v991 = vunpack.c.l.s4 1966171168
      %v992 = vunpack.c.0.s8 %v991
      %v993 = vlaneseq
      %v994 = vshrl.u32 %v993, 7
      %v995 = vsub.s32 %v992, %v994
      %v996 = vrot.slane %v986, %v995
      %v998 = vunpack.c.l.s4 1966171168
      %v999 = vunpack.c.0.s8 %v998
      %v1000 = vlaneseq
      %v1001 = vshrl.u32 %v1000, 7
      %v1002 = vsub.s32 %v999, %v1001
      %v1003 = vrot.slane %v987, %v1002
      %v1005 = vunpack.c.l.s4 1966171168
      %v1006 = vunpack.c.0.s8 %v1005
      %v1007 = vlaneseq
      %v1008 = vshrl.u32 %v1007, 7
      %v1009 = vsub.s32 %v1006, %v1008
      %v1010 = vrot.slane %v988, %v1009
      %v1012 = vunpack.c.l.s4 1966171168
      %v1013 = vunpack.c.0.s8 %v1012
      %v1014 = vlaneseq
      %v1015 = vshrl.u32 %v1014, 7
      %v1016 = vsub.s32 %v1013, %v1015
      %v1017 = vrot.slane %v989, %v1016
      %v1018 = vcombine.low %v996, %v1003
      %v1019 = vcombine.high %v996, %v1003
      %v1020 = vcombine.low %v1010, %v1017
      %v1021 = vcombine.high %v1010, %v1017
      %v1023 = vunpack.c.l.s4 1966171168
      %v1024 = vunpack.c.0.s8 %v1023
      %v1025 = vlaneseq
      %v1026 = vshrl.u32 %v1025, 7
      %v1027 = vsub.s32 %v1024, %v1026
      %v1028 = vrot.slane %v1018, %v1027
      %v1030 = vunpack.c.l.s4 1966171168
      %v1031 = vunpack.c.0.s8 %v1030
      %v1032 = vlaneseq
      %v1033 = vshrl.u32 %v1032, 7
      %v1034 = vsub.s32 %v1031, %v1033
      %v1035 = vrot.slane %v1019, %v1034
      %v1037 = vunpack.c.l.s4 1966171168
      %v1038 = vunpack.c.0.s8 %v1037
      %v1039 = vlaneseq
      %v1040 = vshrl.u32 %v1039, 7
      %v1041 = vsub.s32 %v1038, %v1040
      %v1042 = vrot.slane %v1020, %v1041
      %v1044 = vunpack.c.l.s4 1966171168
      %v1045 = vunpack.c.0.s8 %v1044
      %v1046 = vlaneseq
      %v1047 = vshrl.u32 %v1046, 7
      %v1048 = vsub.s32 %v1045, %v1047
      %v1049 = vrot.slane %v1021, %v1048
      %v1050 = vcombine.low %v1028, %v1042
      %v1051 = vcombine.low %v1035, %v1049
      %v1052 = vcombine.low %v882, %v883
      %v1054 = vunpack.c.l.s4 1966171168
      %v1055 = vunpack.c.0.s8 %v1054
      %v1056 = vlaneseq
      %v1057 = vshrl.u32 %v1056, 7
      %v1058 = vsub.s32 %v1055, %v1057
      %v1059 = vrot.slane %v1052, %v1058
      %v1060 = vcombine.high %v1059, %v1059
      %v1062 = vunpack.c.l.s4 1966171168
      %v1063 = vunpack.c.0.s8 %v1062
      %v1064 = vlaneseq
      %v1065 = vshrl.u32 %v1064, 7
      %v1066 = vsub.s32 %v1063, %v1065
      %v1067 = vrot.slane %v1059, %v1066
      %v1069 = vunpack.c.l.s4 1966171168
      %v1070 = vunpack.c.0.s8 %v1069
      %v1071 = vlaneseq
      %v1072 = vshrl.u32 %v1071, 7
      %v1073 = vsub.s32 %v1070, %v1072
      %v1074 = vrot.slane %v1060, %v1073
      %v1102 = vunpack.c.l.b16 %v884
      %v1103 = vunpack.c.h.b16 %v884
      %v1104 = vunpack.c.l.b16 %v885
      %v1105 = vunpack.c.h.b16 %v885
      %v1106 = vunpack.c.l.b16 %v886
      %v1107 = vunpack.c.h.b16 %v886
      %v1108 = vunpack.c.l.b16 %v887
      %v1109 = vunpack.c.h.b16 %v887
      %v1110 = vunpack.c.l.b16 %v888
      %v1111 = vunpack.c.h.b16 %v888
      %v1112 = vunpack.c.l.b16 %v889
      %v1113 = vunpack.c.h.b16 %v889
      %v1114 = vunpack.c.l.b16 %v890
      %v1115 = vunpack.c.h.b16 %v890
      %v1116 = vunpack.c.l.b16 %v891
      %v1117 = vunpack.c.h.b16 %v891
      %v1118 = vunpack.c.l.b16 %v892
      %v1119 = vunpack.c.h.b16 %v892
      %v1120 = vunpack.c.l.b16 %v893
      %v1121 = vunpack.c.h.b16 %v893
      %v1122 = vunpack.c.l.b16 %v894
      %v1123 = vunpack.c.h.b16 %v894
      %v1124 = vunpack.c.l.b16 %v895
      %v1125 = vunpack.c.h.b16 %v895
      %v1126 = vunpack.c.l.b16 %v896
      %v1127 = vunpack.c.h.b16 %v896
      %v1128 = vunpack.c.l.b16 %v897
      %v1129 = vunpack.c.h.b16 %v897
      %v1130 = vunpack.c.l.b16 %v898
      %v1131 = vunpack.c.h.b16 %v898
      %v1132 = vunpack.c.l.b16 %v899
      %v1133 = vunpack.c.h.b16 %v899
      %v1134 = vunpack.c.l.b16 %v900
      %v1135 = vunpack.c.h.b16 %v900
      %v1136 = vunpack.c.l.b16 %v901
      %v1137 = vunpack.c.h.b16 %v901
      %v1138 = vunpack.c.l.b16 %v902
      %v1139 = vunpack.c.h.b16 %v902
      %v1140 = vunpack.c.l.b16 %v903
      %v1141 = vunpack.c.h.b16 %v903
      %v1142 = vunpack.c.l.b16 %v904
      %v1143 = vunpack.c.h.b16 %v904
      %v1144 = vunpack.c.l.b16 %v905
      %v1145 = vunpack.c.h.b16 %v905
      %v1146 = vunpack.c.l.b16 %v906
      %v1147 = vunpack.c.h.b16 %v906
      %v1148 = vunpack.c.l.b16 %v907
      %v1149 = vunpack.c.h.b16 %v907
      %v1150 = vpack.c.b16 %v1104, %v1102
      %v1151 = vpack.c.b16 %v1105, %v1103
      %v1152 = vpack.c.b16 %v1108, %v1106
      %v1153 = vpack.c.b16 %v1109, %v1107
      %v1154 = vpack.c.b16 %v1112, %v1110
      %v1155 = vpack.c.b16 %v1113, %v1111
      %v1156 = vpack.c.b16 %v1116, %v1114
      %v1157 = vpack.c.b16 %v1117, %v1115
      %v1158 = vpack.c.b16 %v1120, %v1118
      %v1159 = vpack.c.b16 %v1121, %v1119
      %v1160 = vpack.c.b16 %v1124, %v1122
      %v1161 = vpack.c.b16 %v1125, %v1123
      %v1162 = vpack.c.b16 %v1128, %v1126
      %v1163 = vpack.c.b16 %v1129, %v1127
      %v1164 = vpack.c.b16 %v1132, %v1130
      %v1165 = vpack.c.b16 %v1133, %v1131
      %v1166 = vpack.c.b16 %v1136, %v1134
      %v1167 = vpack.c.b16 %v1137, %v1135
      %v1168 = vpack.c.b16 %v1140, %v1138
      %v1169 = vpack.c.b16 %v1141, %v1139
      %v1170 = vpack.c.b16 %v1144, %v1142
      %v1171 = vpack.c.b16 %v1145, %v1143
      %v1172 = vpack.c.b16 %v1148, %v1146
      %v1173 = vpack.c.b16 %v1149, %v1147
      %v1199 = vsel %vm528, %v985, 0
      %v1202 = vsel %vm528, %v1051, 0
      %v1205 = vsel %vm528, %v1074, 0
      %1207 = vmatprep.subr.bf16.mxu0 %v1151
      %1208 = vmatpush1.bf16.msra.mxu0 %v1150
      %1209 = vmatprep.subr.bf16.mxu0 %v1153
      %1210 = vmatpush1.bf16.msra.mxu0 %v1152
      %1211 = vmatprep.subr.bf16.mxu0 %v1155
      %1212 = vmatpush1.bf16.msra.mxu0 %v1154
      %1213 = vmatprep.subr.bf16.mxu0 %v1157
      %1214 = vmatpush1.bf16.msra.mxu0 %v1156
      %1215 = vmatprep.subr.bf16.mxu0 %v1159
      %1216 = vmatpush1.bf16.msra.mxu0 %v1158
      %1217 = vmatprep.subr.bf16.mxu0 %v1161
      %1218 = vmatpush1.bf16.msra.mxu0 %v1160
      %1219 = vmatprep.subr.bf16.mxu0 %v1163
      %1220 = vmatpush1.bf16.msra.mxu0 %v1162
      %1221 = vmatprep.subr.bf16.mxu0 %v1165
      %1222 = vmatpush1.bf16.msra.mxu0 %v1164
      %1223 = vmatprep.subr.bf16.mxu0 %v1167
      %1224 = vmatpush1.bf16.msra.mxu0 %v1166
      %1225 = vmatprep.subr.bf16.mxu0 %v1169
      %1226 = vmatpush1.bf16.msra.mxu0 %v1168
      %1227 = vmatprep.subr.bf16.mxu0 %v1171
      %1228 = vmatpush1.bf16.msra.mxu0 %v1170
      %1229 = vmatprep.subr.bf16.mxu0 %v1173
      %1230 = vmatpush1.bf16.msra.mxu0 %v1172
      %1231 = vmatprep.subr.bf16.mxu0 0
      %1232 = vmatpush1.bf16.msra.mxu0 0
      %1233 = vmatprep.subr.bf16.mxu0 0
      %1234 = vmatpush1.bf16.msra.mxu0 0
      %1235 = vmatprep.subr.bf16.mxu0 0
      %1236 = vmatpush1.bf16.msra.mxu0 0
      %1237 = vmatprep.subr.bf16.mxu0 0
      %1238 = vmatpush1.bf16.msra.mxu0 0
      %1239 = vmatprep.mubr.bf16.mxu0 %v1199
      %1240 = vmatmul.mubr.bf16.gmra.mrb[0].mxu0 %v984
      %v1241 = vpop.f32.mrb[0].mxu0
      %v1242 = vadd.f32 %v913, %v1241
      %v1243 = vpop.f32.mrb[0].mxu0
      %v1244 = vadd.f32 %v917, %v1243
      %v1245 = vpop.f32.mrb[0].mxu0
      %v1246 = vadd.f32 %v913, %v1245
      %v1247 = vpop.f32.mrb[0].mxu0
      %v1248 = vadd.f32 %v917, %v1247
      %1249 = vmatprep.mubr.bf16.mxu0 %v1202
      %1250 = vmatmul.mubr.bf16.gmra.mrb[0].mxu0 %v1050
      %v1251 = vpop.f32.mrb[0].mxu0
      %v1252 = vadd.f32 %v913, %v1251
      %v1253 = vpop.f32.mrb[0].mxu0
      %v1254 = vadd.f32 %v917, %v1253
      %v1255 = vpop.f32.mrb[0].mxu0
      %v1256 = vadd.f32 %v913, %v1255
      %v1257 = vpop.f32.mrb[0].mxu0
      %v1258 = vadd.f32 %v917, %v1257
      %1259 = vmatprep.mubr.bf16.mxu0 %v1205
      %1260 = vmatmul.mubr.bf16.gmra.mrb[0].mxu0 %v1067
      %v1261 = vpop.f32.mrb[0].mxu0
      %v1262 = vadd.f32 %v913, %v1261
      %v1263 = vpop.f32.mrb[0].mxu0
      %v1264 = vadd.f32 %v917, %v1263
      %v1265 = vpop.f32.mrb[0].mxu0
      %v1266 = vpop.f32.mrb[0].mxu0
      %1267 = vdwg.mxu0
      %v1269 = vcombine.low %v731, %v716
      %v1271 = vunpack.c.l.s4 1966171168
      %v1272 = vunpack.c.0.s8 %v1271
      %v1273 = vlaneseq
      %v1274 = vshrl.u32 %v1273, 7
      %v1275 = vsub.s32 %v1272, %v1274
      %v1276 = vrot.slane %v1269, %v1275
      %v1277 = vcombine.high %v1276, %v1276
      %v1279 = vunpack.c.l.s4 1966171168
      %v1280 = vunpack.c.0.s8 %v1279
      %v1281 = vlaneseq
      %v1282 = vshrl.u32 %v1281, 7
      %v1283 = vsub.s32 %v1280, %v1282
      %v1284 = vrot.slane %v1276, %v1283
      %v1286 = vunpack.c.l.s4 1966171168
      %v1287 = vunpack.c.0.s8 %v1286
      %v1288 = vlaneseq
      %v1289 = vshrl.u32 %v1288, 7
      %v1290 = vsub.s32 %v1287, %v1289
      %v1291 = vrot.slane %v1277, %v1290
      %v1292 = vcombine.high %v1284, %v1284
      %s1293 = scalar_lea.vmem %s2, 192
      %v1294 = vld [vmem:[%s1293] sm:$0xff]
      %v1295 = vld [vmem:[%s1293 + $0x8] sm:$0xff]
      %v1296 = vld [vmem:[%s1293 + $0x10] sm:$0xff]
      %v1297 = vld [vmem:[%s1293 + $0x18] sm:$0xff]
      %v1298 = vld [vmem:[%s1293 + $0x20] sm:$0xff]
      %v1299 = vld [vmem:[%s1293 + $0x28] sm:$0xff]
      %v1300 = vld [vmem:[%s1293 + $0x30] sm:$0xff]
      %v1301 = vld [vmem:[%s1293 + $0x38] sm:$0xff]
      %v1302 = vld [vmem:[%s1293 + $0x40] sm:$0xff]
      %v1303 = vld [vmem:[%s1293 + $0x48] sm:$0xff]
      %v1304 = vld [vmem:[%s1293 + $0x50] sm:$0xff]
      %v1305 = vld [vmem:[%s1293 + $0x58] sm:$0xff]
      %v1306 = vld [vmem:[%s1293 + $0x60] sm:$0xff]
      %v1307 = vld [vmem:[%s1293 + $0x68] sm:$0xff]
      %v1308 = vld [vmem:[%s1293 + $0x70] sm:$0xff]
      %v1309 = vld [vmem:[%s1293 + $0x78] sm:$0xff]
      %v1310 = vld [vmem:[%s1293 + $0x80] sm:$0xff]
      %v1311 = vld [vmem:[%s1293 + $0x88] sm:$0xff]
      %v1312 = vld [vmem:[%s1293 + $0x90] sm:$0xff]
      %v1313 = vld [vmem:[%s1293 + $0x98] sm:$0xff]
      %v1314 = vld [vmem:[%s1293 + $0xa0] sm:$0xff]
      %v1315 = vld [vmem:[%s1293 + $0xa8] sm:$0xff]
      %v1316 = vld [vmem:[%s1293 + $0xb0] sm:$0xff]
      %v1317 = vld [vmem:[%s1293 + $0xb8] sm:$0xff]
      %v1318 = vcombine.low %v779, %v786
      %v1319 = vcombine.low %v787, %v803
      %v1320 = vcombine.low %v810, %v811
      %v1321 = vcombine.low %v827, %v834
      %v1323 = vunpack.c.l.s4 1966171168
      %v1324 = vunpack.c.0.s8 %v1323
      %v1325 = vlaneseq
      %v1326 = vshrl.u32 %v1325, 7
      %v1327 = vsub.s32 %v1324, %v1326
      %v1328 = vrot.slane %v1318, %v1327
      %v1330 = vunpack.c.l.s4 1966171168
      %v1331 = vunpack.c.0.s8 %v1330
      %v1332 = vlaneseq
      %v1333 = vshrl.u32 %v1332, 7
      %v1334 = vsub.s32 %v1331, %v1333
      %v1335 = vrot.slane %v1319, %v1334
      %v1337 = vunpack.c.l.s4 1966171168
      %v1338 = vunpack.c.0.s8 %v1337
      %v1339 = vlaneseq
      %v1340 = vshrl.u32 %v1339, 7
      %v1341 = vsub.s32 %v1338, %v1340
      %v1342 = vrot.slane %v1320, %v1341
      %v1344 = vunpack.c.l.s4 1966171168
      %v1345 = vunpack.c.0.s8 %v1344
      %v1346 = vlaneseq
      %v1347 = vshrl.u32 %v1346, 7
      %v1348 = vsub.s32 %v1345, %v1347
      %v1349 = vrot.slane %v1321, %v1348
      %v1350 = vcombine.low %v1328, %v1335
      %v1351 = vcombine.high %v1328, %v1335
      %v1352 = vcombine.low %v1342, %v1349
      %v1353 = vcombine.high %v1342, %v1349
      %v1355 = vunpack.c.l.s4 1966171168
      %v1356 = vunpack.c.0.s8 %v1355
      %v1357 = vlaneseq
      %v1358 = vshrl.u32 %v1357, 7
      %v1359 = vsub.s32 %v1356, %v1358
      %v1360 = vrot.slane %v1350, %v1359
      %v1362 = vunpack.c.l.s4 1966171168
      %v1363 = vunpack.c.0.s8 %v1362
      %v1364 = vlaneseq
      %v1365 = vshrl.u32 %v1364, 7
      %v1366 = vsub.s32 %v1363, %v1365
      %v1367 = vrot.slane %v1351, %v1366
      %v1369 = vunpack.c.l.s4 1966171168
      %v1370 = vunpack.c.0.s8 %v1369
      %v1371 = vlaneseq
      %v1372 = vshrl.u32 %v1371, 7
      %v1373 = vsub.s32 %v1370, %v1372
      %v1374 = vrot.slane %v1352, %v1373
      %v1376 = vunpack.c.l.s4 1966171168
      %v1377 = vunpack.c.0.s8 %v1376
      %v1378 = vlaneseq
      %v1379 = vshrl.u32 %v1378, 7
      %v1380 = vsub.s32 %v1377, %v1379
      %v1381 = vrot.slane %v1353, %v1380
      %v1382 = vcombine.low %v1360, %v1374
      %v1383 = vcombine.low %v1367, %v1381
      %v1384 = vcombine.low %v835, %v851
      %v1385 = vcombine.low %v858, %v859
      %v1386 = vcombine.low %v875, %v882
      %v1387 = vcombine.low %v883, %v1284
      %v1389 = vunpack.c.l.s4 1966171168
      %v1390 = vunpack.c.0.s8 %v1389
      %v1391 = vlaneseq
      %v1392 = vshrl.u32 %v1391, 7
      %v1393 = vsub.s32 %v1390, %v1392
      %v1394 = vrot.slane %v1384, %v1393
      %v1396 = vunpack.c.l.s4 1966171168
      %v1397 = vunpack.c.0.s8 %v1396
      %v1398 = vlaneseq
      %v1399 = vshrl.u32 %v1398, 7
      %v1400 = vsub.s32 %v1397, %v1399
      %v1401 = vrot.slane %v1385, %v1400
      %v1403 = vunpack.c.l.s4 1966171168
      %v1404 = vunpack.c.0.s8 %v1403
      %v1405 = vlaneseq
      %v1406 = vshrl.u32 %v1405, 7
      %v1407 = vsub.s32 %v1404, %v1406
      %v1408 = vrot.slane %v1386, %v1407
      %v1410 = vunpack.c.l.s4 1966171168
      %v1411 = vunpack.c.0.s8 %v1410
      %v1412 = vlaneseq
      %v1413 = vshrl.u32 %v1412, 7
      %v1414 = vsub.s32 %v1411, %v1413
      %v1415 = vrot.slane %v1387, %v1414
      %v1416 = vcombine.low %v1394, %v1401
      %v1417 = vcombine.high %v1394, %v1401
      %v1418 = vcombine.low %v1408, %v1415
      %v1419 = vcombine.high %v1408, %v1415
      %v1421 = vunpack.c.l.s4 1966171168
      %v1422 = vunpack.c.0.s8 %v1421
      %v1423 = vlaneseq
      %v1424 = vshrl.u32 %v1423, 7
      %v1425 = vsub.s32 %v1422, %v1424
      %v1426 = vrot.slane %v1416, %v1425
      %v1428 = vunpack.c.l.s4 1966171168
      %v1429 = vunpack.c.0.s8 %v1428
      %v1430 = vlaneseq
      %v1431 = vshrl.u32 %v1430, 7
      %v1432 = vsub.s32 %v1429, %v1431
      %v1433 = vrot.slane %v1417, %v1432
      %v1435 = vunpack.c.l.s4 1966171168
      %v1436 = vunpack.c.0.s8 %v1435
      %v1437 = vlaneseq
      %v1438 = vshrl.u32 %v1437, 7
      %v1439 = vsub.s32 %v1436, %v1438
      %v1440 = vrot.slane %v1418, %v1439
      %v1442 = vunpack.c.l.s4 1966171168
      %v1443 = vunpack.c.0.s8 %v1442
      %v1444 = vlaneseq
      %v1445 = vshrl.u32 %v1444, 7
      %v1446 = vsub.s32 %v1443, %v1445
      %v1447 = vrot.slane %v1419, %v1446
      %v1448 = vcombine.low %v1426, %v1440
      %v1449 = vcombine.low %v1433, %v1447
      %v1450 = vcombine.low %v1291, %v1292
      %v1452 = vunpack.c.l.s4 1966171168
      %v1453 = vunpack.c.0.s8 %v1452
      %v1454 = vlaneseq
      %v1455 = vshrl.u32 %v1454, 7
      %v1456 = vsub.s32 %v1453, %v1455
      %v1457 = vrot.slane %v1450, %v1456
      %v1458 = vcombine.high %v1457, %v1457
      %v1460 = vunpack.c.l.s4 1966171168
      %v1461 = vunpack.c.0.s8 %v1460
      %v1462 = vlaneseq
      %v1463 = vshrl.u32 %v1462, 7
      %v1464 = vsub.s32 %v1461, %v1463
      %v1465 = vrot.slane %v1457, %v1464
      %v1467 = vunpack.c.l.s4 1966171168
      %v1468 = vunpack.c.0.s8 %v1467
      %v1469 = vlaneseq
      %v1470 = vshrl.u32 %v1469, 7
      %v1471 = vsub.s32 %v1468, %v1470
      %v1472 = vrot.slane %v1458, %v1471
      %v1500 = vunpack.c.l.b16 %v1294
      %v1501 = vunpack.c.h.b16 %v1294
      %v1502 = vunpack.c.l.b16 %v1295
      %v1503 = vunpack.c.h.b16 %v1295
      %v1504 = vunpack.c.l.b16 %v1296
      %v1505 = vunpack.c.h.b16 %v1296
      %v1506 = vunpack.c.l.b16 %v1297
      %v1507 = vunpack.c.h.b16 %v1297
      %v1508 = vunpack.c.l.b16 %v1298
      %v1509 = vunpack.c.h.b16 %v1298
      %v1510 = vunpack.c.l.b16 %v1299
      %v1511 = vunpack.c.h.b16 %v1299
      %v1512 = vunpack.c.l.b16 %v1300
      %v1513 = vunpack.c.h.b16 %v1300
      %v1514 = vunpack.c.l.b16 %v1301
      %v1515 = vunpack.c.h.b16 %v1301
      %v1516 = vunpack.c.l.b16 %v1302
      %v1517 = vunpack.c.h.b16 %v1302
      %v1518 = vunpack.c.l.b16 %v1303
      %v1519 = vunpack.c.h.b16 %v1303
      %v1520 = vunpack.c.l.b16 %v1304
      %v1521 = vunpack.c.h.b16 %v1304
      %v1522 = vunpack.c.l.b16 %v1305
      %v1523 = vunpack.c.h.b16 %v1305
      %v1524 = vunpack.c.l.b16 %v1306
      %v1525 = vunpack.c.h.b16 %v1306
      %v1526 = vunpack.c.l.b16 %v1307
      %v1527 = vunpack.c.h.b16 %v1307
      %v1528 = vunpack.c.l.b16 %v1308
      %v1529 = vunpack.c.h.b16 %v1308
      %v1530 = vunpack.c.l.b16 %v1309
      %v1531 = vunpack.c.h.b16 %v1309
      %v1532 = vunpack.c.l.b16 %v1310
      %v1533 = vunpack.c.h.b16 %v1310
      %v1534 = vunpack.c.l.b16 %v1311
      %v1535 = vunpack.c.h.b16 %v1311
      %v1536 = vunpack.c.l.b16 %v1312
      %v1537 = vunpack.c.h.b16 %v1312
      %v1538 = vunpack.c.l.b16 %v1313
      %v1539 = vunpack.c.h.b16 %v1313
      %v1540 = vunpack.c.l.b16 %v1314
      %v1541 = vunpack.c.h.b16 %v1314
      %v1542 = vunpack.c.l.b16 %v1315
      %v1543 = vunpack.c.h.b16 %v1315
      %v1544 = vunpack.c.l.b16 %v1316
      %v1545 = vunpack.c.h.b16 %v1316
      %v1546 = vunpack.c.l.b16 %v1317
      %v1547 = vunpack.c.h.b16 %v1317
      %v1548 = vpack.c.b16 %v1502, %v1500
      %v1549 = vpack.c.b16 %v1503, %v1501
      %v1550 = vpack.c.b16 %v1506, %v1504
      %v1551 = vpack.c.b16 %v1507, %v1505
      %v1552 = vpack.c.b16 %v1510, %v1508
      %v1553 = vpack.c.b16 %v1511, %v1509
      %v1554 = vpack.c.b16 %v1514, %v1512
      %v1555 = vpack.c.b16 %v1515, %v1513
      %v1556 = vpack.c.b16 %v1518, %v1516
      %v1557 = vpack.c.b16 %v1519, %v1517
      %v1558 = vpack.c.b16 %v1522, %v1520
      %v1559 = vpack.c.b16 %v1523, %v1521
      %v1560 = vpack.c.b16 %v1526, %v1524
      %v1561 = vpack.c.b16 %v1527, %v1525
      %v1562 = vpack.c.b16 %v1530, %v1528
      %v1563 = vpack.c.b16 %v1531, %v1529
      %v1564 = vpack.c.b16 %v1534, %v1532
      %v1565 = vpack.c.b16 %v1535, %v1533
      %v1566 = vpack.c.b16 %v1538, %v1536
      %v1567 = vpack.c.b16 %v1539, %v1537
      %v1568 = vpack.c.b16 %v1542, %v1540
      %v1569 = vpack.c.b16 %v1543, %v1541
      %v1570 = vpack.c.b16 %v1546, %v1544
      %v1571 = vpack.c.b16 %v1547, %v1545
      %v1597 = vsel %vm528, %v1383, 0
      %v1600 = vsel %vm528, %v1449, 0
      %v1603 = vsel %vm528, %v1472, 0
      %1605 = vmatprep.subr.bf16.mxu0 %v1549
      %1606 = vmatpush1.bf16.msra.mxu0 %v1548
      %1607 = vmatprep.subr.bf16.mxu0 %v1551
      %1608 = vmatpush1.bf16.msra.mxu0 %v1550
      %1609 = vmatprep.subr.bf16.mxu0 %v1553
      %1610 = vmatpush1.bf16.msra.mxu0 %v1552
      %1611 = vmatprep.subr.bf16.mxu0 %v1555
      %1612 = vmatpush1.bf16.msra.mxu0 %v1554
      %1613 = vmatprep.subr.bf16.mxu0 %v1557
      %1614 = vmatpush1.bf16.msra.mxu0 %v1556
      %1615 = vmatprep.subr.bf16.mxu0 %v1559
      %1616 = vmatpush1.bf16.msra.mxu0 %v1558
      %1617 = vmatprep.subr.bf16.mxu0 %v1561
      %1618 = vmatpush1.bf16.msra.mxu0 %v1560
      %1619 = vmatprep.subr.bf16.mxu0 %v1563
      %1620 = vmatpush1.bf16.msra.mxu0 %v1562
      %1621 = vmatprep.subr.bf16.mxu0 %v1565
      %1622 = vmatpush1.bf16.msra.mxu0 %v1564
      %1623 = vmatprep.subr.bf16.mxu0 %v1567
      %1624 = vmatpush1.bf16.msra.mxu0 %v1566
      %1625 = vmatprep.subr.bf16.mxu0 %v1569
      %1626 = vmatpush1.bf16.msra.mxu0 %v1568
      %1627 = vmatprep.subr.bf16.mxu0 %v1571
      %1628 = vmatpush1.bf16.msra.mxu0 %v1570
      %1629 = vmatprep.subr.bf16.mxu0 0
      %1630 = vmatpush1.bf16.msra.mxu0 0
      %1631 = vmatprep.subr.bf16.mxu0 0
      %1632 = vmatpush1.bf16.msra.mxu0 0
      %1633 = vmatprep.subr.bf16.mxu0 0
      %1634 = vmatpush1.bf16.msra.mxu0 0
      %1635 = vmatprep.subr.bf16.mxu0 0
      %1636 = vmatpush1.bf16.msra.mxu0 0
      %1637 = vmatprep.mubr.bf16.mxu0 %v1597
      %1638 = vmatmul.mubr.bf16.gmra.mrb[0].mxu0 %v1382
      %v1639 = vpop.f32.mrb[0].mxu0
      %v1640 = vadd.f32 0.0, %v1639
      %v1641 = vpop.f32.mrb[0].mxu0
      %v1642 = vadd.f32 0.0, %v1641
      %v1643 = vpop.f32.mrb[0].mxu0
      %v1644 = vadd.f32 0.0, %v1643
      %v1645 = vpop.f32.mrb[0].mxu0
      %v1646 = vadd.f32 0.0, %v1645
      %1647 = vmatprep.mubr.bf16.mxu0 %v1600
      %1648 = vmatmul.mubr.bf16.gmra.mrb[0].mxu0 %v1448
      %v1649 = vpop.f32.mrb[0].mxu0
      %v1650 = vadd.f32 0.0, %v1649
      %v1651 = vpop.f32.mrb[0].mxu0
      %v1652 = vadd.f32 0.0, %v1651
      %v1653 = vpop.f32.mrb[0].mxu0
      %v1654 = vadd.f32 0.0, %v1653
      %v1655 = vpop.f32.mrb[0].mxu0
      %v1656 = vadd.f32 0.0, %v1655
      %1657 = vmatprep.mubr.bf16.mxu0 %v1603
      %1658 = vmatmul.mubr.bf16.gmra.mrb[0].mxu0 %v1465
      %v1659 = vpop.f32.mrb[0].mxu0
      %v1660 = vadd.f32 0.0, %v1659
      %v1661 = vpop.f32.mrb[0].mxu0
      %v1662 = vadd.f32 0.0, %v1661
      %v1663 = vpop.f32.mrb[0].mxu0
      %v1664 = vpop.f32.mrb[0].mxu0
      %1665 = vdwg.mxu0
      %v1666 = vadd.f32 %v1242, %v1640
      %v1667 = vadd.f32 %v1244, %v1642
      %v1668 = vadd.f32 %v1246, %v1644
      %v1669 = vadd.f32 %v1248, %v1646
      %v1670 = vadd.f32 %v1252, %v1650
      %v1671 = vadd.f32 %v1254, %v1652
      %v1672 = vadd.f32 %v1256, %v1654
      %v1673 = vadd.f32 %v1258, %v1656
      %v1674 = vadd.f32 %v1262, %v1660
      %v1675 = vadd.f32 %v1264, %v1662
      %v1677 = vcombine.low %v733, %v717
      %v1679 = vunpack.c.l.s4 1966171168
      %v1680 = vunpack.c.0.s8 %v1679
      %v1681 = vlaneseq
      %v1682 = vshrl.u32 %v1681, 7
      %v1683 = vsub.s32 %v1680, %v1682
      %v1684 = vrot.slane %v1677, %v1683
      %v1685 = vcombine.high %v1684, %v1684
      %v1687 = vunpack.c.l.s4 1966171168
      %v1688 = vunpack.c.0.s8 %v1687
      %v1689 = vlaneseq
      %v1690 = vshrl.u32 %v1689, 7
      %v1691 = vsub.s32 %v1688, %v1690
      %v1692 = vrot.slane %v1684, %v1691
      %v1694 = vunpack.c.l.s4 1966171168
      %v1695 = vunpack.c.0.s8 %v1694
      %v1696 = vlaneseq
      %v1697 = vshrl.u32 %v1696, 7
      %v1698 = vsub.s32 %v1695, %v1697
      %v1699 = vrot.slane %v1685, %v1698
      %v1700 = vcombine.high %v1692, %v1692
      %s1701 = scalar_lea.vmem %s2, 384
      %v1702 = vld [vmem:[%s1701] sm:$0xff]
      %v1703 = vld [vmem:[%s1701 + $0x8] sm:$0xff]
      %v1704 = vld [vmem:[%s1701 + $0x10] sm:$0xff]
      %v1705 = vld [vmem:[%s1701 + $0x18] sm:$0xff]
      %v1706 = vld [vmem:[%s1701 + $0x20] sm:$0xff]
      %v1707 = vld [vmem:[%s1701 + $0x28] sm:$0xff]
      %v1708 = vld [vmem:[%s1701 + $0x30] sm:$0xff]
      %v1709 = vld [vmem:[%s1701 + $0x38] sm:$0xff]
      %v1710 = vld [vmem:[%s1701 + $0x40] sm:$0xff]
      %v1711 = vld [vmem:[%s1701 + $0x48] sm:$0xff]
      %v1712 = vld [vmem:[%s1701 + $0x50] sm:$0xff]
      %v1713 = vld [vmem:[%s1701 + $0x58] sm:$0xff]
      %v1714 = vld [vmem:[%s1701 + $0x60] sm:$0xff]
      %v1715 = vld [vmem:[%s1701 + $0x68] sm:$0xff]
      %v1716 = vld [vmem:[%s1701 + $0x70] sm:$0xff]
      %v1717 = vld [vmem:[%s1701 + $0x78] sm:$0xff]
      %v1718 = vld [vmem:[%s1701 + $0x80] sm:$0xff]
      %v1719 = vld [vmem:[%s1701 + $0x88] sm:$0xff]
      %v1720 = vld [vmem:[%s1701 + $0x90] sm:$0xff]
      %v1721 = vld [vmem:[%s1701 + $0x98] sm:$0xff]
      %v1722 = vld [vmem:[%s1701 + $0xa0] sm:$0xff]
      %v1723 = vld [vmem:[%s1701 + $0xa8] sm:$0xff]
      %v1724 = vld [vmem:[%s1701 + $0xb0] sm:$0xff]
      %v1725 = vld [vmem:[%s1701 + $0xb8] sm:$0xff]
      %v1726 = vcombine.low %v951, %v996
      %v1727 = vcombine.high %v951, %v996
      %v1728 = vcombine.low %v1003, %v1010
      %v1729 = vcombine.high %v1003, %v1010
      %v1731 = vunpack.c.l.s4 1966171168
      %v1732 = vunpack.c.0.s8 %v1731
      %v1733 = vlaneseq
      %v1734 = vshrl.u32 %v1733, 7
      %v1735 = vsub.s32 %v1732, %v1734
      %v1736 = vrot.slane %v1726, %v1735
      %v1738 = vunpack.c.l.s4 1966171168
      %v1739 = vunpack.c.0.s8 %v1738
      %v1740 = vlaneseq
      %v1741 = vshrl.u32 %v1740, 7
      %v1742 = vsub.s32 %v1739, %v1741
      %v1743 = vrot.slane %v1727, %v1742
      %v1745 = vunpack.c.l.s4 1966171168
      %v1746 = vunpack.c.0.s8 %v1745
      %v1747 = vlaneseq
      %v1748 = vshrl.u32 %v1747, 7
      %v1749 = vsub.s32 %v1746, %v1748
      %v1750 = vrot.slane %v1728, %v1749
      %v1752 = vunpack.c.l.s4 1966171168
      %v1753 = vunpack.c.0.s8 %v1752
      %v1754 = vlaneseq
      %v1755 = vshrl.u32 %v1754, 7
      %v1756 = vsub.s32 %v1753, %v1755
      %v1757 = vrot.slane %v1729, %v1756
      %v1758 = vcombine.low %v1736, %v1750
      %v1759 = vcombine.low %v1743, %v1757
      %v1760 = vcombine.low %v1284, %v1291
      %v1761 = vcombine.low %v1292, %v1692
      %v1763 = vunpack.c.l.s4 1966171168
      %v1764 = vunpack.c.0.s8 %v1763
      %v1765 = vlaneseq
      %v1766 = vshrl.u32 %v1765, 7
      %v1767 = vsub.s32 %v1764, %v1766
      %v1768 = vrot.slane %v1760, %v1767
      %v1770 = vunpack.c.l.s4 1966171168
      %v1771 = vunpack.c.0.s8 %v1770
      %v1772 = vlaneseq
      %v1773 = vshrl.u32 %v1772, 7
      %v1774 = vsub.s32 %v1771, %v1773
      %v1775 = vrot.slane %v1761, %v1774
      %v1776 = vcombine.low %v1017, %v1059
      %v1777 = vcombine.high %v1017, %v1059
      %v1778 = vcombine.low %v1768, %v1775
      %v1779 = vcombine.high %v1768, %v1775
      %v1781 = vunpack.c.l.s4 1966171168
      %v1782 = vunpack.c.0.s8 %v1781
      %v1783 = vlaneseq
      %v1784 = vshrl.u32 %v1783, 7
      %v1785 = vsub.s32 %v1782, %v1784
      %v1786 = vrot.slane %v1776, %v1785
      %v1788 = vunpack.c.l.s4 1966171168
      %v1789 = vunpack.c.0.s8 %v1788
      %v1790 = vlaneseq
      %v1791 = vshrl.u32 %v1790, 7
      %v1792 = vsub.s32 %v1789, %v1791
      %v1793 = vrot.slane %v1777, %v1792
      %v1795 = vunpack.c.l.s4 1966171168
      %v1796 = vunpack.c.0.s8 %v1795
      %v1797 = vlaneseq
      %v1798 = vshrl.u32 %v1797, 7
      %v1799 = vsub.s32 %v1796, %v1798
      %v1800 = vrot.slane %v1778, %v1799
      %v1802 = vunpack.c.l.s4 1966171168
      %v1803 = vunpack.c.0.s8 %v1802
      %v1804 = vlaneseq
      %v1805 = vshrl.u32 %v1804, 7
      %v1806 = vsub.s32 %v1803, %v1805
      %v1807 = vrot.slane %v1779, %v1806
      %v1808 = vcombine.low %v1786, %v1800
      %v1809 = vcombine.low %v1793, %v1807
      %v1810 = vcombine.low %v1699, %v1700
      %v1812 = vunpack.c.l.s4 1966171168
      %v1813 = vunpack.c.0.s8 %v1812
      %v1814 = vlaneseq
      %v1815 = vshrl.u32 %v1814, 7
      %v1816 = vsub.s32 %v1813, %v1815
      %v1817 = vrot.slane %v1810, %v1816
      %v1818 = vcombine.high %v1817, %v1817
      %v1820 = vunpack.c.l.s4 1966171168
      %v1821 = vunpack.c.0.s8 %v1820
      %v1822 = vlaneseq
      %v1823 = vshrl.u32 %v1822, 7
      %v1824 = vsub.s32 %v1821, %v1823
      %v1825 = vrot.slane %v1817, %v1824
      %v1827 = vunpack.c.l.s4 1966171168
      %v1828 = vunpack.c.0.s8 %v1827
      %v1829 = vlaneseq
      %v1830 = vshrl.u32 %v1829, 7
      %v1831 = vsub.s32 %v1828, %v1830
      %v1832 = vrot.slane %v1818, %v1831
      %v1860 = vunpack.c.l.b16 %v1702
      %v1861 = vunpack.c.h.b16 %v1702
      %v1862 = vunpack.c.l.b16 %v1703
      %v1863 = vunpack.c.h.b16 %v1703
      %v1864 = vunpack.c.l.b16 %v1704
      %v1865 = vunpack.c.h.b16 %v1704
      %v1866 = vunpack.c.l.b16 %v1705
      %v1867 = vunpack.c.h.b16 %v1705
      %v1868 = vunpack.c.l.b16 %v1706
      %v1869 = vunpack.c.h.b16 %v1706
      %v1870 = vunpack.c.l.b16 %v1707
      %v1871 = vunpack.c.h.b16 %v1707
      %v1872 = vunpack.c.l.b16 %v1708
      %v1873 = vunpack.c.h.b16 %v1708
      %v1874 = vunpack.c.l.b16 %v1709
      %v1875 = vunpack.c.h.b16 %v1709
      %v1876 = vunpack.c.l.b16 %v1710
      %v1877 = vunpack.c.h.b16 %v1710
      %v1878 = vunpack.c.l.b16 %v1711
      %v1879 = vunpack.c.h.b16 %v1711
      %v1880 = vunpack.c.l.b16 %v1712
      %v1881 = vunpack.c.h.b16 %v1712
      %v1882 = vunpack.c.l.b16 %v1713
      %v1883 = vunpack.c.h.b16 %v1713
      %v1884 = vunpack.c.l.b16 %v1714
      %v1885 = vunpack.c.h.b16 %v1714
      %v1886 = vunpack.c.l.b16 %v1715
      %v1887 = vunpack.c.h.b16 %v1715
      %v1888 = vunpack.c.l.b16 %v1716
      %v1889 = vunpack.c.h.b16 %v1716
      %v1890 = vunpack.c.l.b16 %v1717
      %v1891 = vunpack.c.h.b16 %v1717
      %v1892 = vunpack.c.l.b16 %v1718
      %v1893 = vunpack.c.h.b16 %v1718
      %v1894 = vunpack.c.l.b16 %v1719
      %v1895 = vunpack.c.h.b16 %v1719
      %v1896 = vunpack.c.l.b16 %v1720
      %v1897 = vunpack.c.h.b16 %v1720
      %v1898 = vunpack.c.l.b16 %v1721
      %v1899 = vunpack.c.h.b16 %v1721
      %v1900 = vunpack.c.l.b16 %v1722
      %v1901 = vunpack.c.h.b16 %v1722
      %v1902 = vunpack.c.l.b16 %v1723
      %v1903 = vunpack.c.h.b16 %v1723
      %v1904 = vunpack.c.l.b16 %v1724
      %v1905 = vunpack.c.h.b16 %v1724
      %v1906 = vunpack.c.l.b16 %v1725
      %v1907 = vunpack.c.h.b16 %v1725
      %v1908 = vpack.c.b16 %v1862, %v1860
      %v1909 = vpack.c.b16 %v1863, %v1861
      %v1910 = vpack.c.b16 %v1866, %v1864
      %v1911 = vpack.c.b16 %v1867, %v1865
      %v1912 = vpack.c.b16 %v1870, %v1868
      %v1913 = vpack.c.b16 %v1871, %v1869
      %v1914 = vpack.c.b16 %v1874, %v1872
      %v1915 = vpack.c.b16 %v1875, %v1873
      %v1916 = vpack.c.b16 %v1878, %v1876
      %v1917 = vpack.c.b16 %v1879, %v1877
      %v1918 = vpack.c.b16 %v1882, %v1880
      %v1919 = vpack.c.b16 %v1883, %v1881
      %v1920 = vpack.c.b16 %v1886, %v1884
      %v1921 = vpack.c.b16 %v1887, %v1885
      %v1922 = vpack.c.b16 %v1890, %v1888
      %v1923 = vpack.c.b16 %v1891, %v1889
      %v1924 = vpack.c.b16 %v1894, %v1892
      %v1925 = vpack.c.b16 %v1895, %v1893
      %v1926 = vpack.c.b16 %v1898, %v1896
      %v1927 = vpack.c.b16 %v1899, %v1897
      %v1928 = vpack.c.b16 %v1902, %v1900
      %v1929 = vpack.c.b16 %v1903, %v1901
      %v1930 = vpack.c.b16 %v1906, %v1904
      %v1931 = vpack.c.b16 %v1907, %v1905
      %v1957 = vsel %vm528, %v1759, 0
      %v1960 = vsel %vm528, %v1809, 0
      %v1963 = vsel %vm528, %v1832, 0
      %1965 = vmatprep.subr.bf16.mxu0 %v1909
      %1966 = vmatpush1.bf16.msra.mxu0 %v1908
      %1967 = vmatprep.subr.bf16.mxu0 %v1911
      %1968 = vmatpush1.bf16.msra.mxu0 %v1910
      %1969 = vmatprep.subr.bf16.mxu0 %v1913
      %1970 = vmatpush1.bf16.msra.mxu0 %v1912
      %1971 = vmatprep.subr.bf16.mxu0 %v1915
      %1972 = vmatpush1.bf16.msra.mxu0 %v1914
      %1973 = vmatprep.subr.bf16.mxu0 %v1917
      %1974 = vmatpush1.bf16.msra.mxu0 %v1916
      %1975 = vmatprep.subr.bf16.mxu0 %v1919
      %1976 = vmatpush1.bf16.msra.mxu0 %v1918
      %1977 = vmatprep.subr.bf16.mxu0 %v1921
      %1978 = vmatpush1.bf16.msra.mxu0 %v1920
      %1979 = vmatprep.subr.bf16.mxu0 %v1923
      %1980 = vmatpush1.bf16.msra.mxu0 %v1922
      %1981 = vmatprep.subr.bf16.mxu0 %v1925
      %1982 = vmatpush1.bf16.msra.mxu0 %v1924
      %1983 = vmatprep.subr.bf16.mxu0 %v1927
      %1984 = vmatpush1.bf16.msra.mxu0 %v1926
      %1985 = vmatprep.subr.bf16.mxu0 %v1929
      %1986 = vmatpush1.bf16.msra.mxu0 %v1928
      %1987 = vmatprep.subr.bf16.mxu0 %v1931
      %1988 = vmatpush1.bf16.msra.mxu0 %v1930
      %1989 = vmatprep.subr.bf16.mxu0 0
      %1990 = vmatpush1.bf16.msra.mxu0 0
      %1991 = vmatprep.subr.bf16.mxu0 0
      %1992 = vmatpush1.bf16.msra.mxu0 0
      %1993 = vmatprep.subr.bf16.mxu0 0
      %1994 = vmatpush1.bf16.msra.mxu0 0
      %1995 = vmatprep.subr.bf16.mxu0 0
      %1996 = vmatpush1.bf16.msra.mxu0 0
      %1997 = vmatprep.mubr.bf16.mxu0 %v1957
      %1998 = vmatmul.mubr.bf16.gmra.mrb[0].mxu0 %v1758
      %v1999 = vpop.f32.mrb[0].mxu0
      %v2000 = vadd.f32 0.0, %v1999
      %v2001 = vpop.f32.mrb[0].mxu0
      %v2002 = vadd.f32 0.0, %v2001
      %v2003 = vpop.f32.mrb[0].mxu0
      %v2004 = vadd.f32 0.0, %v2003
      %v2005 = vpop.f32.mrb[0].mxu0
      %v2006 = vadd.f32 0.0, %v2005
      %2007 = vmatprep.mubr.bf16.mxu0 %v1960
      %2008 = vmatmul.mubr.bf16.gmra.mrb[0].mxu0 %v1808
      %v2009 = vpop.f32.mrb[0].mxu0
      %v2010 = vadd.f32 0.0, %v2009
      %v2011 = vpop.f32.mrb[0].mxu0
      %v2012 = vadd.f32 0.0, %v2011
      %v2013 = vpop.f32.mrb[0].mxu0
      %v2014 = vadd.f32 0.0, %v2013
      %v2015 = vpop.f32.mrb[0].mxu0
      %v2016 = vadd.f32 0.0, %v2015
      %2017 = vmatprep.mubr.bf16.mxu0 %v1963
      %2018 = vmatmul.mubr.bf16.gmra.mrb[0].mxu0 %v1825
      %v2019 = vpop.f32.mrb[0].mxu0
      %v2020 = vadd.f32 0.0, %v2019
      %v2021 = vpop.f32.mrb[0].mxu0
      %v2022 = vadd.f32 0.0, %v2021
      %v2023 = vpop.f32.mrb[0].mxu0
      %v2024 = vpop.f32.mrb[0].mxu0
      %2025 = vdwg.mxu0
      %v2026 = vadd.f32 %v1666, %v2000
      %v2027 = vadd.f32 %v1667, %v2002
      %v2028 = vadd.f32 %v1668, %v2004
      %v2029 = vadd.f32 %v1669, %v2006
      %v2030 = vadd.f32 %v1670, %v2010
      %v2031 = vadd.f32 %v1671, %v2012
      %v2032 = vadd.f32 %v1672, %v2014
      %v2033 = vadd.f32 %v1673, %v2016
      %v2034 = vadd.f32 %v1674, %v2020
      %v2035 = vadd.f32 %v1675, %v2022
      %v2036 = vmax.f32 %v2026, 0.0
      %v2037 = vmax.f32 %v2027, 0.0
      %v2038 = vmax.f32 %v2028, 0.0
      %v2039 = vmax.f32 %v2029, 0.0
      %v2040 = vmax.f32 %v2030, 0.0
      %v2041 = vmax.f32 %v2031, 0.0
      %v2042 = vmax.f32 %v2032, 0.0
      %v2043 = vmax.f32 %v2033, 0.0
      %v2044 = vmax.f32 %v2034, 0.0
      %v2045 = vmax.f32 %v2035, 0.0
      %v2046 = vlaneseq
      %v2047 = vshrl.u32 %v2046, 7
      %v2048 = vadd.s32 %v2047, 8
      %v2049 = vadd.s32 %v2047, 16
      %v2050 = vadd.s32 %v2047, 24
      %v2051 = vadd.s32 %v2047, 32
      %s2052 = ssub.s32 1, %s465
      %p2053 = scmp.gt.s32.totalorder %s2052, 0
      %s2054 = scalar_select %p2053, %s2052, 0
      %s2055 = smul.u32 %s2054, 6
      %s2056 = sadd.s32 %s465, 1
      %p2057 = scmp.gt.s32.totalorder %s2056, 0
      %s2058 = scalar_select %p2057, %s2056, 0
      %s2059 = smul.u32 %s2058, 6
      %v2060 = vstv %s2055
      %vm2061 = vcmp.ge.s32.totalorder %v2047, %v2060
      %vm2062 = vcmp.ge.s32.totalorder %v2048, %v2060
      %vm2063 = vcmp.ge.s32.totalorder %v2049, %v2060
      %vm2064 = vcmp.ge.s32.totalorder %v2050, %v2060
      %vm2065 = vcmp.ge.s32.totalorder %v2051, %v2060
      %s2066 = ssub.s32 36, %s2059
      %v2067 = vstv %s2066
      %vm2068 = vcmp.lt.s32.totalorder %v2047, %v2067
      %vm2069 = vcmp.lt.s32.totalorder %v2048, %v2067
      %vm2070 = vcmp.lt.s32.totalorder %v2049, %v2067
      %vm2071 = vcmp.lt.s32.totalorder %v2050, %v2067
      %vm2072 = vcmp.lt.s32.totalorder %v2051, %v2067
      %vm2073 = vmand %vm2061, %vm2068
      %vm2074 = vmand %vm2062, %vm2069
      %vm2075 = vmand %vm2063, %vm2070
      %vm2076 = vmand %vm2064, %vm2071
      %vm2077 = vmand %vm2065, %vm2072
      %v2078 = vld [vmem:[%s4] sm:$0xff]
      %v2079 = vld [vmem:[%s4 + $0x8] sm:$0xff]
      %v2080 = vld [vmem:[%s4 + $0x10] sm:$0xff]
      %v2081 = vld [vmem:[%s4 + $0x18] sm:$0xff]
      %v2082 = vld [vmem:[%s4 + $0x20] sm:$0xf]
      %v2083 = vsel %vm2073, %v2078, 0.0
      %v2084 = vsel %vm2074, %v2079, 0.0
      %v2085 = vsel %vm2075, %v2080, 0.0
      %v2086 = vsel %vm2076, %v2081, 0.0
      %v2087 = vsel %vm2077, %v2082, 0.0
      %2089 = vset.pattern.permute.xlu0 0
      %2090 = vperm.xlu0 %2089, %v2083
      %v2091 = vpop.permute.xlu0 %2090
      %2094 = vset.pattern.permute.xlu0 0
      %2095 = vperm.xlu0 %2094, %v2084
      %v2096 = vpop.permute.xlu0 %2095
      %2099 = vset.pattern.permute.xlu0 0
      %2100 = vperm.xlu0 %2099, %v2085
      %v2101 = vpop.permute.xlu0 %2100
      %2104 = vset.pattern.permute.xlu0 0
      %2105 = vperm.xlu0 %2104, %v2086
      %v2106 = vpop.permute.xlu0 %2105
      %2109 = vset.pattern.permute.xlu0 0
      %2110 = vperm.xlu0 %2109, %v2087
      %v2111 = vpop.permute.xlu0 %2110
      %v2113 = vmul.f32 %v2036, %v2091
      %v2114 = vmul.f32 %v2037, %v2091
      %v2115 = vmul.f32 %v2038, %v2096
      %v2116 = vmul.f32 %v2039, %v2096
      %v2117 = vmul.f32 %v2040, %v2101
      %v2118 = vmul.f32 %v2041, %v2101
      %v2119 = vmul.f32 %v2042, %v2106
      %v2120 = vmul.f32 %v2043, %v2106
      %v2121 = vmul.f32 %v2044, %v2111
      %v2122 = vmul.f32 %v2045, %v2111
      %v2123 = vpack.c.bf16 %v2115, %v2113
      %v2124 = vpack.c.bf16 %v2116, %v2114
      %v2125 = vpack.c.bf16 %v2119, %v2117
      %v2126 = vpack.c.bf16 %v2120, %v2118
      %v2127 = vpack.c.bf16 %v2121, %v2121
      %v2128 = vpack.c.bf16 %v2122, %v2122
      %v2132 = vcombine.high %v2123, %v2123
      %v2134 = vunpack.c.l.s4 1966171168
      %v2135 = vunpack.c.0.s8 %v2134
      %v2136 = vlaneseq
      %v2137 = vshrl.u32 %v2136, 7
      %v2138 = vsub.s32 %v2135, %v2137
      %v2139 = vrot.slane %v2123, %v2138
      %v2141 = vunpack.c.l.s4 1966171168
      %v2142 = vunpack.c.0.s8 %v2141
      %v2143 = vlaneseq
      %v2144 = vshrl.u32 %v2143, 7
      %v2145 = vsub.s32 %v2142, %v2144
      %v2146 = vrot.slane %v2132, %v2145
      %v2147 = vcombine.high %v2139, %v2139
      %v2148 = vcombine.high %v2146, %v2146
      %v2150 = vunpack.c.l.s4 1966171168
      %v2151 = vunpack.c.0.s8 %v2150
      %v2152 = vlaneseq
      %v2153 = vshrl.u32 %v2152, 7
      %v2154 = vsub.s32 %v2151, %v2153
      %v2155 = vrot.slane %v2139, %v2154
      %v2157 = vunpack.c.l.s4 1966171168
      %v2158 = vunpack.c.0.s8 %v2157
      %v2159 = vlaneseq
      %v2160 = vshrl.u32 %v2159, 7
      %v2161 = vsub.s32 %v2158, %v2160
      %v2162 = vrot.slane %v2146, %v2161
      %v2164 = vunpack.c.l.s4 1966171168
      %v2165 = vunpack.c.0.s8 %v2164
      %v2166 = vlaneseq
      %v2167 = vshrl.u32 %v2166, 7
      %v2168 = vsub.s32 %v2165, %v2167
      %v2169 = vrot.slane %v2147, %v2168
      %v2171 = vunpack.c.l.s4 1966171168
      %v2172 = vunpack.c.0.s8 %v2171
      %v2173 = vlaneseq
      %v2174 = vshrl.u32 %v2173, 7
      %v2175 = vsub.s32 %v2172, %v2174
      %v2176 = vrot.slane %v2148, %v2175
      %v2177 = vcombine.high %v2155, %v2155
      %v2178 = vcombine.high %v2162, %v2162
      %v2179 = vcombine.high %v2169, %v2169
      %v2180 = vcombine.high %v2176, %v2176
      %v2181 = vcombine.high %v2125, %v2125
      %v2183 = vunpack.c.l.s4 1966171168
      %v2184 = vunpack.c.0.s8 %v2183
      %v2185 = vlaneseq
      %v2186 = vshrl.u32 %v2185, 7
      %v2187 = vsub.s32 %v2184, %v2186
      %v2188 = vrot.slane %v2125, %v2187
      %v2190 = vunpack.c.l.s4 1966171168
      %v2191 = vunpack.c.0.s8 %v2190
      %v2192 = vlaneseq
      %v2193 = vshrl.u32 %v2192, 7
      %v2194 = vsub.s32 %v2191, %v2193
      %v2195 = vrot.slane %v2181, %v2194
      %v2196 = vcombine.high %v2188, %v2188
      %v2197 = vcombine.high %v2195, %v2195
      %v2199 = vunpack.c.l.s4 1966171168
      %v2200 = vunpack.c.0.s8 %v2199
      %v2201 = vlaneseq
      %v2202 = vshrl.u32 %v2201, 7
      %v2203 = vsub.s32 %v2200, %v2202
      %v2204 = vrot.slane %v2188, %v2203
      %v2206 = vunpack.c.l.s4 1966171168
      %v2207 = vunpack.c.0.s8 %v2206
      %v2208 = vlaneseq
      %v2209 = vshrl.u32 %v2208, 7
      %v2210 = vsub.s32 %v2207, %v2209
      %v2211 = vrot.slane %v2195, %v2210
      %v2213 = vunpack.c.l.s4 1966171168
      %v2214 = vunpack.c.0.s8 %v2213
      %v2215 = vlaneseq
      %v2216 = vshrl.u32 %v2215, 7
      %v2217 = vsub.s32 %v2214, %v2216
      %v2218 = vrot.slane %v2196, %v2217
      %v2220 = vunpack.c.l.s4 1966171168
      %v2221 = vunpack.c.0.s8 %v2220
      %v2222 = vlaneseq
      %v2223 = vshrl.u32 %v2222, 7
      %v2224 = vsub.s32 %v2221, %v2223
      %v2225 = vrot.slane %v2197, %v2224
      %v2226 = vcombine.high %v2204, %v2204
      %v2227 = vcombine.high %v2211, %v2211
      %v2228 = vcombine.high %v2218, %v2218
      %v2229 = vcombine.high %v2225, %v2225
      %v2231 = vunpack.c.l.s4 1966171168
      %v2232 = vunpack.c.0.s8 %v2231
      %v2233 = vlaneseq
      %v2234 = vshrl.u32 %v2233, 7
      %v2235 = vsub.s32 %v2232, %v2234
      %v2236 = vrot.slane %v2127, %v2235
      %v2237 = vcombine.high %v2236, %v2236
      %v2239 = vunpack.c.l.s4 1966171168
      %v2240 = vunpack.c.0.s8 %v2239
      %v2241 = vlaneseq
      %v2242 = vshrl.u32 %v2241, 7
      %v2243 = vsub.s32 %v2240, %v2242
      %v2244 = vrot.slane %v2236, %v2243
      %v2246 = vunpack.c.l.s4 1966171168
      %v2247 = vunpack.c.0.s8 %v2246
      %v2248 = vlaneseq
      %v2249 = vshrl.u32 %v2248, 7
      %v2250 = vsub.s32 %v2247, %v2249
      %v2251 = vrot.slane %v2237, %v2250
      %v2255 = vcombine.high %v2124, %v2124
      %v2257 = vunpack.c.l.s4 1966171168
      %v2258 = vunpack.c.0.s8 %v2257
      %v2259 = vlaneseq
      %v2260 = vshrl.u32 %v2259, 7
      %v2261 = vsub.s32 %v2258, %v2260
      %v2262 = vrot.slane %v2124, %v2261
      %v2264 = vunpack.c.l.s4 1966171168
      %v2265 = vunpack.c.0.s8 %v2264
      %v2266 = vlaneseq
      %v2267 = vshrl.u32 %v2266, 7
      %v2268 = vsub.s32 %v2265, %v2267
      %v2269 = vrot.slane %v2255, %v2268
      %v2270 = vcombine.high %v2262, %v2262
      %v2271 = vcombine.high %v2269, %v2269
      %v2273 = vunpack.c.l.s4 1966171168
      %v2274 = vunpack.c.0.s8 %v2273
      %v2275 = vlaneseq
      %v2276 = vshrl.u32 %v2275, 7
      %v2277 = vsub.s32 %v2274, %v2276
      %v2278 = vrot.slane %v2262, %v2277
      %v2280 = vunpack.c.l.s4 1966171168
      %v2281 = vunpack.c.0.s8 %v2280
      %v2282 = vlaneseq
      %v2283 = vshrl.u32 %v2282, 7
      %v2284 = vsub.s32 %v2281, %v2283
      %v2285 = vrot.slane %v2269, %v2284
      %v2287 = vunpack.c.l.s4 1966171168
      %v2288 = vunpack.c.0.s8 %v2287
      %v2289 = vlaneseq
      %v2290 = vshrl.u32 %v2289, 7
      %v2291 = vsub.s32 %v2288, %v2290
      %v2292 = vrot.slane %v2270, %v2291
      %v2294 = vunpack.c.l.s4 1966171168
      %v2295 = vunpack.c.0.s8 %v2294
      %v2296 = vlaneseq
      %v2297 = vshrl.u32 %v2296, 7
      %v2298 = vsub.s32 %v2295, %v2297
      %v2299 = vrot.slane %v2271, %v2298
      %v2300 = vcombine.high %v2278, %v2278
      %v2301 = vcombine.high %v2285, %v2285
      %v2302 = vcombine.high %v2292, %v2292
      %v2303 = vcombine.high %v2299, %v2299
      %v2304 = vcombine.high %v2126, %v2126
      %v2306 = vunpack.c.l.s4 1966171168
      %v2307 = vunpack.c.0.s8 %v2306
      %v2308 = vlaneseq
      %v2309 = vshrl.u32 %v2308, 7
      %v2310 = vsub.s32 %v2307, %v2309
      %v2311 = vrot.slane %v2126, %v2310
      %v2313 = vunpack.c.l.s4 1966171168
      %v2314 = vunpack.c.0.s8 %v2313
      %v2315 = vlaneseq
      %v2316 = vshrl.u32 %v2315, 7
      %v2317 = vsub.s32 %v2314, %v2316
      %v2318 = vrot.slane %v2304, %v2317
      %v2319 = vcombine.high %v2311, %v2311
      %v2320 = vcombine.high %v2318, %v2318
      %v2322 = vunpack.c.l.s4 1966171168
      %v2323 = vunpack.c.0.s8 %v2322
      %v2324 = vlaneseq
      %v2325 = vshrl.u32 %v2324, 7
      %v2326 = vsub.s32 %v2323, %v2325
      %v2327 = vrot.slane %v2311, %v2326
      %v2329 = vunpack.c.l.s4 1966171168
      %v2330 = vunpack.c.0.s8 %v2329
      %v2331 = vlaneseq
      %v2332 = vshrl.u32 %v2331, 7
      %v2333 = vsub.s32 %v2330, %v2332
      %v2334 = vrot.slane %v2318, %v2333
      %v2336 = vunpack.c.l.s4 1966171168
      %v2337 = vunpack.c.0.s8 %v2336
      %v2338 = vlaneseq
      %v2339 = vshrl.u32 %v2338, 7
      %v2340 = vsub.s32 %v2337, %v2339
      %v2341 = vrot.slane %v2319, %v2340
      %v2343 = vunpack.c.l.s4 1966171168
      %v2344 = vunpack.c.0.s8 %v2343
      %v2345 = vlaneseq
      %v2346 = vshrl.u32 %v2345, 7
      %v2347 = vsub.s32 %v2344, %v2346
      %v2348 = vrot.slane %v2320, %v2347
      %v2349 = vcombine.high %v2327, %v2327
      %v2350 = vcombine.high %v2334, %v2334
      %v2351 = vcombine.high %v2341, %v2341
      %v2352 = vcombine.high %v2348, %v2348
      %v2354 = vunpack.c.l.s4 1966171168
      %v2355 = vunpack.c.0.s8 %v2354
      %v2356 = vlaneseq
      %v2357 = vshrl.u32 %v2356, 7
      %v2358 = vsub.s32 %v2355, %v2357
      %v2359 = vrot.slane %v2128, %v2358
      %v2360 = vcombine.high %v2359, %v2359
      %v2362 = vunpack.c.l.s4 1966171168
      %v2363 = vunpack.c.0.s8 %v2362
      %v2364 = vlaneseq
      %v2365 = vshrl.u32 %v2364, 7
      %v2366 = vsub.s32 %v2363, %v2365
      %v2367 = vrot.slane %v2359, %v2366
      %v2369 = vunpack.c.l.s4 1966171168
      %v2370 = vunpack.c.0.s8 %v2369
      %v2371 = vlaneseq
      %v2372 = vshrl.u32 %v2371, 7
      %v2373 = vsub.s32 %v2370, %v2372
      %v2374 = vrot.slane %v2360, %v2373
      %v2375 = vcombine.low %v2155, %v2169
      %v2377 = vunpack.c.l.s4 1966171168
      %v2378 = vunpack.c.0.s8 %v2377
      %v2379 = vlaneseq
      %v2380 = vshrl.u32 %v2379, 7
      %v2381 = vsub.s32 %v2378, %v2380
      %v2382 = vrot.slane %v2375, %v2381
      %v2384 = vunpack.c.l.s4 1966171168
      %v2385 = vunpack.c.0.s8 %v2384
      %v2386 = vlaneseq
      %v2387 = vshrl.u32 %v2386, 7
      %v2388 = vsub.s32 %v2385, %v2387
      %v2389 = vrot.slane %v2382, %v2388
      %v2390 = vcombine.low %v2179, %v2162
      %v2392 = vunpack.c.l.s4 1966171168
      %v2393 = vunpack.c.0.s8 %v2392
      %v2394 = vlaneseq
      %v2395 = vshrl.u32 %v2394, 7
      %v2396 = vsub.s32 %v2393, %v2395
      %v2397 = vrot.slane %v2390, %v2396
      %v2399 = vunpack.c.l.s4 1966171168
      %v2400 = vunpack.c.0.s8 %v2399
      %v2401 = vlaneseq
      %v2402 = vshrl.u32 %v2401, 7
      %v2403 = vsub.s32 %v2400, %v2402
      %v2404 = vrot.slane %v2397, %v2403
      %v2405 = vcombine.low %v2178, %v2180
      %v2407 = vunpack.c.l.s4 1966171168
      %v2408 = vunpack.c.0.s8 %v2407
      %v2409 = vlaneseq
      %v2410 = vshrl.u32 %v2409, 7
      %v2411 = vsub.s32 %v2408, %v2410
      %v2412 = vrot.slane %v2405, %v2411
      %v2414 = vunpack.c.l.s4 1966171168
      %v2415 = vunpack.c.0.s8 %v2414
      %v2416 = vlaneseq
      %v2417 = vshrl.u32 %v2416, 7
      %v2418 = vsub.s32 %v2415, %v2417
      %v2419 = vrot.slane %v2412, %v2418
      %v2420 = vcombine.low %v2218, %v2226
      %v2422 = vunpack.c.l.s4 1966171168
      %v2423 = vunpack.c.0.s8 %v2422
      %v2424 = vlaneseq
      %v2425 = vshrl.u32 %v2424, 7
      %v2426 = vsub.s32 %v2423, %v2425
      %v2427 = vrot.slane %v2420, %v2426
      %v2429 = vunpack.c.l.s4 1966171168
      %v2430 = vunpack.c.0.s8 %v2429
      %v2431 = vlaneseq
      %v2432 = vshrl.u32 %v2431, 7
      %v2433 = vsub.s32 %v2430, %v2432
      %v2434 = vrot.slane %v2427, %v2433
      %v2435 = vcombine.low %v2211, %v2225
      %v2437 = vunpack.c.l.s4 1966171168
      %v2438 = vunpack.c.0.s8 %v2437
      %v2439 = vlaneseq
      %v2440 = vshrl.u32 %v2439, 7
      %v2441 = vsub.s32 %v2438, %v2440
      %v2442 = vrot.slane %v2435, %v2441
      %v2444 = vunpack.c.l.s4 1966171168
      %v2445 = vunpack.c.0.s8 %v2444
      %v2446 = vlaneseq
      %v2447 = vshrl.u32 %v2446, 7
      %v2448 = vsub.s32 %v2445, %v2447
      %v2449 = vrot.slane %v2442, %v2448
      %v2450 = vcombine.low %v2229, %v2244
      %v2452 = vunpack.c.l.s4 1966171168
      %v2453 = vunpack.c.0.s8 %v2452
      %v2454 = vlaneseq
      %v2455 = vshrl.u32 %v2454, 7
      %v2456 = vsub.s32 %v2453, %v2455
      %v2457 = vrot.slane %v2450, %v2456
      %v2459 = vunpack.c.l.s4 1966171168
      %v2460 = vunpack.c.0.s8 %v2459
      %v2461 = vlaneseq
      %v2462 = vshrl.u32 %v2461, 7
      %v2463 = vsub.s32 %v2460, %v2462
      %v2464 = vrot.slane %v2457, %v2463
      %v2466 = vunpack.c.l.s4 1966171168
      %v2467 = vunpack.c.0.s8 %v2466
      %v2468 = vlaneseq
      %v2469 = vshrl.u32 %v2468, 7
      %v2470 = vsub.s32 %v2467, %v2469
      %v2471 = vrot.slane %v2177, %v2470
      %v2472 = vcombine.low %v2382, %v2471
      %v2474 = vunpack.c.l.s4 1966171168
      %v2475 = vunpack.c.0.s8 %v2474
      %v2476 = vlaneseq
      %v2477 = vshrl.u32 %v2476, 7
      %v2478 = vsub.s32 %v2475, %v2477
      %v2479 = vrot.slane %v2472, %v2478
      %v2481 = vunpack.c.l.s4 1966171168
      %v2482 = vunpack.c.0.s8 %v2481
      %v2483 = vlaneseq
      %v2484 = vshrl.u32 %v2483, 7
      %v2485 = vsub.s32 %v2482, %v2484
      %v2486 = vrot.slane %v2176, %v2485
      %v2487 = vcombine.low %v2397, %v2486
      %v2489 = vunpack.c.l.s4 1966171168
      %v2490 = vunpack.c.0.s8 %v2489
      %v2491 = vlaneseq
      %v2492 = vshrl.u32 %v2491, 7
      %v2493 = vsub.s32 %v2490, %v2492
      %v2494 = vrot.slane %v2487, %v2493
      %v2496 = vunpack.c.l.s4 1966171168
      %v2497 = vunpack.c.0.s8 %v2496
      %v2498 = vlaneseq
      %v2499 = vshrl.u32 %v2498, 7
      %v2500 = vsub.s32 %v2497, %v2499
      %v2501 = vrot.slane %v2204, %v2500
      %v2502 = vcombine.low %v2412, %v2501
      %v2504 = vunpack.c.l.s4 1966171168
      %v2505 = vunpack.c.0.s8 %v2504
      %v2506 = vlaneseq
      %v2507 = vshrl.u32 %v2506, 7
      %v2508 = vsub.s32 %v2505, %v2507
      %v2509 = vrot.slane %v2502, %v2508
      %v2511 = vunpack.c.l.s4 1966171168
      %v2512 = vunpack.c.0.s8 %v2511
      %v2513 = vlaneseq
      %v2514 = vshrl.u32 %v2513, 7
      %v2515 = vsub.s32 %v2512, %v2514
      %v2516 = vrot.slane %v2228, %v2515
      %v2517 = vcombine.low %v2427, %v2516
      %v2519 = vunpack.c.l.s4 1966171168
      %v2520 = vunpack.c.0.s8 %v2519
      %v2521 = vlaneseq
      %v2522 = vshrl.u32 %v2521, 7
      %v2523 = vsub.s32 %v2520, %v2522
      %v2524 = vrot.slane %v2517, %v2523
      %v2526 = vunpack.c.l.s4 1966171168
      %v2527 = vunpack.c.0.s8 %v2526
      %v2528 = vlaneseq
      %v2529 = vshrl.u32 %v2528, 7
      %v2530 = vsub.s32 %v2527, %v2529
      %v2531 = vrot.slane %v2227, %v2530
      %v2532 = vcombine.low %v2442, %v2531
      %v2534 = vunpack.c.l.s4 1966171168
      %v2535 = vunpack.c.0.s8 %v2534
      %v2536 = vlaneseq
      %v2537 = vshrl.u32 %v2536, 7
      %v2538 = vsub.s32 %v2535, %v2537
      %v2539 = vrot.slane %v2532, %v2538
      %v2541 = vunpack.c.l.s4 1966171168
      %v2542 = vunpack.c.0.s8 %v2541
      %v2543 = vlaneseq
      %v2544 = vshrl.u32 %v2543, 7
      %v2545 = vsub.s32 %v2542, %v2544
      %v2546 = vrot.slane %v2251, %v2545
      %v2547 = vcombine.low %v2457, %v2546
      %v2549 = vunpack.c.l.s4 1966171168
      %v2550 = vunpack.c.0.s8 %v2549
      %v2551 = vlaneseq
      %v2552 = vshrl.u32 %v2551, 7
      %v2553 = vsub.s32 %v2550, %v2552
      %v2554 = vrot.slane %v2547, %v2553
      %v2556 = vshrl.u32 %v2479, 16
      %v2558 = vshll.u32 %v2479, 16
      %v2560 = vrot.slane %v2558, 1
      %v2561 = vor.u32 %v2556, %v2560
      %v2563 = vshrl.u32 %v2494, 16
      %v2565 = vshll.u32 %v2494, 16
      %v2567 = vrot.slane %v2565, 1
      %v2568 = vor.u32 %v2563, %v2567
      %v2570 = vshrl.u32 %v2509, 16
      %v2572 = vshll.u32 %v2509, 16
      %v2574 = vrot.slane %v2572, 1
      %v2575 = vor.u32 %v2570, %v2574
      %v2577 = vshrl.u32 %v2524, 16
      %v2579 = vshll.u32 %v2524, 16
      %v2581 = vrot.slane %v2579, 1
      %v2582 = vor.u32 %v2577, %v2581
      %v2584 = vshrl.u32 %v2539, 16
      %v2586 = vshll.u32 %v2539, 16
      %v2588 = vrot.slane %v2586, 1
      %v2589 = vor.u32 %v2584, %v2588
      %v2591 = vshrl.u32 %v2554, 16
      %v2593 = vshll.u32 %v2554, 16
      %v2595 = vrot.slane %v2593, 1
      %v2596 = vor.u32 %v2591, %v2595
      %v2597 = vcombine.low %v2169, %v2177
      %v2599 = vunpack.c.l.s4 1966171168
      %v2600 = vunpack.c.0.s8 %v2599
      %v2601 = vlaneseq
      %v2602 = vshrl.u32 %v2601, 7
      %v2603 = vsub.s32 %v2600, %v2602
      %v2604 = vrot.slane %v2597, %v2603
      %v2606 = vunpack.c.l.s4 1966171168
      %v2607 = vunpack.c.0.s8 %v2606
      %v2608 = vlaneseq
      %v2609 = vshrl.u32 %v2608, 7
      %v2610 = vsub.s32 %v2607, %v2609
      %v2611 = vrot.slane %v2604, %v2610
      %v2612 = vcombine.low %v2162, %v2176
      %v2614 = vunpack.c.l.s4 1966171168
      %v2615 = vunpack.c.0.s8 %v2614
      %v2616 = vlaneseq
      %v2617 = vshrl.u32 %v2616, 7
      %v2618 = vsub.s32 %v2615, %v2617
      %v2619 = vrot.slane %v2612, %v2618
      %v2621 = vunpack.c.l.s4 1966171168
      %v2622 = vunpack.c.0.s8 %v2621
      %v2623 = vlaneseq
      %v2624 = vshrl.u32 %v2623, 7
      %v2625 = vsub.s32 %v2622, %v2624
      %v2626 = vrot.slane %v2619, %v2625
      %v2627 = vcombine.low %v2180, %v2204
      %v2629 = vunpack.c.l.s4 1966171168
      %v2630 = vunpack.c.0.s8 %v2629
      %v2631 = vlaneseq
      %v2632 = vshrl.u32 %v2631, 7
      %v2633 = vsub.s32 %v2630, %v2632
      %v2634 = vrot.slane %v2627, %v2633
      %v2636 = vunpack.c.l.s4 1966171168
      %v2637 = vunpack.c.0.s8 %v2636
      %v2638 = vlaneseq
      %v2639 = vshrl.u32 %v2638, 7
      %v2640 = vsub.s32 %v2637, %v2639
      %v2641 = vrot.slane %v2634, %v2640
      %v2642 = vcombine.low %v2226, %v2228
      %v2644 = vunpack.c.l.s4 1966171168
      %v2645 = vunpack.c.0.s8 %v2644
      %v2646 = vlaneseq
      %v2647 = vshrl.u32 %v2646, 7
      %v2648 = vsub.s32 %v2645, %v2647
      %v2649 = vrot.slane %v2642, %v2648
      %v2651 = vunpack.c.l.s4 1966171168
      %v2652 = vunpack.c.0.s8 %v2651
      %v2653 = vlaneseq
      %v2654 = vshrl.u32 %v2653, 7
      %v2655 = vsub.s32 %v2652, %v2654
      %v2656 = vrot.slane %v2649, %v2655
      %v2657 = vcombine.low %v2225, %v2227
      %v2659 = vunpack.c.l.s4 1966171168
      %v2660 = vunpack.c.0.s8 %v2659
      %v2661 = vlaneseq
      %v2662 = vshrl.u32 %v2661, 7
      %v2663 = vsub.s32 %v2660, %v2662
      %v2664 = vrot.slane %v2657, %v2663
      %v2666 = vunpack.c.l.s4 1966171168
      %v2667 = vunpack.c.0.s8 %v2666
      %v2668 = vlaneseq
      %v2669 = vshrl.u32 %v2668, 7
      %v2670 = vsub.s32 %v2667, %v2669
      %v2671 = vrot.slane %v2664, %v2670
      %v2672 = vcombine.low %v2244, %v2251
      %v2674 = vunpack.c.l.s4 1966171168
      %v2675 = vunpack.c.0.s8 %v2674
      %v2676 = vlaneseq
      %v2677 = vshrl.u32 %v2676, 7
      %v2678 = vsub.s32 %v2675, %v2677
      %v2679 = vrot.slane %v2672, %v2678
      %v2681 = vunpack.c.l.s4 1966171168
      %v2682 = vunpack.c.0.s8 %v2681
      %v2683 = vlaneseq
      %v2684 = vshrl.u32 %v2683, 7
      %v2685 = vsub.s32 %v2682, %v2684
      %v2686 = vrot.slane %v2679, %v2685
      %v2687 = vcombine.low %v2389, %v2561
      %v2689 = vunpack.c.l.s4 1983009808
      %v2690 = vunpack.c.0.s8 %v2689
      %v2691 = vlaneseq
      %v2692 = vshrl.u32 %v2691, 7
      %v2693 = vsub.s32 %v2690, %v2692
      %v2694 = vrot.slane %v2687, %v2693
      %v2696 = vunpack.c.l.s4 1983009808
      %v2697 = vunpack.c.0.s8 %v2696
      %v2698 = vlaneseq
      %v2699 = vshrl.u32 %v2698, 7
      %v2700 = vsub.s32 %v2697, %v2699
      %v2701 = vrot.slane %v2611, %v2700
      %v2702 = vcombine.low %v2694, %v2701
      %v2703 = vcombine.low %v2404, %v2568
      %v2705 = vunpack.c.l.s4 1983009808
      %v2706 = vunpack.c.0.s8 %v2705
      %v2707 = vlaneseq
      %v2708 = vshrl.u32 %v2707, 7
      %v2709 = vsub.s32 %v2706, %v2708
      %v2710 = vrot.slane %v2703, %v2709
      %v2712 = vunpack.c.l.s4 1983009808
      %v2713 = vunpack.c.0.s8 %v2712
      %v2714 = vlaneseq
      %v2715 = vshrl.u32 %v2714, 7
      %v2716 = vsub.s32 %v2713, %v2715
      %v2717 = vrot.slane %v2626, %v2716
      %v2718 = vcombine.low %v2710, %v2717
      %v2719 = vcombine.low %v2419, %v2575
      %v2721 = vunpack.c.l.s4 1983009808
      %v2722 = vunpack.c.0.s8 %v2721
      %v2723 = vlaneseq
      %v2724 = vshrl.u32 %v2723, 7
      %v2725 = vsub.s32 %v2722, %v2724
      %v2726 = vrot.slane %v2719, %v2725
      %v2728 = vunpack.c.l.s4 1983009808
      %v2729 = vunpack.c.0.s8 %v2728
      %v2730 = vlaneseq
      %v2731 = vshrl.u32 %v2730, 7
      %v2732 = vsub.s32 %v2729, %v2731
      %v2733 = vrot.slane %v2641, %v2732
      %v2734 = vcombine.low %v2726, %v2733
      %v2735 = vcombine.low %v2434, %v2582
      %v2737 = vunpack.c.l.s4 1983009808
      %v2738 = vunpack.c.0.s8 %v2737
      %v2739 = vlaneseq
      %v2740 = vshrl.u32 %v2739, 7
      %v2741 = vsub.s32 %v2738, %v2740
      %v2742 = vrot.slane %v2735, %v2741
      %v2744 = vunpack.c.l.s4 1983009808
      %v2745 = vunpack.c.0.s8 %v2744
      %v2746 = vlaneseq
      %v2747 = vshrl.u32 %v2746, 7
      %v2748 = vsub.s32 %v2745, %v2747
      %v2749 = vrot.slane %v2656, %v2748
      %v2750 = vcombine.low %v2742, %v2749
      %v2751 = vld [vmem:[%s5] sm:$0xf]
      %v2752 = vld [vmem:[%s5 + $0x4] sm:$0xf]
      %v2753 = vld [vmem:[%s5 + $0x8] sm:$0xf]
      %v2754 = vld [vmem:[%s5 + $0xc] sm:$0xf]
      %v2755 = vld [vmem:[%s5 + $0x10] sm:$0xf]
      %v2756 = vld [vmem:[%s5 + $0x14] sm:$0xf]
      %v2757 = vld [vmem:[%s5 + $0x18] sm:$0xf]
      %v2758 = vld [vmem:[%s5 + $0x1c] sm:$0xf]
      %v2759 = vld [vmem:[%s5 + $0x20] sm:$0xf]
      %v2760 = vld [vmem:[%s5 + $0x24] sm:$0xf]
      %v2761 = vld [vmem:[%s5 + $0x28] sm:$0xf]
      %v2762 = vld [vmem:[%s5 + $0x2c] sm:$0xf]
      %v2763 = vld [vmem:[%s5 + $0x30] sm:$0xf]
      %v2764 = vld [vmem:[%s5 + $0x34] sm:$0xf]
      %v2765 = vld [vmem:[%s5 + $0x38] sm:$0xf]
      %v2766 = vld [vmem:[%s5 + $0x3c] sm:$0xf]
      %v2767 = vld [vmem:[%s5 + $0x40] sm:$0xf]
      %v2768 = vld [vmem:[%s5 + $0x44] sm:$0xf]
      %v2769 = vld [vmem:[%s5 + $0x48] sm:$0xf]
      %v2770 = vld [vmem:[%s5 + $0x4c] sm:$0xf]
      %v2771 = vld [vmem:[%s5 + $0x50] sm:$0xf]
      %v2772 = vld [vmem:[%s5 + $0x54] sm:$0xf]
      %v2773 = vld [vmem:[%s5 + $0x58] sm:$0xf]
      %v2774 = vld [vmem:[%s5 + $0x5c] sm:$0xf]
      %v2775 = vld [vmem:[%s5 + $0x60] sm:$0xf]
      %v2776 = vld [vmem:[%s5 + $0x64] sm:$0xf]
      %v2777 = vld [vmem:[%s5 + $0x68] sm:$0xf]
      %v2778 = vld [vmem:[%s5 + $0x6c] sm:$0xf]
      %v2779 = vld [vmem:[%s5 + $0x70] sm:$0xf]
      %v2780 = vld [vmem:[%s5 + $0x74] sm:$0xf]
      %v2781 = vld [vmem:[%s5 + $0x78] sm:$0xf]
      %v2782 = vld [vmem:[%s5 + $0x7c] sm:$0xf]
      %v2783 = vld [vmem:[%s5 + $0x80] sm:$0xf]
      %v2784 = vld [vmem:[%s5 + $0x84] sm:$0xf]
      %v2785 = vld [vmem:[%s5 + $0x88] sm:$0xf]
      %v2786 = vld [vmem:[%s5 + $0x8c] sm:$0xf]
      %v2787 = vld [vmem:[%s5 + $0x90] sm:$0xf]
      %v2788 = vld [vmem:[%s5 + $0x94] sm:$0xf]
      %v2789 = vld [vmem:[%s5 + $0x98] sm:$0xf]
      %v2790 = vld [vmem:[%s5 + $0x9c] sm:$0xf]
      %v2791 = vld [vmem:[%s5 + $0xa0] sm:$0xf]
      %v2792 = vld [vmem:[%s5 + $0xa4] sm:$0xf]
      %v2793 = vld [vmem:[%s5 + $0xa8] sm:$0xf]
      %v2794 = vld [vmem:[%s5 + $0xac] sm:$0xf]
      %v2795 = vld [vmem:[%s5 + $0xb0] sm:$0xf]
      %v2796 = vld [vmem:[%s5 + $0xb4] sm:$0xf]
      %v2797 = vld [vmem:[%s5 + $0xb8] sm:$0xf]
      %v2798 = vld [vmem:[%s5 + $0xbc] sm:$0xf]
      %v2799 = vld [vmem:[%s6] sm:$0x1]
      %v2801 = vlaneseq
      %v2802 = vshrl.u32 %v2801, 7
      %v2803 = vsub.s32 0, %v2802
      %v2804 = vrot.slane %v2799, %v2803
      %v2806 = vcombine.low %v2702, %v2718
      %v2807 = vcombine.high %v2702, %v2718
      %v2808 = vcombine.low %v2734, %v2750
      %v2809 = vcombine.high %v2734, %v2750
      %v2811 = vunpack.c.l.s4 1983009808
      %v2812 = vunpack.c.0.s8 %v2811
      %v2813 = vlaneseq
      %v2814 = vshrl.u32 %v2813, 7
      %v2815 = vsub.s32 %v2812, %v2814
      %v2816 = vrot.slane %v2806, %v2815
      %v2818 = vunpack.c.l.s4 1983009808
      %v2819 = vunpack.c.0.s8 %v2818
      %v2820 = vlaneseq
      %v2821 = vshrl.u32 %v2820, 7
      %v2822 = vsub.s32 %v2819, %v2821
      %v2823 = vrot.slane %v2807, %v2822
      %v2825 = vunpack.c.l.s4 1983009808
      %v2826 = vunpack.c.0.s8 %v2825
      %v2827 = vlaneseq
      %v2828 = vshrl.u32 %v2827, 7
      %v2829 = vsub.s32 %v2826, %v2828
      %v2830 = vrot.slane %v2808, %v2829
      %v2832 = vunpack.c.l.s4 1983009808
      %v2833 = vunpack.c.0.s8 %v2832
      %v2834 = vlaneseq
      %v2835 = vshrl.u32 %v2834, 7
      %v2836 = vsub.s32 %v2833, %v2835
      %v2837 = vrot.slane %v2809, %v2836
      %v2838 = vcombine.low %v2816, %v2830
      %v2839 = vcombine.high %v2816, %v2830
      %v2840 = vcombine.low %v2823, %v2837
      %v2892 = vunpack.c.l.b16 %v2751
      %v2893 = vunpack.c.l.b16 %v2752
      %v2894 = vunpack.c.l.b16 %v2753
      %v2895 = vunpack.c.l.b16 %v2754
      %v2896 = vunpack.c.l.b16 %v2755
      %v2897 = vunpack.c.l.b16 %v2756
      %v2898 = vunpack.c.l.b16 %v2757
      %v2899 = vunpack.c.l.b16 %v2758
      %v2900 = vunpack.c.l.b16 %v2759
      %v2901 = vunpack.c.l.b16 %v2760
      %v2902 = vunpack.c.l.b16 %v2761
      %v2903 = vunpack.c.l.b16 %v2762
      %v2904 = vunpack.c.l.b16 %v2763
      %v2905 = vunpack.c.l.b16 %v2764
      %v2906 = vunpack.c.l.b16 %v2765
      %v2907 = vunpack.c.l.b16 %v2766
      %v2908 = vunpack.c.l.b16 %v2767
      %v2909 = vunpack.c.l.b16 %v2768
      %v2910 = vunpack.c.l.b16 %v2769
      %v2911 = vunpack.c.l.b16 %v2770
      %v2912 = vunpack.c.l.b16 %v2771
      %v2913 = vunpack.c.l.b16 %v2772
      %v2914 = vunpack.c.l.b16 %v2773
      %v2915 = vunpack.c.l.b16 %v2774
      %v2916 = vunpack.c.l.b16 %v2775
      %v2917 = vunpack.c.l.b16 %v2776
      %v2918 = vunpack.c.l.b16 %v2777
      %v2919 = vunpack.c.l.b16 %v2778
      %v2920 = vunpack.c.l.b16 %v2779
      %v2921 = vunpack.c.l.b16 %v2780
      %v2922 = vunpack.c.l.b16 %v2781
      %v2923 = vunpack.c.l.b16 %v2782
      %v2924 = vunpack.c.l.b16 %v2783
      %v2925 = vunpack.c.l.b16 %v2784
      %v2926 = vunpack.c.l.b16 %v2785
      %v2927 = vunpack.c.l.b16 %v2786
      %v2928 = vunpack.c.l.b16 %v2787
      %v2929 = vunpack.c.l.b16 %v2788
      %v2930 = vunpack.c.l.b16 %v2789
      %v2931 = vunpack.c.l.b16 %v2790
      %v2932 = vunpack.c.l.b16 %v2791
      %v2933 = vunpack.c.l.b16 %v2792
      %v2934 = vunpack.c.l.b16 %v2793
      %v2935 = vunpack.c.l.b16 %v2794
      %v2936 = vunpack.c.l.b16 %v2795
      %v2937 = vunpack.c.l.b16 %v2796
      %v2938 = vunpack.c.l.b16 %v2797
      %v2939 = vunpack.c.l.b16 %v2798
      %v2940 = vpack.c.b16 %v2893, %v2892
      %v2941 = vpack.c.b16 %v2895, %v2894
      %v2942 = vpack.c.b16 %v2897, %v2896
      %v2943 = vpack.c.b16 %v2899, %v2898
      %v2944 = vpack.c.b16 %v2901, %v2900
      %v2945 = vpack.c.b16 %v2903, %v2902
      %v2946 = vpack.c.b16 %v2905, %v2904
      %v2947 = vpack.c.b16 %v2907, %v2906
      %v2948 = vpack.c.b16 %v2909, %v2908
      %v2949 = vpack.c.b16 %v2911, %v2910
      %v2950 = vpack.c.b16 %v2913, %v2912
      %v2951 = vpack.c.b16 %v2915, %v2914
      %v2952 = vpack.c.b16 %v2917, %v2916
      %v2953 = vpack.c.b16 %v2919, %v2918
      %v2954 = vpack.c.b16 %v2921, %v2920
      %v2955 = vpack.c.b16 %v2923, %v2922
      %v2956 = vpack.c.b16 %v2925, %v2924
      %v2957 = vpack.c.b16 %v2927, %v2926
      %v2958 = vpack.c.b16 %v2929, %v2928
      %v2959 = vpack.c.b16 %v2931, %v2930
      %v2960 = vpack.c.b16 %v2933, %v2932
      %v2961 = vpack.c.b16 %v2935, %v2934
      %v2962 = vpack.c.b16 %v2937, %v2936
      %v2963 = vpack.c.b16 %v2939, %v2938
      %2988 = vmatprep.subr.bf16.mxu0 0
      %2989 = vmatpush1.bf16.msra.mxu0 %v2940
      %2990 = vmatprep.subr.bf16.mxu0 0
      %2991 = vmatpush1.bf16.msra.mxu0 %v2941
      %2992 = vmatprep.subr.bf16.mxu0 0
      %2993 = vmatpush1.bf16.msra.mxu0 %v2942
      %2994 = vmatprep.subr.bf16.mxu0 0
      %2995 = vmatpush1.bf16.msra.mxu0 %v2943
      %2996 = vmatprep.subr.bf16.mxu0 0
      %2997 = vmatpush1.bf16.msra.mxu0 %v2944
      %2998 = vmatprep.subr.bf16.mxu0 0
      %2999 = vmatpush1.bf16.msra.mxu0 %v2945
      %3000 = vmatprep.subr.bf16.mxu0 0
      %3001 = vmatpush1.bf16.msra.mxu0 %v2946
      %3002 = vmatprep.subr.bf16.mxu0 0
      %3003 = vmatpush1.bf16.msra.mxu0 %v2947
      %3004 = vmatprep.subr.bf16.mxu0 0
      %3005 = vmatpush1.bf16.msra.mxu0 %v2948
      %3006 = vmatprep.subr.bf16.mxu0 0
      %3007 = vmatpush1.bf16.msra.mxu0 %v2949
      %3008 = vmatprep.subr.bf16.mxu0 0
      %3009 = vmatpush1.bf16.msra.mxu0 %v2950
      %3010 = vmatprep.subr.bf16.mxu0 0
      %3011 = vmatpush1.bf16.msra.mxu0 %v2951
      %3012 = vmatprep.subr.bf16.mxu0 0
      %3013 = vmatpush1.bf16.msra.mxu0 %v2952
      %3014 = vmatprep.subr.bf16.mxu0 0
      %3015 = vmatpush1.bf16.msra.mxu0 %v2953
      %3016 = vmatprep.subr.bf16.mxu0 0
      %3017 = vmatpush1.bf16.msra.mxu0 %v2954
      %3018 = vmatprep.subr.bf16.mxu0 0
      %3019 = vmatpush1.bf16.msra.mxu0 %v2955
      %3020 = vmatprep.mubr.bf16.mxu0 %v2839
      %3021 = vmatmul.mubr.bf16.gmra.mrb[0].mxu0 %v2838
      %v3022 = vpop.f32.mrb[0].mxu0
      %v3023 = vadd.f32 %v2804, %v3022
      %v3024 = vpop.f32.mrb[0].mxu0
      %v3025 = vpop.f32.mrb[0].mxu0
      %v3026 = vadd.f32 %v2804, %v3025
      %v3027 = vpop.f32.mrb[0].mxu0
      %3028 = vdwg.mxu0
      %3029 = vmatprep.subr.bf16.mxu0 0
      %3030 = vmatpush1.bf16.msra.mxu0 %v2956
      %3031 = vmatprep.subr.bf16.mxu0 0
      %3032 = vmatpush1.bf16.msra.mxu0 %v2957
      %3033 = vmatprep.subr.bf16.mxu0 0
      %3034 = vmatpush1.bf16.msra.mxu0 %v2958
      %3035 = vmatprep.subr.bf16.mxu0 0
      %3036 = vmatpush1.bf16.msra.mxu0 %v2959
      %3037 = vmatprep.subr.bf16.mxu0 0
      %3038 = vmatpush1.bf16.msra.mxu0 %v2960
      %3039 = vmatprep.subr.bf16.mxu0 0
      %3040 = vmatpush1.bf16.msra.mxu0 %v2961
      %3041 = vmatprep.subr.bf16.mxu0 0
      %3042 = vmatpush1.bf16.msra.mxu0 %v2962
      %3043 = vmatprep.subr.bf16.mxu0 0
      %3044 = vmatpush1.bf16.msra.mxu0 %v2963
      %3045 = vmatprep.subr.bf16.mxu0 0
      %3046 = vmatpush1.bf16.msra.mxu0 0
      %3047 = vmatprep.subr.bf16.mxu0 0
      %3048 = vmatpush1.bf16.msra.mxu0 0
      %3049 = vmatprep.subr.bf16.mxu0 0
      %3050 = vmatpush1.bf16.msra.mxu0 0
      %3051 = vmatprep.subr.bf16.mxu0 0
      %3052 = vmatpush1.bf16.msra.mxu0 0
      %3053 = vmatprep.subr.bf16.mxu0 0
      %3054 = vmatpush1.bf16.msra.mxu0 0
      %3055 = vmatprep.subr.bf16.mxu0 0
      %3056 = vmatpush1.bf16.msra.mxu0 0
      %3057 = vmatprep.subr.bf16.mxu0 0
      %3058 = vmatpush1.bf16.msra.mxu0 0
      %3059 = vmatprep.subr.bf16.mxu0 0
      %3060 = vmatpush1.bf16.msra.mxu0 0
      %3061 = vmatprep.mubr.bf16.mxu0 0
      %3062 = vmatmul.mubr.bf16.gmra.mrb[0].mxu0 %v2840
      %v3063 = vpop.f32.mrb[0].mxu0
      %v3064 = vadd.f32 %v3023, %v3063
      %v3065 = vpop.f32.mrb[0].mxu0
      %v3066 = vpop.f32.mrb[0].mxu0
      %v3067 = vadd.f32 %v3026, %v3066
      %v3068 = vpop.f32.mrb[0].mxu0
      %3069 = vdwg.mxu0
      %v3070 = vcombine.low %v2449, %v2589
      %v3072 = vunpack.c.l.s4 1983009808
      %v3073 = vunpack.c.0.s8 %v3072
      %v3074 = vlaneseq
      %v3075 = vshrl.u32 %v3074, 7
      %v3076 = vsub.s32 %v3073, %v3075
      %v3077 = vrot.slane %v3070, %v3076
      %v3079 = vunpack.c.l.s4 1983009808
      %v3080 = vunpack.c.0.s8 %v3079
      %v3081 = vlaneseq
      %v3082 = vshrl.u32 %v3081, 7
      %v3083 = vsub.s32 %v3080, %v3082
      %v3084 = vrot.slane %v2671, %v3083
      %v3085 = vcombine.low %v3077, %v3084
      %s3086 = scalar_lea.vmem %s5, 192
      %v3087 = vld [vmem:[%s3086] sm:$0xf]
      %v3088 = vld [vmem:[%s3086 + $0x4] sm:$0xf]
      %v3089 = vld [vmem:[%s3086 + $0x8] sm:$0xf]
      %v3090 = vld [vmem:[%s3086 + $0xc] sm:$0xf]
      %v3091 = vld [vmem:[%s3086 + $0x10] sm:$0xf]
      %v3092 = vld [vmem:[%s3086 + $0x14] sm:$0xf]
      %v3093 = vld [vmem:[%s3086 + $0x18] sm:$0xf]
      %v3094 = vld [vmem:[%s3086 + $0x1c] sm:$0xf]
      %v3095 = vld [vmem:[%s3086 + $0x20] sm:$0xf]
      %v3096 = vld [vmem:[%s3086 + $0x24] sm:$0xf]
      %v3097 = vld [vmem:[%s3086 + $0x28] sm:$0xf]
      %v3098 = vld [vmem:[%s3086 + $0x2c] sm:$0xf]
      %v3099 = vld [vmem:[%s3086 + $0x30] sm:$0xf]
      %v3100 = vld [vmem:[%s3086 + $0x34] sm:$0xf]
      %v3101 = vld [vmem:[%s3086 + $0x38] sm:$0xf]
      %v3102 = vld [vmem:[%s3086 + $0x3c] sm:$0xf]
      %v3103 = vld [vmem:[%s3086 + $0x40] sm:$0xf]
      %v3104 = vld [vmem:[%s3086 + $0x44] sm:$0xf]
      %v3105 = vld [vmem:[%s3086 + $0x48] sm:$0xf]
      %v3106 = vld [vmem:[%s3086 + $0x4c] sm:$0xf]
      %v3107 = vld [vmem:[%s3086 + $0x50] sm:$0xf]
      %v3108 = vld [vmem:[%s3086 + $0x54] sm:$0xf]
      %v3109 = vld [vmem:[%s3086 + $0x58] sm:$0xf]
      %v3110 = vld [vmem:[%s3086 + $0x5c] sm:$0xf]
      %v3111 = vld [vmem:[%s3086 + $0x60] sm:$0xf]
      %v3112 = vld [vmem:[%s3086 + $0x64] sm:$0xf]
      %v3113 = vld [vmem:[%s3086 + $0x68] sm:$0xf]
      %v3114 = vld [vmem:[%s3086 + $0x6c] sm:$0xf]
      %v3115 = vld [vmem:[%s3086 + $0x70] sm:$0xf]
      %v3116 = vld [vmem:[%s3086 + $0x74] sm:$0xf]
      %v3117 = vld [vmem:[%s3086 + $0x78] sm:$0xf]
      %v3118 = vld [vmem:[%s3086 + $0x7c] sm:$0xf]
      %v3119 = vld [vmem:[%s3086 + $0x80] sm:$0xf]
      %v3120 = vld [vmem:[%s3086 + $0x84] sm:$0xf]
      %v3121 = vld [vmem:[%s3086 + $0x88] sm:$0xf]
      %v3122 = vld [vmem:[%s3086 + $0x8c] sm:$0xf]
      %v3123 = vld [vmem:[%s3086 + $0x90] sm:$0xf]
      %v3124 = vld [vmem:[%s3086 + $0x94] sm:$0xf]
      %v3125 = vld [vmem:[%s3086 + $0x98] sm:$0xf]
      %v3126 = vld [vmem:[%s3086 + $0x9c] sm:$0xf]
      %v3127 = vld [vmem:[%s3086 + $0xa0] sm:$0xf]
      %v3128 = vld [vmem:[%s3086 + $0xa4] sm:$0xf]
      %v3129 = vld [vmem:[%s3086 + $0xa8] sm:$0xf]
      %v3130 = vld [vmem:[%s3086 + $0xac] sm:$0xf]
      %v3131 = vld [vmem:[%s3086 + $0xb0] sm:$0xf]
      %v3132 = vld [vmem:[%s3086 + $0xb4] sm:$0xf]
      %v3133 = vld [vmem:[%s3086 + $0xb8] sm:$0xf]
      %v3134 = vld [vmem:[%s3086 + $0xbc] sm:$0xf]
      %v3135 = vcombine.low %v2718, %v2734
      %v3136 = vcombine.high %v2718, %v2734
      %v3137 = vcombine.low %v2750, %v3085
      %v3138 = vcombine.high %v2750, %v3085
      %v3140 = vunpack.c.l.s4 1983009808
      %v3141 = vunpack.c.0.s8 %v3140
      %v3142 = vlaneseq
      %v3143 = vshrl.u32 %v3142, 7
      %v3144 = vsub.s32 %v3141, %v3143
      %v3145 = vrot.slane %v3135, %v3144
      %v3147 = vunpack.c.l.s4 1983009808
      %v3148 = vunpack.c.0.s8 %v3147
      %v3149 = vlaneseq
      %v3150 = vshrl.u32 %v3149, 7
      %v3151 = vsub.s32 %v3148, %v3150
      %v3152 = vrot.slane %v3136, %v3151
      %v3154 = vunpack.c.l.s4 1983009808
      %v3155 = vunpack.c.0.s8 %v3154
      %v3156 = vlaneseq
      %v3157 = vshrl.u32 %v3156, 7
      %v3158 = vsub.s32 %v3155, %v3157
      %v3159 = vrot.slane %v3137, %v3158
      %v3161 = vunpack.c.l.s4 1983009808
      %v3162 = vunpack.c.0.s8 %v3161
      %v3163 = vlaneseq
      %v3164 = vshrl.u32 %v3163, 7
      %v3165 = vsub.s32 %v3162, %v3164
      %v3166 = vrot.slane %v3138, %v3165
      %v3167 = vcombine.low %v3145, %v3159
      %v3168 = vcombine.high %v3145, %v3159
      %v3169 = vcombine.low %v3152, %v3166
      %v3221 = vunpack.c.l.b16 %v3087
      %v3222 = vunpack.c.l.b16 %v3088
      %v3223 = vunpack.c.l.b16 %v3089
      %v3224 = vunpack.c.l.b16 %v3090
      %v3225 = vunpack.c.l.b16 %v3091
      %v3226 = vunpack.c.l.b16 %v3092
      %v3227 = vunpack.c.l.b16 %v3093
      %v3228 = vunpack.c.l.b16 %v3094
      %v3229 = vunpack.c.l.b16 %v3095
      %v3230 = vunpack.c.l.b16 %v3096
      %v3231 = vunpack.c.l.b16 %v3097
      %v3232 = vunpack.c.l.b16 %v3098
      %v3233 = vunpack.c.l.b16 %v3099
      %v3234 = vunpack.c.l.b16 %v3100
      %v3235 = vunpack.c.l.b16 %v3101
      %v3236 = vunpack.c.l.b16 %v3102
      %v3237 = vunpack.c.l.b16 %v3103
      %v3238 = vunpack.c.l.b16 %v3104
      %v3239 = vunpack.c.l.b16 %v3105
      %v3240 = vunpack.c.l.b16 %v3106
      %v3241 = vunpack.c.l.b16 %v3107
      %v3242 = vunpack.c.l.b16 %v3108
      %v3243 = vunpack.c.l.b16 %v3109
      %v3244 = vunpack.c.l.b16 %v3110
      %v3245 = vunpack.c.l.b16 %v3111
      %v3246 = vunpack.c.l.b16 %v3112
      %v3247 = vunpack.c.l.b16 %v3113
      %v3248 = vunpack.c.l.b16 %v3114
      %v3249 = vunpack.c.l.b16 %v3115
      %v3250 = vunpack.c.l.b16 %v3116
      %v3251 = vunpack.c.l.b16 %v3117
      %v3252 = vunpack.c.l.b16 %v3118
      %v3253 = vunpack.c.l.b16 %v3119
      %v3254 = vunpack.c.l.b16 %v3120
      %v3255 = vunpack.c.l.b16 %v3121
      %v3256 = vunpack.c.l.b16 %v3122
      %v3257 = vunpack.c.l.b16 %v3123
      %v3258 = vunpack.c.l.b16 %v3124
      %v3259 = vunpack.c.l.b16 %v3125
      %v3260 = vunpack.c.l.b16 %v3126
      %v3261 = vunpack.c.l.b16 %v3127
      %v3262 = vunpack.c.l.b16 %v3128
      %v3263 = vunpack.c.l.b16 %v3129
      %v3264 = vunpack.c.l.b16 %v3130
      %v3265 = vunpack.c.l.b16 %v3131
      %v3266 = vunpack.c.l.b16 %v3132
      %v3267 = vunpack.c.l.b16 %v3133
      %v3268 = vunpack.c.l.b16 %v3134
      %v3269 = vpack.c.b16 %v3222, %v3221
      %v3270 = vpack.c.b16 %v3224, %v3223
      %v3271 = vpack.c.b16 %v3226, %v3225
      %v3272 = vpack.c.b16 %v3228, %v3227
      %v3273 = vpack.c.b16 %v3230, %v3229
      %v3274 = vpack.c.b16 %v3232, %v3231
      %v3275 = vpack.c.b16 %v3234, %v3233
      %v3276 = vpack.c.b16 %v3236, %v3235
      %v3277 = vpack.c.b16 %v3238, %v3237
      %v3278 = vpack.c.b16 %v3240, %v3239
      %v3279 = vpack.c.b16 %v3242, %v3241
      %v3280 = vpack.c.b16 %v3244, %v3243
      %v3281 = vpack.c.b16 %v3246, %v3245
      %v3282 = vpack.c.b16 %v3248, %v3247
      %v3283 = vpack.c.b16 %v3250, %v3249
      %v3284 = vpack.c.b16 %v3252, %v3251
      %v3285 = vpack.c.b16 %v3254, %v3253
      %v3286 = vpack.c.b16 %v3256, %v3255
      %v3287 = vpack.c.b16 %v3258, %v3257
      %v3288 = vpack.c.b16 %v3260, %v3259
      %v3289 = vpack.c.b16 %v3262, %v3261
      %v3290 = vpack.c.b16 %v3264, %v3263
      %v3291 = vpack.c.b16 %v3266, %v3265
      %v3292 = vpack.c.b16 %v3268, %v3267
      %3317 = vmatprep.subr.bf16.mxu0 0
      %3318 = vmatpush1.bf16.msra.mxu0 %v3269
      %3319 = vmatprep.subr.bf16.mxu0 0
      %3320 = vmatpush1.bf16.msra.mxu0 %v3270
      %3321 = vmatprep.subr.bf16.mxu0 0
      %3322 = vmatpush1.bf16.msra.mxu0 %v3271
      %3323 = vmatprep.subr.bf16.mxu0 0
      %3324 = vmatpush1.bf16.msra.mxu0 %v3272
      %3325 = vmatprep.subr.bf16.mxu0 0
      %3326 = vmatpush1.bf16.msra.mxu0 %v3273
      %3327 = vmatprep.subr.bf16.mxu0 0
      %3328 = vmatpush1.bf16.msra.mxu0 %v3274
      %3329 = vmatprep.subr.bf16.mxu0 0
      %3330 = vmatpush1.bf16.msra.mxu0 %v3275
      %3331 = vmatprep.subr.bf16.mxu0 0
      %3332 = vmatpush1.bf16.msra.mxu0 %v3276
      %3333 = vmatprep.subr.bf16.mxu0 0
      %3334 = vmatpush1.bf16.msra.mxu0 %v3277
      %3335 = vmatprep.subr.bf16.mxu0 0
      %3336 = vmatpush1.bf16.msra.mxu0 %v3278
      %3337 = vmatprep.subr.bf16.mxu0 0
      %3338 = vmatpush1.bf16.msra.mxu0 %v3279
      %3339 = vmatprep.subr.bf16.mxu0 0
      %3340 = vmatpush1.bf16.msra.mxu0 %v3280
      %3341 = vmatprep.subr.bf16.mxu0 0
      %3342 = vmatpush1.bf16.msra.mxu0 %v3281
      %3343 = vmatprep.subr.bf16.mxu0 0
      %3344 = vmatpush1.bf16.msra.mxu0 %v3282
      %3345 = vmatprep.subr.bf16.mxu0 0
      %3346 = vmatpush1.bf16.msra.mxu0 %v3283
      %3347 = vmatprep.subr.bf16.mxu0 0
      %3348 = vmatpush1.bf16.msra.mxu0 %v3284
      %3349 = vmatprep.mubr.bf16.mxu0 %v3168
      %3350 = vmatmul.mubr.bf16.gmra.mrb[0].mxu0 %v3167
      %v3351 = vpop.f32.mrb[0].mxu0
      %v3352 = vadd.f32 0.0, %v3351
      %v3353 = vpop.f32.mrb[0].mxu0
      %v3354 = vpop.f32.mrb[0].mxu0
      %v3355 = vadd.f32 0.0, %v3354
      %v3356 = vpop.f32.mrb[0].mxu0
      %3357 = vdwg.mxu0
      %3358 = vmatprep.subr.bf16.mxu0 0
      %3359 = vmatpush1.bf16.msra.mxu0 %v3285
      %3360 = vmatprep.subr.bf16.mxu0 0
      %3361 = vmatpush1.bf16.msra.mxu0 %v3286
      %3362 = vmatprep.subr.bf16.mxu0 0
      %3363 = vmatpush1.bf16.msra.mxu0 %v3287
      %3364 = vmatprep.subr.bf16.mxu0 0
      %3365 = vmatpush1.bf16.msra.mxu0 %v3288
      %3366 = vmatprep.subr.bf16.mxu0 0
      %3367 = vmatpush1.bf16.msra.mxu0 %v3289
      %3368 = vmatprep.subr.bf16.mxu0 0
      %3369 = vmatpush1.bf16.msra.mxu0 %v3290
      %3370 = vmatprep.subr.bf16.mxu0 0
      %3371 = vmatpush1.bf16.msra.mxu0 %v3291
      %3372 = vmatprep.subr.bf16.mxu0 0
      %3373 = vmatpush1.bf16.msra.mxu0 %v3292
      %3374 = vmatprep.subr.bf16.mxu0 0
      %3375 = vmatpush1.bf16.msra.mxu0 0
      %3376 = vmatprep.subr.bf16.mxu0 0
      %3377 = vmatpush1.bf16.msra.mxu0 0
      %3378 = vmatprep.subr.bf16.mxu0 0
      %3379 = vmatpush1.bf16.msra.mxu0 0
      %3380 = vmatprep.subr.bf16.mxu0 0
      %3381 = vmatpush1.bf16.msra.mxu0 0
      %3382 = vmatprep.subr.bf16.mxu0 0
      %3383 = vmatpush1.bf16.msra.mxu0 0
      %3384 = vmatprep.subr.bf16.mxu0 0
      %3385 = vmatpush1.bf16.msra.mxu0 0
      %3386 = vmatprep.subr.bf16.mxu0 0
      %3387 = vmatpush1.bf16.msra.mxu0 0
      %3388 = vmatprep.subr.bf16.mxu0 0
      %3389 = vmatpush1.bf16.msra.mxu0 0
      %3390 = vmatprep.mubr.bf16.mxu0 0
      %3391 = vmatmul.mubr.bf16.gmra.mrb[0].mxu0 %v3169
      %v3392 = vpop.f32.mrb[0].mxu0
      %v3393 = vadd.f32 %v3352, %v3392
      %v3394 = vpop.f32.mrb[0].mxu0
      %v3395 = vpop.f32.mrb[0].mxu0
      %v3396 = vadd.f32 %v3355, %v3395
      %v3397 = vpop.f32.mrb[0].mxu0
      %3398 = vdwg.mxu0
      %v3399 = vadd.f32 %v3064, %v3393
      %v3400 = vadd.f32 %v3067, %v3396
      %v3401 = vcombine.low %v2464, %v2596
      %v3403 = vunpack.c.l.s4 1983009808
      %v3404 = vunpack.c.0.s8 %v3403
      %v3405 = vlaneseq
      %v3406 = vshrl.u32 %v3405, 7
      %v3407 = vsub.s32 %v3404, %v3406
      %v3408 = vrot.slane %v3401, %v3407
      %v3410 = vunpack.c.l.s4 1983009808
      %v3411 = vunpack.c.0.s8 %v3410
      %v3412 = vlaneseq
      %v3413 = vshrl.u32 %v3412, 7
      %v3414 = vsub.s32 %v3411, %v3413
      %v3415 = vrot.slane %v2686, %v3414
      %v3416 = vcombine.low %v3408, %v3415
      %s3417 = scalar_lea.vmem %s5, 384
      %v3418 = vld [vmem:[%s3417] sm:$0xf]
      %v3419 = vld [vmem:[%s3417 + $0x4] sm:$0xf]
      %v3420 = vld [vmem:[%s3417 + $0x8] sm:$0xf]
      %v3421 = vld [vmem:[%s3417 + $0xc] sm:$0xf]
      %v3422 = vld [vmem:[%s3417 + $0x10] sm:$0xf]
      %v3423 = vld [vmem:[%s3417 + $0x14] sm:$0xf]
      %v3424 = vld [vmem:[%s3417 + $0x18] sm:$0xf]
      %v3425 = vld [vmem:[%s3417 + $0x1c] sm:$0xf]
      %v3426 = vld [vmem:[%s3417 + $0x20] sm:$0xf]
      %v3427 = vld [vmem:[%s3417 + $0x24] sm:$0xf]
      %v3428 = vld [vmem:[%s3417 + $0x28] sm:$0xf]
      %v3429 = vld [vmem:[%s3417 + $0x2c] sm:$0xf]
      %v3430 = vld [vmem:[%s3417 + $0x30] sm:$0xf]
      %v3431 = vld [vmem:[%s3417 + $0x34] sm:$0xf]
      %v3432 = vld [vmem:[%s3417 + $0x38] sm:$0xf]
      %v3433 = vld [vmem:[%s3417 + $0x3c] sm:$0xf]
      %v3434 = vld [vmem:[%s3417 + $0x40] sm:$0xf]
      %v3435 = vld [vmem:[%s3417 + $0x44] sm:$0xf]
      %v3436 = vld [vmem:[%s3417 + $0x48] sm:$0xf]
      %v3437 = vld [vmem:[%s3417 + $0x4c] sm:$0xf]
      %v3438 = vld [vmem:[%s3417 + $0x50] sm:$0xf]
      %v3439 = vld [vmem:[%s3417 + $0x54] sm:$0xf]
      %v3440 = vld [vmem:[%s3417 + $0x58] sm:$0xf]
      %v3441 = vld [vmem:[%s3417 + $0x5c] sm:$0xf]
      %v3442 = vld [vmem:[%s3417 + $0x60] sm:$0xf]
      %v3443 = vld [vmem:[%s3417 + $0x64] sm:$0xf]
      %v3444 = vld [vmem:[%s3417 + $0x68] sm:$0xf]
      %v3445 = vld [vmem:[%s3417 + $0x6c] sm:$0xf]
      %v3446 = vld [vmem:[%s3417 + $0x70] sm:$0xf]
      %v3447 = vld [vmem:[%s3417 + $0x74] sm:$0xf]
      %v3448 = vld [vmem:[%s3417 + $0x78] sm:$0xf]
      %v3449 = vld [vmem:[%s3417 + $0x7c] sm:$0xf]
      %v3450 = vld [vmem:[%s3417 + $0x80] sm:$0xf]
      %v3451 = vld [vmem:[%s3417 + $0x84] sm:$0xf]
      %v3452 = vld [vmem:[%s3417 + $0x88] sm:$0xf]
      %v3453 = vld [vmem:[%s3417 + $0x8c] sm:$0xf]
      %v3454 = vld [vmem:[%s3417 + $0x90] sm:$0xf]
      %v3455 = vld [vmem:[%s3417 + $0x94] sm:$0xf]
      %v3456 = vld [vmem:[%s3417 + $0x98] sm:$0xf]
      %v3457 = vld [vmem:[%s3417 + $0x9c] sm:$0xf]
      %v3458 = vld [vmem:[%s3417 + $0xa0] sm:$0xf]
      %v3459 = vld [vmem:[%s3417 + $0xa4] sm:$0xf]
      %v3460 = vld [vmem:[%s3417 + $0xa8] sm:$0xf]
      %v3461 = vld [vmem:[%s3417 + $0xac] sm:$0xf]
      %v3462 = vld [vmem:[%s3417 + $0xb0] sm:$0xf]
      %v3463 = vld [vmem:[%s3417 + $0xb4] sm:$0xf]
      %v3464 = vld [vmem:[%s3417 + $0xb8] sm:$0xf]
      %v3465 = vld [vmem:[%s3417 + $0xbc] sm:$0xf]
      %v3466 = vcombine.low %v3085, %v3416
      %v3467 = vcombine.high %v3085, %v3416
      %v3469 = vunpack.c.l.s4 1983009808
      %v3470 = vunpack.c.0.s8 %v3469
      %v3471 = vlaneseq
      %v3472 = vshrl.u32 %v3471, 7
      %v3473 = vsub.s32 %v3470, %v3472
      %v3474 = vrot.slane %v3466, %v3473
      %v3476 = vunpack.c.l.s4 1983009808
      %v3477 = vunpack.c.0.s8 %v3476
      %v3478 = vlaneseq
      %v3479 = vshrl.u32 %v3478, 7
      %v3480 = vsub.s32 %v3477, %v3479
      %v3481 = vrot.slane %v3467, %v3480
      %v3482 = vcombine.low %v2830, %v3474
      %v3483 = vcombine.high %v2830, %v3474
      %v3484 = vcombine.low %v2837, %v3481
      %v3536 = vunpack.c.l.b16 %v3418
      %v3537 = vunpack.c.l.b16 %v3419
      %v3538 = vunpack.c.l.b16 %v3420
      %v3539 = vunpack.c.l.b16 %v3421
      %v3540 = vunpack.c.l.b16 %v3422
      %v3541 = vunpack.c.l.b16 %v3423
      %v3542 = vunpack.c.l.b16 %v3424
      %v3543 = vunpack.c.l.b16 %v3425
      %v3544 = vunpack.c.l.b16 %v3426
      %v3545 = vunpack.c.l.b16 %v3427
      %v3546 = vunpack.c.l.b16 %v3428
      %v3547 = vunpack.c.l.b16 %v3429
      %v3548 = vunpack.c.l.b16 %v3430
      %v3549 = vunpack.c.l.b16 %v3431
      %v3550 = vunpack.c.l.b16 %v3432
      %v3551 = vunpack.c.l.b16 %v3433
      %v3552 = vunpack.c.l.b16 %v3434
      %v3553 = vunpack.c.l.b16 %v3435
      %v3554 = vunpack.c.l.b16 %v3436
      %v3555 = vunpack.c.l.b16 %v3437
      %v3556 = vunpack.c.l.b16 %v3438
      %v3557 = vunpack.c.l.b16 %v3439
      %v3558 = vunpack.c.l.b16 %v3440
      %v3559 = vunpack.c.l.b16 %v3441
      %v3560 = vunpack.c.l.b16 %v3442
      %v3561 = vunpack.c.l.b16 %v3443
      %v3562 = vunpack.c.l.b16 %v3444
      %v3563 = vunpack.c.l.b16 %v3445
      %v3564 = vunpack.c.l.b16 %v3446
      %v3565 = vunpack.c.l.b16 %v3447
      %v3566 = vunpack.c.l.b16 %v3448
      %v3567 = vunpack.c.l.b16 %v3449
      %v3568 = vunpack.c.l.b16 %v3450
      %v3569 = vunpack.c.l.b16 %v3451
      %v3570 = vunpack.c.l.b16 %v3452
      %v3571 = vunpack.c.l.b16 %v3453
      %v3572 = vunpack.c.l.b16 %v3454
      %v3573 = vunpack.c.l.b16 %v3455
      %v3574 = vunpack.c.l.b16 %v3456
      %v3575 = vunpack.c.l.b16 %v3457
      %v3576 = vunpack.c.l.b16 %v3458
      %v3577 = vunpack.c.l.b16 %v3459
      %v3578 = vunpack.c.l.b16 %v3460
      %v3579 = vunpack.c.l.b16 %v3461
      %v3580 = vunpack.c.l.b16 %v3462
      %v3581 = vunpack.c.l.b16 %v3463
      %v3582 = vunpack.c.l.b16 %v3464
      %v3583 = vunpack.c.l.b16 %v3465
      %v3584 = vpack.c.b16 %v3537, %v3536
      %v3585 = vpack.c.b16 %v3539, %v3538
      %v3586 = vpack.c.b16 %v3541, %v3540
      %v3587 = vpack.c.b16 %v3543, %v3542
      %v3588 = vpack.c.b16 %v3545, %v3544
      %v3589 = vpack.c.b16 %v3547, %v3546
      %v3590 = vpack.c.b16 %v3549, %v3548
      %v3591 = vpack.c.b16 %v3551, %v3550
      %v3592 = vpack.c.b16 %v3553, %v3552
      %v3593 = vpack.c.b16 %v3555, %v3554
      %v3594 = vpack.c.b16 %v3557, %v3556
      %v3595 = vpack.c.b16 %v3559, %v3558
      %v3596 = vpack.c.b16 %v3561, %v3560
      %v3597 = vpack.c.b16 %v3563, %v3562
      %v3598 = vpack.c.b16 %v3565, %v3564
      %v3599 = vpack.c.b16 %v3567, %v3566
      %v3600 = vpack.c.b16 %v3569, %v3568
      %v3601 = vpack.c.b16 %v3571, %v3570
      %v3602 = vpack.c.b16 %v3573, %v3572
      %v3603 = vpack.c.b16 %v3575, %v3574
      %v3604 = vpack.c.b16 %v3577, %v3576
      %v3605 = vpack.c.b16 %v3579, %v3578
      %v3606 = vpack.c.b16 %v3581, %v3580
      %v3607 = vpack.c.b16 %v3583, %v3582
      %3632 = vmatprep.subr.bf16.mxu0 0
      %3633 = vmatpush1.bf16.msra.mxu0 %v3584
      %3634 = vmatprep.subr.bf16.mxu0 0
      %3635 = vmatpush1.bf16.msra.mxu0 %v3585
      %3636 = vmatprep.subr.bf16.mxu0 0
      %3637 = vmatpush1.bf16.msra.mxu0 %v3586
      %3638 = vmatprep.subr.bf16.mxu0 0
      %3639 = vmatpush1.bf16.msra.mxu0 %v3587
      %3640 = vmatprep.subr.bf16.mxu0 0
      %3641 = vmatpush1.bf16.msra.mxu0 %v3588
      %3642 = vmatprep.subr.bf16.mxu0 0
      %3643 = vmatpush1.bf16.msra.mxu0 %v3589
      %3644 = vmatprep.subr.bf16.mxu0 0
      %3645 = vmatpush1.bf16.msra.mxu0 %v3590
      %3646 = vmatprep.subr.bf16.mxu0 0
      %3647 = vmatpush1.bf16.msra.mxu0 %v3591
      %3648 = vmatprep.subr.bf16.mxu0 0
      %3649 = vmatpush1.bf16.msra.mxu0 %v3592
      %3650 = vmatprep.subr.bf16.mxu0 0
      %3651 = vmatpush1.bf16.msra.mxu0 %v3593
      %3652 = vmatprep.subr.bf16.mxu0 0
      %3653 = vmatpush1.bf16.msra.mxu0 %v3594
      %3654 = vmatprep.subr.bf16.mxu0 0
      %3655 = vmatpush1.bf16.msra.mxu0 %v3595
      %3656 = vmatprep.subr.bf16.mxu0 0
      %3657 = vmatpush1.bf16.msra.mxu0 %v3596
      %3658 = vmatprep.subr.bf16.mxu0 0
      %3659 = vmatpush1.bf16.msra.mxu0 %v3597
      %3660 = vmatprep.subr.bf16.mxu0 0
      %3661 = vmatpush1.bf16.msra.mxu0 %v3598
      %3662 = vmatprep.subr.bf16.mxu0 0
      %3663 = vmatpush1.bf16.msra.mxu0 %v3599
      %3664 = vmatprep.mubr.bf16.mxu0 %v3483
      %3665 = vmatmul.mubr.bf16.gmra.mrb[0].mxu0 %v3482
      %v3666 = vpop.f32.mrb[0].mxu0
      %v3667 = vadd.f32 0.0, %v3666
      %v3668 = vpop.f32.mrb[0].mxu0
      %v3669 = vpop.f32.mrb[0].mxu0
      %v3670 = vadd.f32 0.0, %v3669
      %v3671 = vpop.f32.mrb[0].mxu0
      %3672 = vdwg.mxu0
      %3673 = vmatprep.subr.bf16.mxu0 0
      %3674 = vmatpush1.bf16.msra.mxu0 %v3600
      %3675 = vmatprep.subr.bf16.mxu0 0
      %3676 = vmatpush1.bf16.msra.mxu0 %v3601
      %3677 = vmatprep.subr.bf16.mxu0 0
      %3678 = vmatpush1.bf16.msra.mxu0 %v3602
      %3679 = vmatprep.subr.bf16.mxu0 0
      %3680 = vmatpush1.bf16.msra.mxu0 %v3603
      %3681 = vmatprep.subr.bf16.mxu0 0
      %3682 = vmatpush1.bf16.msra.mxu0 %v3604
      %3683 = vmatprep.subr.bf16.mxu0 0
      %3684 = vmatpush1.bf16.msra.mxu0 %v3605
      %3685 = vmatprep.subr.bf16.mxu0 0
      %3686 = vmatpush1.bf16.msra.mxu0 %v3606
      %3687 = vmatprep.subr.bf16.mxu0 0
      %3688 = vmatpush1.bf16.msra.mxu0 %v3607
      %3689 = vmatprep.subr.bf16.mxu0 0
      %3690 = vmatpush1.bf16.msra.mxu0 0
      %3691 = vmatprep.subr.bf16.mxu0 0
      %3692 = vmatpush1.bf16.msra.mxu0 0
      %3693 = vmatprep.subr.bf16.mxu0 0
      %3694 = vmatpush1.bf16.msra.mxu0 0
      %3695 = vmatprep.subr.bf16.mxu0 0
      %3696 = vmatpush1.bf16.msra.mxu0 0
      %3697 = vmatprep.subr.bf16.mxu0 0
      %3698 = vmatpush1.bf16.msra.mxu0 0
      %3699 = vmatprep.subr.bf16.mxu0 0
      %3700 = vmatpush1.bf16.msra.mxu0 0
      %3701 = vmatprep.subr.bf16.mxu0 0
      %3702 = vmatpush1.bf16.msra.mxu0 0
      %3703 = vmatprep.subr.bf16.mxu0 0
      %3704 = vmatpush1.bf16.msra.mxu0 0
      %3705 = vmatprep.mubr.bf16.mxu0 0
      %3706 = vmatmul.mubr.bf16.gmra.mrb[0].mxu0 %v3484
      %v3707 = vpop.f32.mrb[0].mxu0
      %v3708 = vadd.f32 %v3667, %v3707
      %v3709 = vpop.f32.mrb[0].mxu0
      %v3710 = vpop.f32.mrb[0].mxu0
      %v3711 = vadd.f32 %v3670, %v3710
      %v3712 = vpop.f32.mrb[0].mxu0
      %3713 = vdwg.mxu0
      %v3714 = vadd.f32 %v3399, %v3708
      %v3715 = vadd.f32 %v3400, %v3711
      %v3716 = vmax.f32 %v3714, 0.0
      %v3717 = vmax.f32 %v3715, 0.0
      %v3718 = vcombine.low %v2278, %v2292
      %v3720 = vunpack.c.l.s4 1966171168
      %v3721 = vunpack.c.0.s8 %v3720
      %v3722 = vlaneseq
      %v3723 = vshrl.u32 %v3722, 7
      %v3724 = vsub.s32 %v3721, %v3723
      %v3725 = vrot.slane %v3718, %v3724
      %v3727 = vunpack.c.l.s4 1966171168
      %v3728 = vunpack.c.0.s8 %v3727
      %v3729 = vlaneseq
      %v3730 = vshrl.u32 %v3729, 7
      %v3731 = vsub.s32 %v3728, %v3730
      %v3732 = vrot.slane %v3725, %v3731
      %v3733 = vcombine.low %v2302, %v2285
      %v3735 = vunpack.c.l.s4 1966171168
      %v3736 = vunpack.c.0.s8 %v3735
      %v3737 = vlaneseq
      %v3738 = vshrl.u32 %v3737, 7
      %v3739 = vsub.s32 %v3736, %v3738
      %v3740 = vrot.slane %v3733, %v3739
      %v3742 = vunpack.c.l.s4 1966171168
      %v3743 = vunpack.c.0.s8 %v3742
      %v3744 = vlaneseq
      %v3745 = vshrl.u32 %v3744, 7
      %v3746 = vsub.s32 %v3743, %v3745
      %v3747 = vrot.slane %v3740, %v3746
      %v3748 = vcombine.low %v2301, %v2303
      %v3750 = vunpack.c.l.s4 1966171168
      %v3751 = vunpack.c.0.s8 %v3750
      %v3752 = vlaneseq
      %v3753 = vshrl.u32 %v3752, 7
      %v3754 = vsub.s32 %v3751, %v3753
      %v3755 = vrot.slane %v3748, %v3754
      %v3757 = vunpack.c.l.s4 1966171168
      %v3758 = vunpack.c.0.s8 %v3757
      %v3759 = vlaneseq
      %v3760 = vshrl.u32 %v3759, 7
      %v3761 = vsub.s32 %v3758, %v3760
      %v3762 = vrot.slane %v3755, %v3761
      %v3763 = vcombine.low %v2341, %v2349
      %v3765 = vunpack.c.l.s4 1966171168
      %v3766 = vunpack.c.0.s8 %v3765
      %v3767 = vlaneseq
      %v3768 = vshrl.u32 %v3767, 7
      %v3769 = vsub.s32 %v3766, %v3768
      %v3770 = vrot.slane %v3763, %v3769
      %v3772 = vunpack.c.l.s4 1966171168
      %v3773 = vunpack.c.0.s8 %v3772
      %v3774 = vlaneseq
      %v3775 = vshrl.u32 %v3774, 7
      %v3776 = vsub.s32 %v3773, %v3775
      %v3777 = vrot.slane %v3770, %v3776
      %v3778 = vcombine.low %v2334, %v2348
      %v3780 = vunpack.c.l.s4 1966171168
      %v3781 = vunpack.c.0.s8 %v3780
      %v3782 = vlaneseq
      %v3783 = vshrl.u32 %v3782, 7
      %v3784 = vsub.s32 %v3781, %v3783
      %v3785 = vrot.slane %v3778, %v3784
      %v3787 = vunpack.c.l.s4 1966171168
      %v3788 = vunpack.c.0.s8 %v3787
      %v3789 = vlaneseq
      %v3790 = vshrl.u32 %v3789, 7
      %v3791 = vsub.s32 %v3788, %v3790
      %v3792 = vrot.slane %v3785, %v3791
      %v3793 = vcombine.low %v2352, %v2367
      %v3795 = vunpack.c.l.s4 1966171168
      %v3796 = vunpack.c.0.s8 %v3795
      %v3797 = vlaneseq
      %v3798 = vshrl.u32 %v3797, 7
      %v3799 = vsub.s32 %v3796, %v3798
      %v3800 = vrot.slane %v3793, %v3799
      %v3802 = vunpack.c.l.s4 1966171168
      %v3803 = vunpack.c.0.s8 %v3802
      %v3804 = vlaneseq
      %v3805 = vshrl.u32 %v3804, 7
      %v3806 = vsub.s32 %v3803, %v3805
      %v3807 = vrot.slane %v3800, %v3806
      %v3809 = vunpack.c.l.s4 1966171168
      %v3810 = vunpack.c.0.s8 %v3809
      %v3811 = vlaneseq
      %v3812 = vshrl.u32 %v3811, 7
      %v3813 = vsub.s32 %v3810, %v3812
      %v3814 = vrot.slane %v2300, %v3813
      %v3815 = vcombine.low %v3725, %v3814
      %v3817 = vunpack.c.l.s4 1966171168
      %v3818 = vunpack.c.0.s8 %v3817
      %v3819 = vlaneseq
      %v3820 = vshrl.u32 %v3819, 7
      %v3821 = vsub.s32 %v3818, %v3820
      %v3822 = vrot.slane %v3815, %v3821
      %v3824 = vunpack.c.l.s4 1966171168
      %v3825 = vunpack.c.0.s8 %v3824
      %v3826 = vlaneseq
      %v3827 = vshrl.u32 %v3826, 7
      %v3828 = vsub.s32 %v3825, %v3827
      %v3829 = vrot.slane %v2299, %v3828
      %v3830 = vcombine.low %v3740, %v3829
      %v3832 = vunpack.c.l.s4 1966171168
      %v3833 = vunpack.c.0.s8 %v3832
      %v3834 = vlaneseq
      %v3835 = vshrl.u32 %v3834, 7
      %v3836 = vsub.s32 %v3833, %v3835
      %v3837 = vrot.slane %v3830, %v3836
      %v3839 = vunpack.c.l.s4 1966171168
      %v3840 = vunpack.c.0.s8 %v3839
      %v3841 = vlaneseq
      %v3842 = vshrl.u32 %v3841, 7
      %v3843 = vsub.s32 %v3840, %v3842
      %v3844 = vrot.slane %v2327, %v3843
      %v3845 = vcombine.low %v3755, %v3844
      %v3847 = vunpack.c.l.s4 1966171168
      %v3848 = vunpack.c.0.s8 %v3847
      %v3849 = vlaneseq
      %v3850 = vshrl.u32 %v3849, 7
      %v3851 = vsub.s32 %v3848, %v3850
      %v3852 = vrot.slane %v3845, %v3851
      %v3854 = vunpack.c.l.s4 1966171168
      %v3855 = vunpack.c.0.s8 %v3854
      %v3856 = vlaneseq
      %v3857 = vshrl.u32 %v3856, 7
      %v3858 = vsub.s32 %v3855, %v3857
      %v3859 = vrot.slane %v2351, %v3858
      %v3860 = vcombine.low %v3770, %v3859
      %v3862 = vunpack.c.l.s4 1966171168
      %v3863 = vunpack.c.0.s8 %v3862
      %v3864 = vlaneseq
      %v3865 = vshrl.u32 %v3864, 7
      %v3866 = vsub.s32 %v3863, %v3865
      %v3867 = vrot.slane %v3860, %v3866
      %v3869 = vunpack.c.l.s4 1966171168
      %v3870 = vunpack.c.0.s8 %v3869
      %v3871 = vlaneseq
      %v3872 = vshrl.u32 %v3871, 7
      %v3873 = vsub.s32 %v3870, %v3872
      %v3874 = vrot.slane %v2350, %v3873
      %v3875 = vcombine.low %v3785, %v3874
      %v3877 = vunpack.c.l.s4 1966171168
      %v3878 = vunpack.c.0.s8 %v3877
      %v3879 = vlaneseq
      %v3880 = vshrl.u32 %v3879, 7
      %v3881 = vsub.s32 %v3878, %v3880
      %v3882 = vrot.slane %v3875, %v3881
      %v3884 = vunpack.c.l.s4 1966171168
      %v3885 = vunpack.c.0.s8 %v3884
      %v3886 = vlaneseq
      %v3887 = vshrl.u32 %v3886, 7
      %v3888 = vsub.s32 %v3885, %v3887
      %v3889 = vrot.slane %v2374, %v3888
      %v3890 = vcombine.low %v3800, %v3889
      %v3892 = vunpack.c.l.s4 1966171168
      %v3893 = vunpack.c.0.s8 %v3892
      %v3894 = vlaneseq
      %v3895 = vshrl.u32 %v3894, 7
      %v3896 = vsub.s32 %v3893, %v3895
      %v3897 = vrot.slane %v3890, %v3896
      %v3899 = vshrl.u32 %v3822, 16
      %v3901 = vshll.u32 %v3822, 16
      %v3903 = vrot.slane %v3901, 1
      %v3904 = vor.u32 %v3899, %v3903
      %v3906 = vshrl.u32 %v3837, 16
      %v3908 = vshll.u32 %v3837, 16
      %v3910 = vrot.slane %v3908, 1
      %v3911 = vor.u32 %v3906, %v3910
      %v3913 = vshrl.u32 %v3852, 16
      %v3915 = vshll.u32 %v3852, 16
      %v3917 = vrot.slane %v3915, 1
      %v3918 = vor.u32 %v3913, %v3917
      %v3920 = vshrl.u32 %v3867, 16
      %v3922 = vshll.u32 %v3867, 16
      %v3924 = vrot.slane %v3922, 1
      %v3925 = vor.u32 %v3920, %v3924
      %v3927 = vshrl.u32 %v3882, 16
      %v3929 = vshll.u32 %v3882, 16
      %v3931 = vrot.slane %v3929, 1
      %v3932 = vor.u32 %v3927, %v3931
      %v3934 = vshrl.u32 %v3897, 16
      %v3936 = vshll.u32 %v3897, 16
      %v3938 = vrot.slane %v3936, 1
      %v3939 = vor.u32 %v3934, %v3938
      %3940 = vrot.lane.b32.xlu0 %v3904, 64
      %v3941 = vpop.permute.xlu0 %3940
      %3942 = vrot.lane.b32.xlu0 %v3911, 64
      %v3943 = vpop.permute.xlu0 %3942
      %3944 = vrot.lane.b32.xlu0 %v3918, 64
      %v3945 = vpop.permute.xlu0 %3944
      %3946 = vrot.lane.b32.xlu0 %v3925, 64
      %v3947 = vpop.permute.xlu0 %3946
      %3948 = vrot.lane.b32.xlu0 %v3932, 64
      %v3949 = vpop.permute.xlu0 %3948
      %3950 = vrot.lane.b32.xlu0 %v3939, 64
      %v3951 = vpop.permute.xlu0 %3950
      %v3952 = vcombine.low %v2292, %v2300
      %v3954 = vunpack.c.l.s4 1966171168
      %v3955 = vunpack.c.0.s8 %v3954
      %v3956 = vlaneseq
      %v3957 = vshrl.u32 %v3956, 7
      %v3958 = vsub.s32 %v3955, %v3957
      %v3959 = vrot.slane %v3952, %v3958
      %v3961 = vunpack.c.l.s4 1966171168
      %v3962 = vunpack.c.0.s8 %v3961
      %v3963 = vlaneseq
      %v3964 = vshrl.u32 %v3963, 7
      %v3965 = vsub.s32 %v3962, %v3964
      %v3966 = vrot.slane %v3959, %v3965
      %v3967 = vcombine.low %v2285, %v2299
      %v3969 = vunpack.c.l.s4 1966171168
      %v3970 = vunpack.c.0.s8 %v3969
      %v3971 = vlaneseq
      %v3972 = vshrl.u32 %v3971, 7
      %v3973 = vsub.s32 %v3970, %v3972
      %v3974 = vrot.slane %v3967, %v3973
      %v3976 = vunpack.c.l.s4 1966171168
      %v3977 = vunpack.c.0.s8 %v3976
      %v3978 = vlaneseq
      %v3979 = vshrl.u32 %v3978, 7
      %v3980 = vsub.s32 %v3977, %v3979
      %v3981 = vrot.slane %v3974, %v3980
      %v3982 = vcombine.low %v2303, %v2327
      %v3984 = vunpack.c.l.s4 1966171168
      %v3985 = vunpack.c.0.s8 %v3984
      %v3986 = vlaneseq
      %v3987 = vshrl.u32 %v3986, 7
      %v3988 = vsub.s32 %v3985, %v3987
      %v3989 = vrot.slane %v3982, %v3988
      %v3991 = vunpack.c.l.s4 1966171168
      %v3992 = vunpack.c.0.s8 %v3991
      %v3993 = vlaneseq
      %v3994 = vshrl.u32 %v3993, 7
      %v3995 = vsub.s32 %v3992, %v3994
      %v3996 = vrot.slane %v3989, %v3995
      %v3997 = vcombine.low %v2349, %v2351
      %v3999 = vunpack.c.l.s4 1966171168
      %v4000 = vunpack.c.0.s8 %v3999
      %v4001 = vlaneseq
      %v4002 = vshrl.u32 %v4001, 7
      %v4003 = vsub.s32 %v4000, %v4002
      %v4004 = vrot.slane %v3997, %v4003
      %v4006 = vunpack.c.l.s4 1966171168
      %v4007 = vunpack.c.0.s8 %v4006
      %v4008 = vlaneseq
      %v4009 = vshrl.u32 %v4008, 7
      %v4010 = vsub.s32 %v4007, %v4009
      %v4011 = vrot.slane %v4004, %v4010
      %v4012 = vcombine.low %v2348, %v2350
      %v4014 = vunpack.c.l.s4 1966171168
      %v4015 = vunpack.c.0.s8 %v4014
      %v4016 = vlaneseq
      %v4017 = vshrl.u32 %v4016, 7
      %v4018 = vsub.s32 %v4015, %v4017
      %v4019 = vrot.slane %v4012, %v4018
      %v4021 = vunpack.c.l.s4 1966171168
      %v4022 = vunpack.c.0.s8 %v4021
      %v4023 = vlaneseq
      %v4024 = vshrl.u32 %v4023, 7
      %v4025 = vsub.s32 %v4022, %v4024
      %v4026 = vrot.slane %v4019, %v4025
      %v4027 = vcombine.low %v2367, %v2374
      %v4029 = vunpack.c.l.s4 1966171168
      %v4030 = vunpack.c.0.s8 %v4029
      %v4031 = vlaneseq
      %v4032 = vshrl.u32 %v4031, 7
      %v4033 = vsub.s32 %v4030, %v4032
      %v4034 = vrot.slane %v4027, %v4033
      %v4036 = vunpack.c.l.s4 1966171168
      %v4037 = vunpack.c.0.s8 %v4036
      %v4038 = vlaneseq
      %v4039 = vshrl.u32 %v4038, 7
      %v4040 = vsub.s32 %v4037, %v4039
      %v4041 = vrot.slane %v4034, %v4040
      %v4044 = vsel %vm528, %v3732, %v3941
      %v4047 = vsel %vm528, %v3747, %v3943
      %v4050 = vsel %vm528, %v3762, %v3945
      %v4053 = vsel %vm528, %v3777, %v3947
      %v4056 = vsel %vm528, %v3792, %v3949
      %v4059 = vsel %vm528, %v3807, %v3951
      %v4064 = vcombine.low %v4044, %v3966
      %v4066 = vunpack.c.l.s4 1983009808
      %v4067 = vunpack.c.0.s8 %v4066
      %v4068 = vlaneseq
      %v4069 = vshrl.u32 %v4068, 7
      %v4070 = vsub.s32 %v4067, %v4069
      %v4071 = vrot.slane %v4064, %v4070
      %v4072 = vcombine.low %v4047, %v3981
      %v4074 = vunpack.c.l.s4 1983009808
      %v4075 = vunpack.c.0.s8 %v4074
      %v4076 = vlaneseq
      %v4077 = vshrl.u32 %v4076, 7
      %v4078 = vsub.s32 %v4075, %v4077
      %v4079 = vrot.slane %v4072, %v4078
      %v4080 = vcombine.low %v4050, %v3996
      %v4082 = vunpack.c.l.s4 1983009808
      %v4083 = vunpack.c.0.s8 %v4082
      %v4084 = vlaneseq
      %v4085 = vshrl.u32 %v4084, 7
      %v4086 = vsub.s32 %v4083, %v4085
      %v4087 = vrot.slane %v4080, %v4086
      %v4088 = vcombine.low %v4053, %v4011
      %v4090 = vunpack.c.l.s4 1983009808
      %v4091 = vunpack.c.0.s8 %v4090
      %v4092 = vlaneseq
      %v4093 = vshrl.u32 %v4092, 7
      %v4094 = vsub.s32 %v4091, %v4093
      %v4095 = vrot.slane %v4088, %v4094
      %v4096 = vld [vmem:[%s7] sm:$0xf]
      %v4097 = vld [vmem:[%s7 + $0x4] sm:$0xf]
      %v4098 = vld [vmem:[%s7 + $0x8] sm:$0xf]
      %v4099 = vld [vmem:[%s7 + $0xc] sm:$0xf]
      %v4100 = vld [vmem:[%s7 + $0x10] sm:$0xf]
      %v4101 = vld [vmem:[%s7 + $0x14] sm:$0xf]
      %v4102 = vld [vmem:[%s7 + $0x18] sm:$0xf]
      %v4103 = vld [vmem:[%s7 + $0x1c] sm:$0xf]
      %v4104 = vld [vmem:[%s7 + $0x20] sm:$0xf]
      %v4105 = vld [vmem:[%s7 + $0x24] sm:$0xf]
      %v4106 = vld [vmem:[%s7 + $0x28] sm:$0xf]
      %v4107 = vld [vmem:[%s7 + $0x2c] sm:$0xf]
      %v4108 = vld [vmem:[%s7 + $0x30] sm:$0xf]
      %v4109 = vld [vmem:[%s7 + $0x34] sm:$0xf]
      %v4110 = vld [vmem:[%s7 + $0x38] sm:$0xf]
      %v4111 = vld [vmem:[%s7 + $0x3c] sm:$0xf]
      %v4112 = vld [vmem:[%s7 + $0x40] sm:$0xf]
      %v4113 = vld [vmem:[%s7 + $0x44] sm:$0xf]
      %v4114 = vld [vmem:[%s7 + $0x48] sm:$0xf]
      %v4115 = vld [vmem:[%s7 + $0x4c] sm:$0xf]
      %v4116 = vld [vmem:[%s7 + $0x50] sm:$0xf]
      %v4117 = vld [vmem:[%s7 + $0x54] sm:$0xf]
      %v4118 = vld [vmem:[%s7 + $0x58] sm:$0xf]
      %v4119 = vld [vmem:[%s7 + $0x5c] sm:$0xf]
      %v4120 = vld [vmem:[%s8] sm:$0x1]
      %v4122 = vlaneseq
      %v4123 = vshrl.u32 %v4122, 7
      %v4124 = vsub.s32 0, %v4123
      %v4125 = vrot.slane %v4120, %v4124
      %v4127 = vcombine.low %v4071, %v4079
      %v4128 = vcombine.low %v4087, %v4095
      %v4130 = vunpack.c.l.s4 1983009808
      %v4131 = vunpack.c.0.s8 %v4130
      %v4132 = vlaneseq
      %v4133 = vshrl.u32 %v4132, 7
      %v4134 = vsub.s32 %v4131, %v4133
      %v4135 = vrot.slane %v4127, %v4134
      %v4137 = vunpack.c.l.s4 1983009808
      %v4138 = vunpack.c.0.s8 %v4137
      %v4139 = vlaneseq
      %v4140 = vshrl.u32 %v4139, 7
      %v4141 = vsub.s32 %v4138, %v4140
      %v4142 = vrot.slane %v4128, %v4141
      %v4143 = vcombine.low %v4135, %v4142
      %v4144 = vcombine.high %v4135, %v4142
      %v4170 = vunpack.c.l.b16 %v4096
      %v4171 = vunpack.c.l.b16 %v4097
      %v4172 = vunpack.c.l.b16 %v4098
      %v4173 = vunpack.c.l.b16 %v4099
      %v4174 = vunpack.c.l.b16 %v4100
      %v4175 = vunpack.c.l.b16 %v4101
      %v4176 = vunpack.c.l.b16 %v4102
      %v4177 = vunpack.c.l.b16 %v4103
      %v4178 = vunpack.c.l.b16 %v4104
      %v4179 = vunpack.c.l.b16 %v4105
      %v4180 = vunpack.c.l.b16 %v4106
      %v4181 = vunpack.c.l.b16 %v4107
      %v4182 = vunpack.c.l.b16 %v4108
      %v4183 = vunpack.c.l.b16 %v4109
      %v4184 = vunpack.c.l.b16 %v4110
      %v4185 = vunpack.c.l.b16 %v4111
      %v4186 = vunpack.c.l.b16 %v4112
      %v4187 = vunpack.c.l.b16 %v4113
      %v4188 = vunpack.c.l.b16 %v4114
      %v4189 = vunpack.c.l.b16 %v4115
      %v4190 = vunpack.c.l.b16 %v4116
      %v4191 = vunpack.c.l.b16 %v4117
      %v4192 = vunpack.c.l.b16 %v4118
      %v4193 = vunpack.c.l.b16 %v4119
      %v4194 = vpack.c.b16 %v4171, %v4170
      %v4195 = vpack.c.b16 %v4173, %v4172
      %v4196 = vpack.c.b16 %v4175, %v4174
      %v4197 = vpack.c.b16 %v4177, %v4176
      %v4198 = vpack.c.b16 %v4179, %v4178
      %v4199 = vpack.c.b16 %v4181, %v4180
      %v4200 = vpack.c.b16 %v4183, %v4182
      %v4201 = vpack.c.b16 %v4185, %v4184
      %v4202 = vpack.c.b16 %v4187, %v4186
      %v4203 = vpack.c.b16 %v4189, %v4188
      %v4204 = vpack.c.b16 %v4191, %v4190
      %v4205 = vpack.c.b16 %v4193, %v4192
      %v4219 = vsel %vm528, %v4144, 0
      %4221 = vmatprep.subr.bf16.mxu0 0
      %4222 = vmatpush1.bf16.msra.mxu0 %v4194
      %4223 = vmatprep.subr.bf16.mxu0 0
      %4224 = vmatpush1.bf16.msra.mxu0 %v4195
      %4225 = vmatprep.subr.bf16.mxu0 0
      %4226 = vmatpush1.bf16.msra.mxu0 %v4196
      %4227 = vmatprep.subr.bf16.mxu0 0
      %4228 = vmatpush1.bf16.msra.mxu0 %v4197
      %4229 = vmatprep.subr.bf16.mxu0 0
      %4230 = vmatpush1.bf16.msra.mxu0 %v4198
      %4231 = vmatprep.subr.bf16.mxu0 0
      %4232 = vmatpush1.bf16.msra.mxu0 %v4199
      %4233 = vmatprep.subr.bf16.mxu0 0
      %4234 = vmatpush1.bf16.msra.mxu0 %v4200
      %4235 = vmatprep.subr.bf16.mxu0 0
      %4236 = vmatpush1.bf16.msra.mxu0 %v4201
      %4237 = vmatprep.subr.bf16.mxu0 0
      %4238 = vmatpush1.bf16.msra.mxu0 %v4202
      %4239 = vmatprep.subr.bf16.mxu0 0
      %4240 = vmatpush1.bf16.msra.mxu0 %v4203
      %4241 = vmatprep.subr.bf16.mxu0 0
      %4242 = vmatpush1.bf16.msra.mxu0 %v4204
      %4243 = vmatprep.subr.bf16.mxu0 0
      %4244 = vmatpush1.bf16.msra.mxu0 %v4205
      %4245 = vmatprep.subr.bf16.mxu0 0
      %4246 = vmatpush1.bf16.msra.mxu0 0
      %4247 = vmatprep.subr.bf16.mxu0 0
      %4248 = vmatpush1.bf16.msra.mxu0 0
      %4249 = vmatprep.subr.bf16.mxu0 0
      %4250 = vmatpush1.bf16.msra.mxu0 0
      %4251 = vmatprep.subr.bf16.mxu0 0
      %4252 = vmatpush1.bf16.msra.mxu0 0
      %4253 = vmatprep.mubr.bf16.mxu0 %v4219
      %4254 = vmatmul.mubr.bf16.gmra.mrb[0].mxu0 %v4143
      %v4255 = vpop.f32.mrb[0].mxu0
      %v4256 = vadd.f32 %v4125, %v4255
      %v4257 = vpop.f32.mrb[0].mxu0
      %v4258 = vpop.f32.mrb[0].mxu0
      %v4259 = vadd.f32 %v4125, %v4258
      %v4260 = vpop.f32.mrb[0].mxu0
      %4261 = vdwg.mxu0
      %v4263 = vcombine.low %v4056, %v4026
      %v4265 = vunpack.c.l.s4 1983009808
      %v4266 = vunpack.c.0.s8 %v4265
      %v4267 = vlaneseq
      %v4268 = vshrl.u32 %v4267, 7
      %v4269 = vsub.s32 %v4266, %v4268
      %v4270 = vrot.slane %v4263, %v4269
      %s4271 = scalar_lea.vmem %s7, 96
      %v4272 = vld [vmem:[%s4271] sm:$0xf]
      %v4273 = vld [vmem:[%s4271 + $0x4] sm:$0xf]
      %v4274 = vld [vmem:[%s4271 + $0x8] sm:$0xf]
      %v4275 = vld [vmem:[%s4271 + $0xc] sm:$0xf]
      %v4276 = vld [vmem:[%s4271 + $0x10] sm:$0xf]
      %v4277 = vld [vmem:[%s4271 + $0x14] sm:$0xf]
      %v4278 = vld [vmem:[%s4271 + $0x18] sm:$0xf]
      %v4279 = vld [vmem:[%s4271 + $0x1c] sm:$0xf]
      %v4280 = vld [vmem:[%s4271 + $0x20] sm:$0xf]
      %v4281 = vld [vmem:[%s4271 + $0x24] sm:$0xf]
      %v4282 = vld [vmem:[%s4271 + $0x28] sm:$0xf]
      %v4283 = vld [vmem:[%s4271 + $0x2c] sm:$0xf]
      %v4284 = vld [vmem:[%s4271 + $0x30] sm:$0xf]
      %v4285 = vld [vmem:[%s4271 + $0x34] sm:$0xf]
      %v4286 = vld [vmem:[%s4271 + $0x38] sm:$0xf]
      %v4287 = vld [vmem:[%s4271 + $0x3c] sm:$0xf]
      %v4288 = vld [vmem:[%s4271 + $0x40] sm:$0xf]
      %v4289 = vld [vmem:[%s4271 + $0x44] sm:$0xf]
      %v4290 = vld [vmem:[%s4271 + $0x48] sm:$0xf]
      %v4291 = vld [vmem:[%s4271 + $0x4c] sm:$0xf]
      %v4292 = vld [vmem:[%s4271 + $0x50] sm:$0xf]
      %v4293 = vld [vmem:[%s4271 + $0x54] sm:$0xf]
      %v4294 = vld [vmem:[%s4271 + $0x58] sm:$0xf]
      %v4295 = vld [vmem:[%s4271 + $0x5c] sm:$0xf]
      %v4296 = vcombine.low %v4079, %v4087
      %v4297 = vcombine.low %v4095, %v4270
      %v4299 = vunpack.c.l.s4 1983009808
      %v4300 = vunpack.c.0.s8 %v4299
      %v4301 = vlaneseq
      %v4302 = vshrl.u32 %v4301, 7
      %v4303 = vsub.s32 %v4300, %v4302
      %v4304 = vrot.slane %v4296, %v4303
      %v4306 = vunpack.c.l.s4 1983009808
      %v4307 = vunpack.c.0.s8 %v4306
      %v4308 = vlaneseq
      %v4309 = vshrl.u32 %v4308, 7
      %v4310 = vsub.s32 %v4307, %v4309
      %v4311 = vrot.slane %v4297, %v4310
      %v4312 = vcombine.low %v4304, %v4311
      %v4313 = vcombine.high %v4304, %v4311
      %v4339 = vunpack.c.l.b16 %v4272
      %v4340 = vunpack.c.l.b16 %v4273
      %v4341 = vunpack.c.l.b16 %v4274
      %v4342 = vunpack.c.l.b16 %v4275
      %v4343 = vunpack.c.l.b16 %v4276
      %v4344 = vunpack.c.l.b16 %v4277
      %v4345 = vunpack.c.l.b16 %v4278
      %v4346 = vunpack.c.l.b16 %v4279
      %v4347 = vunpack.c.l.b16 %v4280
      %v4348 = vunpack.c.l.b16 %v4281
      %v4349 = vunpack.c.l.b16 %v4282
      %v4350 = vunpack.c.l.b16 %v4283
      %v4351 = vunpack.c.l.b16 %v4284
      %v4352 = vunpack.c.l.b16 %v4285
      %v4353 = vunpack.c.l.b16 %v4286
      %v4354 = vunpack.c.l.b16 %v4287
      %v4355 = vunpack.c.l.b16 %v4288
      %v4356 = vunpack.c.l.b16 %v4289
      %v4357 = vunpack.c.l.b16 %v4290
      %v4358 = vunpack.c.l.b16 %v4291
      %v4359 = vunpack.c.l.b16 %v4292
      %v4360 = vunpack.c.l.b16 %v4293
      %v4361 = vunpack.c.l.b16 %v4294
      %v4362 = vunpack.c.l.b16 %v4295
      %v4363 = vpack.c.b16 %v4340, %v4339
      %v4364 = vpack.c.b16 %v4342, %v4341
      %v4365 = vpack.c.b16 %v4344, %v4343
      %v4366 = vpack.c.b16 %v4346, %v4345
      %v4367 = vpack.c.b16 %v4348, %v4347
      %v4368 = vpack.c.b16 %v4350, %v4349
      %v4369 = vpack.c.b16 %v4352, %v4351
      %v4370 = vpack.c.b16 %v4354, %v4353
      %v4371 = vpack.c.b16 %v4356, %v4355
      %v4372 = vpack.c.b16 %v4358, %v4357
      %v4373 = vpack.c.b16 %v4360, %v4359
      %v4374 = vpack.c.b16 %v4362, %v4361
      %v4388 = vsel %vm528, %v4313, 0
      %4390 = vmatprep.subr.bf16.mxu0 0
      %4391 = vmatpush1.bf16.msra.mxu0 %v4363
      %4392 = vmatprep.subr.bf16.mxu0 0
      %4393 = vmatpush1.bf16.msra.mxu0 %v4364
      %4394 = vmatprep.subr.bf16.mxu0 0
      %4395 = vmatpush1.bf16.msra.mxu0 %v4365
      %4396 = vmatprep.subr.bf16.mxu0 0
      %4397 = vmatpush1.bf16.msra.mxu0 %v4366
      %4398 = vmatprep.subr.bf16.mxu0 0
      %4399 = vmatpush1.bf16.msra.mxu0 %v4367
      %4400 = vmatprep.subr.bf16.mxu0 0
      %4401 = vmatpush1.bf16.msra.mxu0 %v4368
      %4402 = vmatprep.subr.bf16.mxu0 0
      %4403 = vmatpush1.bf16.msra.mxu0 %v4369
      %4404 = vmatprep.subr.bf16.mxu0 0
      %4405 = vmatpush1.bf16.msra.mxu0 %v4370
      %4406 = vmatprep.subr.bf16.mxu0 0
      %4407 = vmatpush1.bf16.msra.mxu0 %v4371
      %4408 = vmatprep.subr.bf16.mxu0 0
      %4409 = vmatpush1.bf16.msra.mxu0 %v4372
      %4410 = vmatprep.subr.bf16.mxu0 0
      %4411 = vmatpush1.bf16.msra.mxu0 %v4373
      %4412 = vmatprep.subr.bf16.mxu0 0
      %4413 = vmatpush1.bf16.msra.mxu0 %v4374
      %4414 = vmatprep.subr.bf16.mxu0 0
      %4415 = vmatpush1.bf16.msra.mxu0 0
      %4416 = vmatprep.subr.bf16.mxu0 0
      %4417 = vmatpush1.bf16.msra.mxu0 0
      %4418 = vmatprep.subr.bf16.mxu0 0
      %4419 = vmatpush1.bf16.msra.mxu0 0
      %4420 = vmatprep.subr.bf16.mxu0 0
      %4421 = vmatpush1.bf16.msra.mxu0 0
      %4422 = vmatprep.mubr.bf16.mxu0 %v4388
      %4423 = vmatmul.mubr.bf16.gmra.mrb[0].mxu0 %v4312
      %v4424 = vpop.f32.mrb[0].mxu0
      %v4425 = vadd.f32 0.0, %v4424
      %v4426 = vpop.f32.mrb[0].mxu0
      %v4427 = vpop.f32.mrb[0].mxu0
      %v4428 = vadd.f32 0.0, %v4427
      %v4429 = vpop.f32.mrb[0].mxu0
      %4430 = vdwg.mxu0
      %v4431 = vadd.f32 %v4256, %v4425
      %v4432 = vadd.f32 %v4259, %v4428
      %v4434 = vcombine.low %v4059, %v4041
      %v4436 = vunpack.c.l.s4 1983009808
      %v4437 = vunpack.c.0.s8 %v4436
      %v4438 = vlaneseq
      %v4439 = vshrl.u32 %v4438, 7
      %v4440 = vsub.s32 %v4437, %v4439
      %v4441 = vrot.slane %v4434, %v4440
      %s4442 = scalar_lea.vmem %s7, 192
      %v4443 = vld [vmem:[%s4442] sm:$0xf]
      %v4444 = vld [vmem:[%s4442 + $0x4] sm:$0xf]
      %v4445 = vld [vmem:[%s4442 + $0x8] sm:$0xf]
      %v4446 = vld [vmem:[%s4442 + $0xc] sm:$0xf]
      %v4447 = vld [vmem:[%s4442 + $0x10] sm:$0xf]
      %v4448 = vld [vmem:[%s4442 + $0x14] sm:$0xf]
      %v4449 = vld [vmem:[%s4442 + $0x18] sm:$0xf]
      %v4450 = vld [vmem:[%s4442 + $0x1c] sm:$0xf]
      %v4451 = vld [vmem:[%s4442 + $0x20] sm:$0xf]
      %v4452 = vld [vmem:[%s4442 + $0x24] sm:$0xf]
      %v4453 = vld [vmem:[%s4442 + $0x28] sm:$0xf]
      %v4454 = vld [vmem:[%s4442 + $0x2c] sm:$0xf]
      %v4455 = vld [vmem:[%s4442 + $0x30] sm:$0xf]
      %v4456 = vld [vmem:[%s4442 + $0x34] sm:$0xf]
      %v4457 = vld [vmem:[%s4442 + $0x38] sm:$0xf]
      %v4458 = vld [vmem:[%s4442 + $0x3c] sm:$0xf]
      %v4459 = vld [vmem:[%s4442 + $0x40] sm:$0xf]
      %v4460 = vld [vmem:[%s4442 + $0x44] sm:$0xf]
      %v4461 = vld [vmem:[%s4442 + $0x48] sm:$0xf]
      %v4462 = vld [vmem:[%s4442 + $0x4c] sm:$0xf]
      %v4463 = vld [vmem:[%s4442 + $0x50] sm:$0xf]
      %v4464 = vld [vmem:[%s4442 + $0x54] sm:$0xf]
      %v4465 = vld [vmem:[%s4442 + $0x58] sm:$0xf]
      %v4466 = vld [vmem:[%s4442 + $0x5c] sm:$0xf]
      %v4467 = vcombine.low %v4270, %v4441
      %v4469 = vunpack.c.l.s4 1983009808
      %v4470 = vunpack.c.0.s8 %v4469
      %v4471 = vlaneseq
      %v4472 = vshrl.u32 %v4471, 7
      %v4473 = vsub.s32 %v4470, %v4472
      %v4474 = vrot.slane %v4467, %v4473
      %v4475 = vcombine.low %v4142, %v4474
      %v4476 = vcombine.high %v4142, %v4474
      %v4502 = vunpack.c.l.b16 %v4443
      %v4503 = vunpack.c.l.b16 %v4444
      %v4504 = vunpack.c.l.b16 %v4445
      %v4505 = vunpack.c.l.b16 %v4446
      %v4506 = vunpack.c.l.b16 %v4447
      %v4507 = vunpack.c.l.b16 %v4448
      %v4508 = vunpack.c.l.b16 %v4449
      %v4509 = vunpack.c.l.b16 %v4450
      %v4510 = vunpack.c.l.b16 %v4451
      %v4511 = vunpack.c.l.b16 %v4452
      %v4512 = vunpack.c.l.b16 %v4453
      %v4513 = vunpack.c.l.b16 %v4454
      %v4514 = vunpack.c.l.b16 %v4455
      %v4515 = vunpack.c.l.b16 %v4456
      %v4516 = vunpack.c.l.b16 %v4457
      %v4517 = vunpack.c.l.b16 %v4458
      %v4518 = vunpack.c.l.b16 %v4459
      %v4519 = vunpack.c.l.b16 %v4460
      %v4520 = vunpack.c.l.b16 %v4461
      %v4521 = vunpack.c.l.b16 %v4462
      %v4522 = vunpack.c.l.b16 %v4463
      %v4523 = vunpack.c.l.b16 %v4464
      %v4524 = vunpack.c.l.b16 %v4465
      %v4525 = vunpack.c.l.b16 %v4466
      %v4526 = vpack.c.b16 %v4503, %v4502
      %v4527 = vpack.c.b16 %v4505, %v4504
      %v4528 = vpack.c.b16 %v4507, %v4506
      %v4529 = vpack.c.b16 %v4509, %v4508
      %v4530 = vpack.c.b16 %v4511, %v4510
      %v4531 = vpack.c.b16 %v4513, %v4512
      %v4532 = vpack.c.b16 %v4515, %v4514
      %v4533 = vpack.c.b16 %v4517, %v4516
      %v4534 = vpack.c.b16 %v4519, %v4518
      %v4535 = vpack.c.b16 %v4521, %v4520
      %v4536 = vpack.c.b16 %v4523, %v4522
      %v4537 = vpack.c.b16 %v4525, %v4524
      %v4551 = vsel %vm528, %v4476, 0
      %4553 = vmatprep.subr.bf16.mxu0 0
      %4554 = vmatpush1.bf16.msra.mxu0 %v4526
      %4555 = vmatprep.subr.bf16.mxu0 0
      %4556 = vmatpush1.bf16.msra.mxu0 %v4527
      %4557 = vmatprep.subr.bf16.mxu0 0
      %4558 = vmatpush1.bf16.msra.mxu0 %v4528
      %4559 = vmatprep.subr.bf16.mxu0 0
      %4560 = vmatpush1.bf16.msra.mxu0 %v4529
      %4561 = vmatprep.subr.bf16.mxu0 0
      %4562 = vmatpush1.bf16.msra.mxu0 %v4530
      %4563 = vmatprep.subr.bf16.mxu0 0
      %4564 = vmatpush1.bf16.msra.mxu0 %v4531
      %4565 = vmatprep.subr.bf16.mxu0 0
      %4566 = vmatpush1.bf16.msra.mxu0 %v4532
      %4567 = vmatprep.subr.bf16.mxu0 0
      %4568 = vmatpush1.bf16.msra.mxu0 %v4533
      %4569 = vmatprep.subr.bf16.mxu0 0
      %4570 = vmatpush1.bf16.msra.mxu0 %v4534
      %4571 = vmatprep.subr.bf16.mxu0 0
      %4572 = vmatpush1.bf16.msra.mxu0 %v4535
      %4573 = vmatprep.subr.bf16.mxu0 0
      %4574 = vmatpush1.bf16.msra.mxu0 %v4536
      %4575 = vmatprep.subr.bf16.mxu0 0
      %4576 = vmatpush1.bf16.msra.mxu0 %v4537
      %4577 = vmatprep.subr.bf16.mxu0 0
      %4578 = vmatpush1.bf16.msra.mxu0 0
      %4579 = vmatprep.subr.bf16.mxu0 0
      %4580 = vmatpush1.bf16.msra.mxu0 0
      %4581 = vmatprep.subr.bf16.mxu0 0
      %4582 = vmatpush1.bf16.msra.mxu0 0
      %4583 = vmatprep.subr.bf16.mxu0 0
      %4584 = vmatpush1.bf16.msra.mxu0 0
      %4585 = vmatprep.mubr.bf16.mxu0 %v4551
      %4586 = vmatmul.mubr.bf16.gmra.mrb[0].mxu0 %v4475
      %v4587 = vpop.f32.mrb[0].mxu0
      %v4588 = vadd.f32 0.0, %v4587
      %v4589 = vpop.f32.mrb[0].mxu0
      %v4590 = vpop.f32.mrb[0].mxu0
      %v4591 = vadd.f32 0.0, %v4590
      %v4592 = vpop.f32.mrb[0].mxu0
      %4593 = vdwg.mxu0
      %v4594 = vadd.f32 %v4431, %v4588
      %v4595 = vadd.f32 %v4432, %v4591
      %v4596 = vmax.f32 %v4594, 0.0
      %v4597 = vmax.f32 %v4595, 0.0
      %v4598 = vpack.c.bf16 %v3717, %v3716
      %v4599 = vpack.c.bf16 %v4597, %v4596
      %v4600 = vld [vmem:[%s9] sm:$0xf]
      %v4601 = vld [vmem:[%s9 + $0x4] sm:$0xf]
      %v4602 = vld [vmem:[%s9 + $0x8] sm:$0xf]
      %v4603 = vld [vmem:[%s9 + $0xc] sm:$0xf]
      %v4604 = vld [vmem:[%s9 + $0x10] sm:$0xf]
      %v4605 = vld [vmem:[%s9 + $0x14] sm:$0xf]
      %v4606 = vld [vmem:[%s9 + $0x18] sm:$0xf]
      %v4607 = vld [vmem:[%s9 + $0x1c] sm:$0xf]
      %v4608 = vld [vmem:[%s9 + $0x20] sm:$0xf]
      %v4609 = vld [vmem:[%s9 + $0x24] sm:$0xf]
      %v4610 = vld [vmem:[%s9 + $0x28] sm:$0xf]
      %v4611 = vld [vmem:[%s9 + $0x2c] sm:$0xf]
      %v4612 = vld [vmem:[%s9 + $0x30] sm:$0xf]
      %v4613 = vld [vmem:[%s9 + $0x34] sm:$0xf]
      %v4614 = vld [vmem:[%s9 + $0x38] sm:$0xf]
      %v4615 = vld [vmem:[%s9 + $0x3c] sm:$0xf]
      %v4616 = vld [vmem:[%s10] sm:$0x1]
      %v4618 = vlaneseq
      %v4619 = vshrl.u32 %v4618, 7
      %v4620 = vsub.s32 0, %v4619
      %v4621 = vrot.slane %v4616, %v4620
      %v4639 = vunpack.c.l.b16 %v4600
      %v4640 = vunpack.c.l.b16 %v4601
      %v4641 = vunpack.c.l.b16 %v4602
      %v4642 = vunpack.c.l.b16 %v4603
      %v4643 = vunpack.c.l.b16 %v4604
      %v4644 = vunpack.c.l.b16 %v4605
      %v4645 = vunpack.c.l.b16 %v4606
      %v4646 = vunpack.c.l.b16 %v4607
      %v4647 = vunpack.c.l.b16 %v4608
      %v4648 = vunpack.c.l.b16 %v4609
      %v4649 = vunpack.c.l.b16 %v4610
      %v4650 = vunpack.c.l.b16 %v4611
      %v4651 = vunpack.c.l.b16 %v4612
      %v4652 = vunpack.c.l.b16 %v4613
      %v4653 = vunpack.c.l.b16 %v4614
      %v4654 = vunpack.c.l.b16 %v4615
      %v4655 = vpack.c.b16 %v4640, %v4639
      %v4656 = vpack.c.b16 %v4642, %v4641
      %v4657 = vpack.c.b16 %v4644, %v4643
      %v4658 = vpack.c.b16 %v4646, %v4645
      %v4659 = vpack.c.b16 %v4648, %v4647
      %v4660 = vpack.c.b16 %v4650, %v4649
      %v4661 = vpack.c.b16 %v4652, %v4651
      %v4662 = vpack.c.b16 %v4654, %v4653
      %4671 = vmatprep.subr.bf16.mxu0 0
      %4672 = vmatpush1.bf16.msra.mxu0 %v4655
      %4673 = vmatprep.subr.bf16.mxu0 0
      %4674 = vmatpush1.bf16.msra.mxu0 %v4656
      %4675 = vmatprep.subr.bf16.mxu0 0
      %4676 = vmatpush1.bf16.msra.mxu0 %v4657
      %4677 = vmatprep.subr.bf16.mxu0 0
      %4678 = vmatpush1.bf16.msra.mxu0 %v4658
      %4679 = vmatprep.subr.bf16.mxu0 0
      %4680 = vmatpush1.bf16.msra.mxu0 %v4659
      %4681 = vmatprep.subr.bf16.mxu0 0
      %4682 = vmatpush1.bf16.msra.mxu0 %v4660
      %4683 = vmatprep.subr.bf16.mxu0 0
      %4684 = vmatpush1.bf16.msra.mxu0 %v4661
      %4685 = vmatprep.subr.bf16.mxu0 0
      %4686 = vmatpush1.bf16.msra.mxu0 %v4662
      %4687 = vmatprep.subr.bf16.mxu0 0
      %4688 = vmatpush1.bf16.msra.mxu0 0
      %4689 = vmatprep.subr.bf16.mxu0 0
      %4690 = vmatpush1.bf16.msra.mxu0 0
      %4691 = vmatprep.subr.bf16.mxu0 0
      %4692 = vmatpush1.bf16.msra.mxu0 0
      %4693 = vmatprep.subr.bf16.mxu0 0
      %4694 = vmatpush1.bf16.msra.mxu0 0
      %4695 = vmatprep.subr.bf16.mxu0 0
      %4696 = vmatpush1.bf16.msra.mxu0 0
      %4697 = vmatprep.subr.bf16.mxu0 0
      %4698 = vmatpush1.bf16.msra.mxu0 0
      %4699 = vmatprep.subr.bf16.mxu0 0
      %4700 = vmatpush1.bf16.msra.mxu0 0
      %4701 = vmatprep.subr.bf16.mxu0 0
      %4702 = vmatpush1.bf16.msra.mxu0 0
      %4703 = vmatprep.mubr.bf16.mxu0 0
      %4704 = vmatmul.mubr.bf16.gmra.mrb[0].mxu0 %v4598
      %v4705 = vpop.f32.mrb[0].mxu0
      %v4706 = vadd.f32 %v4621, %v4705
      %v4707 = vpop.f32.mrb[0].mxu0
      %v4708 = vpop.f32.mrb[0].mxu0
      %v4709 = vadd.f32 %v4621, %v4708
      %v4710 = vpop.f32.mrb[0].mxu0
      %4711 = vdwg.mxu0
      %v4712 = vld [vmem:[%s11] sm:$0xf]
      %v4713 = vld [vmem:[%s11 + $0x4] sm:$0xf]
      %v4714 = vld [vmem:[%s11 + $0x8] sm:$0xf]
      %v4715 = vld [vmem:[%s11 + $0xc] sm:$0xf]
      %v4716 = vld [vmem:[%s11 + $0x10] sm:$0xf]
      %v4717 = vld [vmem:[%s11 + $0x14] sm:$0xf]
      %v4718 = vld [vmem:[%s11 + $0x18] sm:$0xf]
      %v4719 = vld [vmem:[%s11 + $0x1c] sm:$0xf]
      %v4720 = vld [vmem:[%s12] sm:$0x1]
      %v4722 = vlaneseq
      %v4723 = vshrl.u32 %v4722, 7
      %v4724 = vsub.s32 0, %v4723
      %v4725 = vrot.slane %v4720, %v4724
      %v4735 = vunpack.c.l.b16 %v4712
      %v4736 = vunpack.c.l.b16 %v4713
      %v4737 = vunpack.c.l.b16 %v4714
      %v4738 = vunpack.c.l.b16 %v4715
      %v4739 = vunpack.c.l.b16 %v4716
      %v4740 = vunpack.c.l.b16 %v4717
      %v4741 = vunpack.c.l.b16 %v4718
      %v4742 = vunpack.c.l.b16 %v4719
      %v4743 = vpack.c.b16 %v4736, %v4735
      %v4744 = vpack.c.b16 %v4738, %v4737
      %v4745 = vpack.c.b16 %v4740, %v4739
      %v4746 = vpack.c.b16 %v4742, %v4741
      %v4752 = vsel %vm528, %v4599, 0
      %4754 = vmatprep.subr.bf16.mxu0 0
      %4755 = vmatpush1.bf16.msra.mxu0 %v4743
      %4756 = vmatprep.subr.bf16.mxu0 0
      %4757 = vmatpush1.bf16.msra.mxu0 %v4744
      %4758 = vmatprep.subr.bf16.mxu0 0
      %4759 = vmatpush1.bf16.msra.mxu0 %v4745
      %4760 = vmatprep.subr.bf16.mxu0 0
      %4761 = vmatpush1.bf16.msra.mxu0 %v4746
      %4762 = vmatprep.subr.bf16.mxu0 0
      %4763 = vmatpush1.bf16.msra.mxu0 0
      %4764 = vmatprep.subr.bf16.mxu0 0
      %4765 = vmatpush1.bf16.msra.mxu0 0
      %4766 = vmatprep.subr.bf16.mxu0 0
      %4767 = vmatpush1.bf16.msra.mxu0 0
      %4768 = vmatprep.subr.bf16.mxu0 0
      %4769 = vmatpush1.bf16.msra.mxu0 0
      %4770 = vmatprep.subr.bf16.mxu0 0
      %4771 = vmatpush1.bf16.msra.mxu0 0
      %4772 = vmatprep.subr.bf16.mxu0 0
      %4773 = vmatpush1.bf16.msra.mxu0 0
      %4774 = vmatprep.subr.bf16.mxu0 0
      %4775 = vmatpush1.bf16.msra.mxu0 0
      %4776 = vmatprep.subr.bf16.mxu0 0
      %4777 = vmatpush1.bf16.msra.mxu0 0
      %4778 = vmatprep.subr.bf16.mxu0 0
      %4779 = vmatpush1.bf16.msra.mxu0 0
      %4780 = vmatprep.subr.bf16.mxu0 0
      %4781 = vmatpush1.bf16.msra.mxu0 0
      %4782 = vmatprep.subr.bf16.mxu0 0
      %4783 = vmatpush1.bf16.msra.mxu0 0
      %4784 = vmatprep.subr.bf16.mxu0 0
      %4785 = vmatpush1.bf16.msra.mxu0 0
      %4786 = vmatprep.mubr.bf16.mxu0 0
      %4787 = vmatmul.mubr.bf16.gmra.mrb[0].mxu0 %v4752
      %v4788 = vpop.f32.mrb[0].mxu0
      %v4789 = vadd.f32 %v4725, %v4788
      %v4790 = vpop.f32.mrb[0].mxu0
      %v4791 = vpop.f32.mrb[0].mxu0
      %v4792 = vadd.f32 %v4725, %v4791
      %v4793 = vpop.f32.mrb[0].mxu0
      %4794 = vdwg.mxu0
      %v4795 = vmax.f32 %v4789, 0.0
      %v4796 = vmax.f32 %v4792, 0.0
      %v4797 = vadd.f32 %v4706, %v4795
      %v4798 = vadd.f32 %v4709, %v4796
      %v4801 = vcombine.high %v4797, %v4797
      %v4802 = vcombine.high %v4798, %v4798
      %4805 = vst [vmem:[%s462] sm:$0xf] %v4797
      %4806 = vst [vmem:[%s462 + $0x4] sm:$0xf] %v4801
      %4807 = vst [vmem:[%s462 + $0x8] sm:$0xf] %v4798
      %4808 = vst [vmem:[%s462 + $0xc] sm:$0xf] %v4802
      %s4809 = smul.u32 4, %s29
      %p4810 = scmp.lt.s32.totalorder %s28, 1
      %s4811 = scalar_select %p4810, %s28, 1
      %p4812 = scmp.lt.s32.totalorder %s4809, 3
      %s4813 = scalar_select %p4812, %s4809, 3
      %s4814 = smul.addr %s4811, 4
      %s4815 = sadd.s32 %s4813, %s4814
      %s4816 = smul.addr %s4815, 4
      %s4817 = scalar_lea.vmem %s13, %s4816
      // Predicated region
      $region73: #{centernet_forward.1} parent=71 // pred_check
        %p4818 = pneg %p334
      $region74: #{centernet_forward.1} parent=71 // pred_check_branch
        %4820 = sbr.rel (%p4818) target = $region76
      $region75: #{centernet_forward.1} parent=71 // pred_region
        %s4821 = smul.u32 4, %s29
      $region76: #{centernet_forward.1} parent=71 // pred_fallthru
        _
    $region72: #{centernet_forward.1} parent=5 // pred_fallthru
      _
    %p4822 = scmp.le.s32.totalorder 2, %s19
    // Predicated region
    $region77: #{centernet_forward.1} parent=5 // pred_check
      %p4823 = pneg %p4822
    $region78: #{centernet_forward.1} parent=5 // pred_check_branch
      %4825 = sbr.rel (%p4823) target = $region80
    $region79: #{centernet_forward.1} parent=5 // pred_region
      %s4826 = ssub.s32 %s19, 2
      // Predicated region
      $region81: #{centernet_forward.1} parent=79 // pred_check
        %p4827 = pneg %p340
      $region82: #{centernet_forward.1} parent=79 // pred_check_branch
        %4829 = sbr.rel (%p4827) target = $region84
      $region83: #{centernet_forward.1} parent=79 // pred_region
        %s4830 = smul.u32 4, %s31
        %p4831 = scmp.lt.s32.totalorder %s30, 1
        %s4832 = scalar_select %p4831, %s30, 1
        %p4833 = scmp.lt.s32.totalorder %s4830, 3
        %s4834 = scalar_select %p4833, %s4830, 3
        %s4835 = smul.addr %s4832, 4
        %s4836 = sadd.s32 %s4834, %s4835
        %s4837 = smul.addr %s4836, 4
        %s4838 = scalar_lea.vmem %s13, %s4837
      $region84: #{centernet_forward.1} parent=79 // pred_fallthru
        _
    $region80: #{centernet_forward.1} parent=5 // pred_fallthru
      _
  $region6: #{centernet_forward.1} parent=0 // loop_footer
    %s23 = sadd.s32 1, %s19
  $region7: #{centernet_forward.1} parent=0 // loop_footer_branch
    %18 = sbr.rel target = $region3
  $region8: #{centernet_forward.1} parent=0 // loop_exit
    _

</llo_original>
